<compile_context>
chip_gen: v7x
topology: tpu7x:2x2x1
jax: 0.10.0
libtpu: 0.0.40
codegen_flags: <defaults>
</compile_context>

<pallas_src>
import functools

import jax
import jax.numpy as jnp
from jax.experimental import pallas as pl
from jax.experimental.pallas import tpu as pltpu


def _round_up(x, m):
    return ((x + m - 1) // m) * m


def _pick_tile(n, t_max, align):
    """Largest tile <= t_max that is a multiple of `align` and divides n.
    Falls back to the full extent when n is small or not align-aligned."""
    if n <= t_max or n % align != 0:
        return n
    t = (t_max // align) * align
    while n % t != 0:
        t -= align
    return t


def _resident_spec(block_shape, index_map, single_buffer):
    """BlockSpec for a constant-index (grid-resident) operand.  Single-buffer
    it when supported: the default pipeline double-buffers even constant
    blocks, doubling the VMEM cost of the resident weights."""
    if single_buffer:
        return pl.BlockSpec(block_shape, index_map,
                            pipeline_mode=pl.Buffered(1))
    return pl.BlockSpec(block_shape, index_map)


# ---------------------------------------------------------------------------
# Phase 1: batched projection  y = x @ w + b  (one big MXU matmul, tiled).
# ---------------------------------------------------------------------------
def _proj_kernel(x_ref, w_ref, b_ref, o_ref, acc_ref):
    @pl.when(pl.program_id(2) == 0)
    def _():
        acc_ref[...] = jnp.zeros_like(acc_ref)

    acc_ref[...] += jnp.dot(x_ref[...], w_ref[...],
                            preferred_element_type=jnp.float32)

    @pl.when(pl.program_id(2) == pl.num_programs(2) - 1)
    def _():
        o_ref[...] = (acc_ref[...] + b_ref[...]).astype(o_ref.dtype)


def _projection(x2d, w, b, *, out_dtype=jnp.float32,
                tm_max=512, tn_max=512, tk_max=512):
    """y = x2d @ w + b over (M, K) x (K, N): grid (M/tm, N/tn, K/tk), f32 VMEM
    accumulator, reduction (K) axis last."""
    M, K = x2d.shape
    N = w.shape[1]
    tm = min(tm_max, _round_up(M, 8))
    Mp = _round_up(M, tm)
    if Mp != M:
        x2d = jnp.pad(x2d, ((0, Mp - M), (0, 0)))
    tn = _pick_tile(N, tn_max, 128)
    tk = _pick_tile(K, tk_max, 128)

    out = pl.pallas_call(
        _proj_kernel,
        out_shape=jax.ShapeDtypeStruct((Mp, N), out_dtype),
        grid_spec=pltpu.PrefetchScalarGridSpec(
            num_scalar_prefetch=0,
            grid=(Mp // tm, N // tn, K // tk),
            in_specs=[
                pl.BlockSpec((tm, tk), lambda i, j, k: (i, k)),
                pl.BlockSpec((tk, tn), lambda i, j, k: (k, j)),
                pl.BlockSpec((1, tn), lambda i, j, k: (0, j)),
            ],
            out_specs=pl.BlockSpec((tm, tn), lambda i, j, k: (i, j)),
            scratch_shapes=[pltpu.VMEM((tm, tn), jnp.float32)],
        ),
        compiler_params=pltpu.CompilerParams(
            dimension_semantics=("parallel", "parallel", "arbitrary"),
            vmem_limit_bytes=64 * 1024 * 1024,
        ),
    )(x2d, w, b)
    return out[:M]


# ---------------------------------------------------------------------------
# Phase 2+3 fused: serial tanh recurrence + per-chunk output projection.
# ---------------------------------------------------------------------------
def _rnn_fused_kernel(xp_ref, whh_ref, why_ref, by_ref, y_ref, h_carry, h_acc):
    # xp_ref : (tc, tb, H)  x_t @ W_xh + b_h, time-major chunk (compute dtype)
    # whh_ref: (H, H)       recurrent weight, resident across the grid
    # why_ref: (H, O)       output projection weight, resident
    # by_ref : (1, O)       output bias (f32), resident
    # y_ref  : (tb, tc, O)  output block of the (B, T, O) result
    # h_carry: (tb, H) f32  VMEM scratch: hidden state carried across chunks
    # h_acc  : (tb, tc, H) f32 VMEM scratch: hidden states of this chunk
    t_chunk, b_tile, h_dim = xp_ref.shape
    o_dim = y_ref.shape[-1]

    @pl.when(pl.program_id(1) == 0)           # new batch tile -> reset carry
    def _():
        h_carry[...] = jnp.zeros_like(h_carry)

    whh = whh_ref[...]
    h = h_carry[...]                          # carried in vregs within the chunk
    # Serial part: only the (tb, H) x (H, H) matmul + tanh per step.
    # TODO(synk): for B << H a weight-stationary MXU drive
    # (pltpu.matmul_push_rhs / matmul_acc_lhs / matmul_pop) would avoid
    # re-pushing W_hh each step; kept as jnp.dot for portability.
    for t in range(t_chunk):                  # static unroll (t_chunk is static)
        wh = jnp.dot(h.astype(whh.dtype), whh,
                     preferred_element_type=jnp.float32)
        h = jnp.tanh(xp_ref[t].astype(jnp.float32) + wh)
        h_acc[:, t, :] = h                    # off the serial critical path
    h_carry[...] = h                          # one VMEM carry write per chunk

    # Epilogue (non-serial): project the whole chunk at once and write the
    # output directly in (B, T, O) layout -> no hidden-state HBM round trip
    # and no final XLA transpose.
    why = why_ref[...]
    hm = h_acc[...].reshape(b_tile * t_chunk, h_dim).astype(why.dtype)
    y = jnp.dot(hm, why, preferred_element_type=jnp.float32)
    y = y.reshape(b_tile, t_chunk, o_dim) + by_ref[...]
    y_ref[...] = y.astype(y_ref.dtype)


def _pick_t_chunk(requested, seq_len, tb, hp, op, xp_bytes,
                  vmem_budget=48 * 1024 * 1024):
    """Largest time chunk whose recurrence working set fits the VMEM budget
    (sized for v7x's 64 MiB VMEM; also fine on v5e/v6e's 128 MiB)."""
    fixed = (hp * hp + hp * op) * xp_bytes + op * 4 + tb * hp * 4
    per_tc = 2 * tb * hp * xp_bytes + 2 * tb * op * 4 + tb * hp * 4
    tc = max(1, (vmem_budget - fixed) // per_tc)
    tc = min(int(tc), int(requested), int(seq_len))
    if tc >= 8:
        tc = (tc // 8) * 8      # keep (8,128) tiling of the (tc, O) out block
    else:
        tc = min(int(seq_len), 8)
    return tc


def rnn_forward(token_ids, emb_table, w_xh, w_hh, b_h, w_hy, b_y, *,
                t_chunk=32, batch_tile=8, compute_dtype=jnp.float32,
                single_buffer_weights=True):
    """token_ids: (B, T) int32 -> outputs (B, T, O) float32."""
    B, T = token_ids.shape
    E = emb_table.shape[1]
    H = w_xh.shape[1]
    O = w_hy.shape[1]
    cdt = jnp.dtype(compute_dtype)

    # --- pad to TPU-friendly shapes (lane = 128 on H/O, sublane >= 8 on B) ---
    Hp = _round_up(H, 128)
    Op = _round_up(O, 128)
    tb = _round_up(min(batch_tile, B), 8)
    Bp = _round_up(B, tb)
    tc = _pick_t_chunk(t_chunk, T, tb, Hp, Op, cdt.itemsize)
    Tp = _round_up(T, tc)

    # Pad parameters once (zero padding is exact for the recurrence).
    w_xh_p = jnp.pad(w_xh, ((0, 0), (0, Hp - H))).astype(cdt)
    w_hh_p = jnp.pad(w_hh, ((0, Hp - H), (0, Hp - H))).astype(cdt)
    b_h_p = jnp.pad(b_h, (0, Hp - H)).reshape(1, Hp).astype(jnp.float32)
    w_hy_p = jnp.pad(w_hy, ((0, Hp - H), (0, Op - O))).astype(cdt)
    b_y_p = jnp.pad(b_y, (0, Op - O)).reshape(1, Op).astype(jnp.float32)
    tok = jnp.pad(token_ids, ((0, Bp - B), (0, Tp - T)))

    # TODO(synk): embedding lookup is a gather; kept as plain-JAX glue.
    x_tm = jnp.take(emb_table, tok.T, axis=0).astype(cdt)      # (Tp, Bp, E)

    # Phase 1: hoisted input projection (b_h folded in) — one big matmul,
    # emitted in the compute dtype (halves HBM traffic feeding the recurrence).
    xp = _projection(x_tm.reshape(Tp * Bp, E), w_xh_p, b_h_p, out_dtype=cdt)
    xp = xp.reshape(Tp, Bp, Hp)

    # Phase 2+3 fused: serial recurrence + per-chunk output projection.
    y = pl.pallas_call(
        _rnn_fused_kernel,
        out_shape=jax.ShapeDtypeStruct((Bp, Tp, Op), jnp.float32),
        grid_spec=pltpu.PrefetchScalarGridSpec(
            num_scalar_prefetch=0,
            grid=(Bp // tb, Tp // tc),        # (batch tiles, time chunks)
            in_specs=[
                pl.BlockSpec((tc, tb, Hp), lambda b, c: (c, b, 0)),
                _resident_spec((Hp, Hp), lambda b, c: (0, 0),
                               single_buffer_weights),
                _resident_spec((Hp, Op), lambda b, c: (0, 0),
                               single_buffer_weights),
                _resident_spec((1, Op), lambda b, c: (0, 0),
                               single_buffer_weights),
            ],
            out_specs=pl.BlockSpec((tb, tc, Op), lambda b, c: (b, c, 0)),
            scratch_shapes=[
                pltpu.VMEM((tb, Hp), jnp.float32),        # cross-chunk carry
                pltpu.VMEM((tb, tc, Hp), jnp.float32),    # chunk hidden states
            ],
        ),
        compiler_params=pltpu.CompilerParams(
            # Batch tiles are independent -> split across TensorCores (v7x has
            # 2 TCs/chip); time is the serial axis.
            dimension_semantics=("parallel", "arbitrary"),
            vmem_limit_bytes=64 * 1024 * 1024,
        ),
    )(xp, w_hh_p, w_hy_p, b_y_p)

    return y[:B, :T, :O]


def rnn_forward_ref(token_ids, emb_table, w_xh, w_hh, b_h, w_hy, b_y):
    """Pure-JAX reference matching the PyTorch forward exactly."""
    x = jnp.take(emb_table, token_ids, axis=0)                  # (B, T, E)
    B, T, _ = x.shape
    H = w_xh.shape[1]
    h = jnp.zeros((B, H), jnp.float32)
    outs = []
    for t in range(T):
        h = jnp.tanh(x[:, t, :] @ w_xh + h @ w_hh + b_h)
        outs.append(h @ w_hy + b_y)
    return jnp.stack(outs, axis=1)                              # (B, T, O)


if __name__ == "__main__":
    # Small, deterministic setup (synthetic "tokenizer" with vocab_size=50).
    vocab_size = 50
    B, T = 2, 8
    E, H, O = 32, 32, 16

    key = jax.random.PRNGKey(0)
    k_emb, k_xh, k_hh, k_hy, k_tok = jax.random.split(key, 5)

    emb_table = jax.random.normal(k_emb, (vocab_size, E), jnp.float32)
    s_h = (2.0 / (E + H)) ** 0.5
    s_y = (2.0 / (E + O)) ** 0.5
    w_xh = jax.random.normal(k_xh, (E, H), jnp.float32) * s_h
    w_hh = jax.random.normal(k_hh, (H, H), jnp.float32) * s_h
    b_h = jnp.zeros((H,), jnp.float32)
    w_hy = jax.random.normal(k_hy, (H, O), jnp.float32) * s_y
    b_y = jnp.zeros((O,), jnp.float32)

    token_ids = jax.random.randint(k_tok, (B, T), 0, vocab_size, jnp.int32)

    ref = rnn_forward_ref(token_ids, emb_table, w_xh, w_hh, b_h, w_hy, b_y)

    def run(compute_dtype, single_buffer):
        fwd = jax.jit(functools.partial(
            rnn_forward, t_chunk=32, compute_dtype=compute_dtype,
            single_buffer_weights=single_buffer))
        return jax.block_until_ready(
            fwd(token_ids, emb_table, w_xh, w_hh, b_h, w_hy, b_y))

    # f32 path: checked against the pure-JAX reference.
    single_buffer = True
    try:
        out = run(jnp.float32, single_buffer)
    except Exception:
        # Installed JAX may not support BlockSpec(pipeline_mode=pl.Buffered(1));
        # fall back to default double-buffered resident weights.
        single_buffer = False
        out = run(jnp.float32, single_buffer)

    assert out.shape == (B, T, O)
    assert jnp.allclose(out, ref, atol=1e-2, rtol=1e-2), "f32 mismatch vs reference"

    # bf16 MXU-input path (valid on all generations: bf16 is only the MXU input
    # / storage format; accumulation, bias adds and tanh stay f32). Loose check.
    out_bf16 = run(jnp.bfloat16, single_buffer)
    assert out_bf16.shape == (B, T, O)
    assert float(jnp.max(jnp.abs(out_bf16.astype(jnp.float32) - ref))) < 0.5, \
        "bf16 path diverged"

    print("KERNEL_OK")
</pallas_src>

<mosaic_0001>
module attributes {stable_mosaic.version = 11 : i64} {
  func.func @_proj_kernel(%arg0: i32, %arg1: i32, %arg2: i32, %arg3: memref<64x32xf32, #tpu.memory_space<vmem>>, %arg4: memref<32x128xf32, #tpu.memory_space<vmem>>, %arg5: memref<1x128xf32, #tpu.memory_space<vmem>>, %arg6: memref<64x128xf32, #tpu.memory_space<vmem>>, %arg7: memref<64x128xf32, #tpu.memory_space<vmem>>) attributes {dimension_semantics = [#tpu.dimension_semantics<parallel>, #tpu.dimension_semantics<parallel>, #tpu.dimension_semantics<arbitrary>], iteration_bounds = array<i64: 1, 1, 1>, scalar_prefetch = 0 : i64, scratch_operands = 1 : i64, tpu.core_type = #tpu.core_type<tc>, window_params = [{transform_indices = @transform_0, window_bounds = array<i64: 64, 32>}, {transform_indices = @transform_1, window_bounds = array<i64: 32, 128>}, {transform_indices = @transform_2, window_bounds = array<i64: 1, 128>}, {transform_indices = @transform_3, window_bounds = array<i64: 64, 128>}]} {
    %c0_i32 = arith.constant 0 : i32
    %0 = arith.cmpi eq, %arg2, %c0_i32 : i32
    %1 = arith.extui %0 : i1 to i32
    %c0_i32_0 = arith.constant 0 : i32
    %2 = arith.cmpi ne, %1, %c0_i32_0 : i32
    scf.if %2 {
      %cst_10 = arith.constant 0.000000e+00 : f32
      %12 = vector.broadcast %cst_10 : f32 to vector<64x128xf32>
      %c0_11 = arith.constant 0 : index
      %c0_12 = arith.constant 0 : index
      %13 = vector.load %arg7[%c0_11, %c0_12] : memref<64x128xf32, #tpu.memory_space<vmem>>, vector<64x128xf32>
      tpu.vector_store %arg7[%c0_11, %c0_12], %12 {strides = array<i32>} : memref<64x128xf32, #tpu.memory_space<vmem>>, vector<64x128xf32>,
    } else {
    }
    %c0 = arith.constant 0 : index
    %c0_1 = arith.constant 0 : index
    %3 = vector.load %arg7[%c0, %c0_1] : memref<64x128xf32, #tpu.memory_space<vmem>>, vector<64x128xf32>
    %c0_2 = arith.constant 0 : index
    %c0_3 = arith.constant 0 : index
    %4 = vector.load %arg3[%c0_2, %c0_3] : memref<64x32xf32, #tpu.memory_space<vmem>>, vector<64x32xf32>
    %c0_4 = arith.constant 0 : index
    %c0_5 = arith.constant 0 : index
    %5 = vector.load %arg4[%c0_4, %c0_5] : memref<32x128xf32, #tpu.memory_space<vmem>>, vector<32x128xf32>
    %cst = arith.constant dense<0.000000e+00> : vector<64x128xf32>
    %6 = tpu.matmul %4, %5, %cst {dimension_numbers = #tpu.dot_dimension_numbers<[1], [0], [0], [1], [0, 0, 1, 1], [], []>} : vector<64x32xf32>, vector<32x128xf32>, vector<64x128xf32> -> vector<64x128xf32>
    %7 = arith.addf %3, %6 : vector<64x128xf32>
    %c0_6 = arith.constant 0 : index
    %c0_7 = arith.constant 0 : index
    %8 = vector.load %arg7[%c0_6, %c0_7] : memref<64x128xf32, #tpu.memory_space<vmem>>, vector<64x128xf32>
    tpu.vector_store %arg7[%c0_6, %c0_7], %7 {strides = array<i32>} : memref<64x128xf32, #tpu.memory_space<vmem>>, vector<64x128xf32>,
    %c0_i32_8 = arith.constant 0 : i32
    %9 = arith.cmpi eq, %arg2, %c0_i32_8 : i32
    %10 = arith.extui %9 : i1 to i32
    %c0_i32_9 = arith.constant 0 : i32
    %11 = arith.cmpi ne, %10, %c0_i32_9 : i32
    scf.if %11 {
      %c0_10 = arith.constant 0 : index
      %c0_11 = arith.constant 0 : index
      %12 = vector.load %arg7[%c0_10, %c0_11] : memref<64x128xf32, #tpu.memory_space<vmem>>, vector<64x128xf32>
      %c0_12 = arith.constant 0 : index
      %c0_13 = arith.constant 0 : index
      %13 = vector.load %arg5[%c0_12, %c0_13] : memref<1x128xf32, #tpu.memory_space<vmem>>, vector<1x128xf32>
      %14 = vector.broadcast %13 : vector<1x128xf32> to vector<64x128xf32>
      %15 = arith.addf %12, %14 : vector<64x128xf32>
      %c0_14 = arith.constant 0 : index
      %c0_15 = arith.constant 0 : index
      %16 = vector.load %arg6[%c0_14, %c0_15] : memref<64x128xf32, #tpu.memory_space<vmem>>, vector<64x128xf32>
      tpu.vector_store %arg6[%c0_14, %c0_15], %15 {strides = array<i32>} : memref<64x128xf32, #tpu.memory_space<vmem>>, vector<64x128xf32>,
    } else {
    }
    return
  }
  func.func @transform_0(%arg0: i32, %arg1: i32, %arg2: i32) -> (i32, i32) {
    %c0_i32 = arith.constant 0 : i32
    return %arg0, %arg2 : i32, i32
  }
  func.func @transform_1(%arg0: i32, %arg1: i32, %arg2: i32) -> (i32, i32) {
    %c0_i32 = arith.constant 0 : i32
    return %arg2, %arg1 : i32, i32
  }
  func.func @transform_2(%arg0: i32, %arg1: i32, %arg2: i32) -> (i32, i32) {
    %c0_i32 = arith.constant 0 : i32
    %c0_i32_0 = arith.constant 0 : i32
    return %c0_i32, %arg1 : i32, i32
  }
  func.func @transform_3(%arg0: i32, %arg1: i32, %arg2: i32) -> (i32, i32) {
    %c0_i32 = arith.constant 0 : i32
    return %arg0, %arg1 : i32, i32
  }
}

module attributes {stable_mosaic.version = 11 : i64} {
  func.func @_rnn_fused_kernel(%arg0: i32, %arg1: i32, %arg2: memref<8x8x128xf32, #tpu.memory_space<vmem>>, %arg3: memref<128x128xf32, #tpu.memory_space<vmem>>, %arg4: memref<128x128xf32, #tpu.memory_space<vmem>>, %arg5: memref<1x128xf32, #tpu.memory_space<vmem>>, %arg6: memref<8x8x128xf32, #tpu.memory_space<vmem>>, %arg7: memref<8x128xf32, #tpu.memory_space<vmem>>, %arg8: memref<8x8x128xf32, #tpu.memory_space<vmem>>) attributes {dimension_semantics = [#tpu.dimension_semantics<parallel>, #tpu.dimension_semantics<arbitrary>], iteration_bounds = array<i64: 1, 1>, scalar_prefetch = 0 : i64, scratch_operands = 2 : i64, tpu.core_type = #tpu.core_type<tc>, window_params = [{transform_indices = @transform_0, window_bounds = array<i64: 8, 8, 128>}, {pipeline_mode = #tpu.pipeline_mode<synchronous>, transform_indices = @transform_1, window_bounds = array<i64: 128, 128>}, {pipeline_mode = #tpu.pipeline_mode<synchronous>, transform_indices = @transform_2, window_bounds = array<i64: 128, 128>}, {pipeline_mode = #tpu.pipeline_mode<synchronous>, transform_indices = @transform_3, window_bounds = array<i64: 1, 128>}, {transform_indices = @transform_4, window_bounds = array<i64: 8, 8, 128>}]} {
    %c0_i32 = arith.constant 0 : i32
    %0 = arith.cmpi eq, %arg1, %c0_i32 : i32
    %1 = arith.extui %0 : i1 to i32
    %c0_i32_0 = arith.constant 0 : i32
    %2 = arith.cmpi ne, %1, %c0_i32_0 : i32
    scf.if %2 {
      %cst_65 = arith.constant 0.000000e+00 : f32
      %80 = vector.broadcast %cst_65 : f32 to vector<8x128xf32>
      %c0_66 = arith.constant 0 : index
      %c0_67 = arith.constant 0 : index
      %81 = vector.load %arg7[%c0_66, %c0_67] : memref<8x128xf32, #tpu.memory_space<vmem>>, vector<8x128xf32>
      tpu.vector_store %arg7[%c0_66, %c0_67], %80 {strides = array<i32>} : memref<8x128xf32, #tpu.memory_space<vmem>>, vector<8x128xf32>,
    } else {
    }
    %c0 = arith.constant 0 : index
    %c0_1 = arith.constant 0 : index
    %3 = vector.load %arg3[%c0, %c0_1] : memref<128x128xf32, #tpu.memory_space<vmem>>, vector<128x128xf32>
    %c0_2 = arith.constant 0 : index
    %c0_3 = arith.constant 0 : index
    %4 = vector.load %arg7[%c0_2, %c0_3] : memref<8x128xf32, #tpu.memory_space<vmem>>, vector<8x128xf32>
    %cst = arith.constant dense<0.000000e+00> : vector<8x128xf32>
    %5 = tpu.matmul %4, %3, %cst {dimension_numbers = #tpu.dot_dimension_numbers<[1], [0], [0], [1], [0, 0, 1, 1], [], []>} : vector<8x128xf32>, vector<128x128xf32>, vector<8x128xf32> -> vector<8x128xf32>
    %c0_4 = arith.constant 0 : index
    %c0_5 = arith.constant 0 : index
    %c0_6 = arith.constant 0 : index
    %6 = vector.load %arg2[%c0_4, %c0_5, %c0_6] : memref<8x8x128xf32, #tpu.memory_space<vmem>>, vector<1x8x128xf32>
    %7 = vector.shape_cast %6 : vector<1x8x128xf32> to vector<8x128xf32>
    %8 = arith.addf %7, %5 : vector<8x128xf32>
    %9 = math.tanh %8 : vector<8x128xf32>
    %c0_7 = arith.constant 0 : index
    %c0_8 = arith.constant 0 : index
    %c0_9 = arith.constant 0 : index
    %10 = vector.load %arg8[%c0_7, %c0_8, %c0_9] : memref<8x8x128xf32, #tpu.memory_space<vmem>>, vector<8x1x128xf32>
    %11 = vector.shape_cast %10 : vector<8x1x128xf32> to vector<8x128xf32>
    %12 = vector.shape_cast %9 : vector<8x128xf32> to vector<8x1x128xf32>
    tpu.vector_store %arg8[%c0_7, %c0_8, %c0_9], %12 {strides = array<i32>} : memref<8x8x128xf32, #tpu.memory_space<vmem>>, vector<8x1x128xf32>,
    %cst_10 = arith.constant dense<0.000000e+00> : vector<8x128xf32>
    %13 = tpu.matmul %9, %3, %cst_10 {dimension_numbers = #tpu.dot_dimension_numbers<[1], [0], [0], [1], [0, 0, 1, 1], [], []>} : vector<8x128xf32>, vector<128x128xf32>, vector<8x128xf32> -> vector<8x128xf32>
    %c1 = arith.constant 1 : index
    %c0_11 = arith.constant 0 : index
    %c0_12 = arith.constant 0 : index
    %14 = vector.load %arg2[%c1, %c0_11, %c0_12] : memref<8x8x128xf32, #tpu.memory_space<vmem>>, vector<1x8x128xf32>
    %15 = vector.shape_cast %14 : vector<1x8x128xf32> to vector<8x128xf32>
    %16 = arith.addf %15, %13 : vector<8x128xf32>
    %17 = math.tanh %16 : vector<8x128xf32>
    %c0_13 = arith.constant 0 : index
    %c1_14 = arith.constant 1 : index
    %c0_15 = arith.constant 0 : index
    %18 = vector.load %arg8[%c0_13, %c1_14, %c0_15] : memref<8x8x128xf32, #tpu.memory_space<vmem>>, vector<8x1x128xf32>
    %19 = vector.shape_cast %18 : vector<8x1x128xf32> to vector<8x128xf32>
    %20 = vector.shape_cast %17 : vector<8x128xf32> to vector<8x1x128xf32>
    tpu.vector_store %arg8[%c0_13, %c1_14, %c0_15], %20 {strides = array<i32>} : memref<8x8x128xf32, #tpu.memory_space<vmem>>, vector<8x1x128xf32>,
    %cst_16 = arith.constant dense<0.000000e+00> : vector<8x128xf32>
    %21 = tpu.matmul %17, %3, %cst_16 {dimension_numbers = #tpu.dot_dimension_numbers<[1], [0], [0], [1], [0, 0, 1, 1], [], []>} : vector<8x128xf32>, vector<128x128xf32>, vector<8x128xf32> -> vector<8x128xf32>
    %c2 = arith.constant 2 : index
    %c0_17 = arith.constant 0 : index
    %c0_18 = arith.constant 0 : index
    %22 = vector.load %arg2[%c2, %c0_17, %c0_18] : memref<8x8x128xf32, #tpu.memory_space<vmem>>, vector<1x8x128xf32>
    %23 = vector.shape_cast %22 : vector<1x8x128xf32> to vector<8x128xf32>
    %24 = arith.addf %23, %21 : vector<8x128xf32>
    %25 = math.tanh %24 : vector<8x128xf32>
    %c0_19 = arith.constant 0 : index
    %c2_20 = arith.constant 2 : index
    %c0_21 = arith.constant 0 : index
    %26 = vector.load %arg8[%c0_19, %c2_20, %c0_21] : memref<8x8x128xf32, #tpu.memory_space<vmem>>, vector<8x1x128xf32>
    %27 = vector.shape_cast %26 : vector<8x1x128xf32> to vector<8x128xf32>
    %28 = vector.shape_cast %25 : vector<8x128xf32> to vector<8x1x128xf32>
    tpu.vector_store %arg8[%c0_19, %c2_20, %c0_21], %28 {strides = array<i32>} : memref<8x8x128xf32, #tpu.memory_space<vmem>>, vector<8x1x128xf32>,
    %cst_22 = arith.constant dense<0.000000e+00> : vector<8x128xf32>
    %29 = tpu.matmul %25, %3, %cst_22 {dimension_numbers = #tpu.dot_dimension_numbers<[1], [0], [0], [1], [0, 0, 1, 1], [], []>} : vector<8x128xf32>, vector<128x128xf32>, vector<8x128xf32> -> vector<8x128xf32>
    %c3 = arith.constant 3 : index
    %c0_23 = arith.constant 0 : index
    %c0_24 = arith.constant 0 : index
    %30 = vector.load %arg2[%c3, %c0_23, %c0_24] : memref<8x8x128xf32, #tpu.memory_space<vmem>>, vector<1x8x128xf32>
    %31 = vector.shape_cast %30 : vector<1x8x128xf32> to vector<8x128xf32>
    %32 = arith.addf %31, %29 : vector<8x128xf32>
    %33 = math.tanh %32 : vector<8x128xf32>
    %c0_25 = arith.constant 0 : index
    %c3_26 = arith.constant 3 : index
    %c0_27 = arith.constant 0 : index
    %34 = vector.load %arg8[%c0_25, %c3_26, %c0_27] : memref<8x8x128xf32, #tpu.memory_space<vmem>>, vector<8x1x128xf32>
    %35 = vector.shape_cast %34 : vector<8x1x128xf32> to vector<8x128xf32>
    %36 = vector.shape_cast %33 : vector<8x128xf32> to vector<8x1x128xf32>
    tpu.vector_store %arg8[%c0_25, %c3_26, %c0_27], %36 {strides = array<i32>} : memref<8x8x128xf32, #tpu.memory_space<vmem>>, vector<8x1x128xf32>,
    %cst_28 = arith.constant dense<0.000000e+00> : vector<8x128xf32>
    %37 = tpu.matmul %33, %3, %cst_28 {dimension_numbers = #tpu.dot_dimension_numbers<[1], [0], [0], [1], [0, 0, 1, 1], [], []>} : vector<8x128xf32>, vector<128x128xf32>, vector<8x128xf32> -> vector<8x128xf32>
    %c4 = arith.constant 4 : index
    %c0_29 = arith.constant 0 : index
    %c0_30 = arith.constant 0 : index
    %38 = vector.load %arg2[%c4, %c0_29, %c0_30] : memref<8x8x128xf32, #tpu.memory_space<vmem>>, vector<1x8x128xf32>
    %39 = vector.shape_cast %38 : vector<1x8x128xf32> to vector<8x128xf32>
    %40 = arith.addf %39, %37 : vector<8x128xf32>
    %41 = math.tanh %40 : vector<8x128xf32>
    %c0_31 = arith.constant 0 : index
    %c4_32 = arith.constant 4 : index
    %c0_33 = arith.constant 0 : index
    %42 = vector.load %arg8[%c0_31, %c4_32, %c0_33] : memref<8x8x128xf32, #tpu.memory_space<vmem>>, vector<8x1x128xf32>
    %43 = vector.shape_cast %42 : vector<8x1x128xf32> to vector<8x128xf32>
    %44 = vector.shape_cast %41 : vector<8x128xf32> to vector<8x1x128xf32>
    tpu.vector_store %arg8[%c0_31, %c4_32, %c0_33], %44 {strides = array<i32>} : memref<8x8x128xf32, #tpu.memory_space<vmem>>, vector<8x1x128xf32>,
    %cst_34 = arith.constant dense<0.000000e+00> : vector<8x128xf32>
    %45 = tpu.matmul %41, %3, %cst_34 {dimension_numbers = #tpu.dot_dimension_numbers<[1], [0], [0], [1], [0, 0, 1, 1], [], []>} : vector<8x128xf32>, vector<128x128xf32>, vector<8x128xf32> -> vector<8x128xf32>
    %c5 = arith.constant 5 : index
    %c0_35 = arith.constant 0 : index
    %c0_36 = arith.constant 0 : index
    %46 = vector.load %arg2[%c5, %c0_35, %c0_36] : memref<8x8x128xf32, #tpu.memory_space<vmem>>, vector<1x8x128xf32>
    %47 = vector.shape_cast %46 : vector<1x8x128xf32> to vector<8x128xf32>
    %48 = arith.addf %47, %45 : vector<8x128xf32>
    %49 = math.tanh %48 : vector<8x128xf32>
    %c0_37 = arith.constant 0 : index
    %c5_38 = arith.constant 5 : index
    %c0_39 = arith.constant 0 : index
    %50 = vector.load %arg8[%c0_37, %c5_38, %c0_39] : memref<8x8x128xf32, #tpu.memory_space<vmem>>, vector<8x1x128xf32>
    %51 = vector.shape_cast %50 : vector<8x1x128xf32> to vector<8x128xf32>
    %52 = vector.shape_cast %49 : vector<8x128xf32> to vector<8x1x128xf32>
    tpu.vector_store %arg8[%c0_37, %c5_38, %c0_39], %52 {strides = array<i32>} : memref<8x8x128xf32, #tpu.memory_space<vmem>>, vector<8x1x128xf32>,
    %cst_40 = arith.constant dense<0.000000e+00> : vector<8x128xf32>
    %53 = tpu.matmul %49, %3, %cst_40 {dimension_numbers = #tpu.dot_dimension_numbers<[1], [0], [0], [1], [0, 0, 1, 1], [], []>} : vector<8x128xf32>, vector<128x128xf32>, vector<8x128xf32> -> vector<8x128xf32>
    %c6 = arith.constant 6 : index
    %c0_41 = arith.constant 0 : index
    %c0_42 = arith.constant 0 : index
    %54 = vector.load %arg2[%c6, %c0_41, %c0_42] : memref<8x8x128xf32, #tpu.memory_space<vmem>>, vector<1x8x128xf32>
    %55 = vector.shape_cast %54 : vector<1x8x128xf32> to vector<8x128xf32>
    %56 = arith.addf %55, %53 : vector<8x128xf32>
    %57 = math.tanh %56 : vector<8x128xf32>
    %c0_43 = arith.constant 0 : index
    %c6_44 = arith.constant 6 : index
    %c0_45 = arith.constant 0 : index
    %58 = vector.load %arg8[%c0_43, %c6_44, %c0_45] : memref<8x8x128xf32, #tpu.memory_space<vmem>>, vector<8x1x128xf32>
    %59 = vector.shape_cast %58 : vector<8x1x128xf32> to vector<8x128xf32>
    %60 = vector.shape_cast %57 : vector<8x128xf32> to vector<8x1x128xf32>
    tpu.vector_store %arg8[%c0_43, %c6_44, %c0_45], %60 {strides = array<i32>} : memref<8x8x128xf32, #tpu.memory_space<vmem>>, vector<8x1x128xf32>,
    %cst_46 = arith.constant dense<0.000000e+00> : vector<8x128xf32>
    %61 = tpu.matmul %57, %3, %cst_46 {dimension_numbers = #tpu.dot_dimension_numbers<[1], [0], [0], [1], [0, 0, 1, 1], [], []>} : vector<8x128xf32>, vector<128x128xf32>, vector<8x128xf32> -> vector<8x128xf32>
    %c7 = arith.constant 7 : index
    %c0_47 = arith.constant 0 : index
    %c0_48 = arith.constant 0 : index
    %62 = vector.load %arg2[%c7, %c0_47, %c0_48] : memref<8x8x128xf32, #tpu.memory_space<vmem>>, vector<1x8x128xf32>
    %63 = vector.shape_cast %62 : vector<1x8x128xf32> to vector<8x128xf32>
    %64 = arith.addf %63, %61 : vector<8x128xf32>
    %65 = math.tanh %64 : vector<8x128xf32>
    %c0_49 = arith.constant 0 : index
    %c7_50 = arith.constant 7 : index
    %c0_51 = arith.constant 0 : index
    %66 = vector.load %arg8[%c0_49, %c7_50, %c0_51] : memref<8x8x128xf32, #tpu.memory_space<vmem>>, vector<8x1x128xf32>
    %67 = vector.shape_cast %66 : vector<8x1x128xf32> to vector<8x128xf32>
    %68 = vector.shape_cast %65 : vector<8x128xf32> to vector<8x1x128xf32>
    tpu.vector_store %arg8[%c0_49, %c7_50, %c0_51], %68 {strides = array<i32>} : memref<8x8x128xf32, #tpu.memory_space<vmem>>, vector<8x1x128xf32>,
    %c0_52 = arith.constant 0 : index
    %c0_53 = arith.constant 0 : index
    %69 = vector.load %arg7[%c0_52, %c0_53] : memref<8x128xf32, #tpu.memory_space<vmem>>, vector<8x128xf32>
    tpu.vector_store %arg7[%c0_52, %c0_53], %65 {strides = array<i32>} : memref<8x128xf32, #tpu.memory_space<vmem>>, vector<8x128xf32>,
    %c0_54 = arith.constant 0 : index
    %c0_55 = arith.constant 0 : index
    %70 = vector.load %arg4[%c0_54, %c0_55] : memref<128x128xf32, #tpu.memory_space<vmem>>, vector<128x128xf32>
    %c0_56 = arith.constant 0 : index
    %c0_57 = arith.constant 0 : index
    %c0_58 = arith.constant 0 : index
    %71 = vector.load %arg8[%c0_56, %c0_57, %c0_58] : memref<8x8x128xf32, #tpu.memory_space<vmem>>, vector<8x8x128xf32>
    %72 = vector.shape_cast %71 : vector<8x8x128xf32> to vector<64x128xf32>
    %cst_59 = arith.constant dense<0.000000e+00> : vector<64x128xf32>
    %73 = tpu.matmul %72, %70, %cst_59 {dimension_numbers = #tpu.dot_dimension_numbers<[1], [0], [0], [1], [0, 0, 1, 1], [], []>} : vector<64x128xf32>, vector<128x128xf32>, vector<64x128xf32> -> vector<64x128xf32>
    %74 = vector.shape_cast %73 : vector<64x128xf32> to vector<8x8x128xf32>
    %c0_60 = arith.constant 0 : index
    %c0_61 = arith.constant 0 : index
    %75 = vector.load %arg5[%c0_60, %c0_61] : memref<1x128xf32, #tpu.memory_space<vmem>>, vector<1x128xf32>
    %76 = vector.shape_cast %75 : vector<1x128xf32> to vector<1x1x128xf32>
    %77 = vector.broadcast %76 : vector<1x1x128xf32> to vector<8x8x128xf32>
    %78 = arith.addf %74, %77 : vector<8x8x128xf32>
    %c0_62 = arith.constant 0 : index
    %c0_63 = arith.constant 0 : index
    %c0_64 = arith.constant 0 : index
    %79 = vector.load %arg6[%c0_62, %c0_63, %c0_64] : memref<8x8x128xf32, #tpu.memory_space<vmem>>, vector<8x8x128xf32>
    tpu.vector_store %arg6[%c0_62, %c0_63, %c0_64], %78 {strides = array<i32>} : memref<8x8x128xf32, #tpu.memory_space<vmem>>, vector<8x8x128xf32>,
    return
  }
  func.func @transform_0(%arg0: i32, %arg1: i32) -> (i32, i32, i32) {
    %c0_i32 = arith.constant 0 : i32
    %c0_i32_0 = arith.constant 0 : i32
    return %arg1, %arg0, %c0_i32 : i32, i32, i32
  }
  func.func @transform_1(%arg0: i32, %arg1: i32) -> (i32, i32) {
    %c0_i32 = arith.constant 0 : i32
    %c0_i32_0 = arith.constant 0 : i32
    %c0_i32_1 = arith.constant 0 : i32
    return %c0_i32, %c0_i32_0 : i32, i32
  }
  func.func @transform_2(%arg0: i32, %arg1: i32) -> (i32, i32) {
    %c0_i32 = arith.constant 0 : i32
    %c0_i32_0 = arith.constant 0 : i32
    %c0_i32_1 = arith.constant 0 : i32
    return %c0_i32, %c0_i32_0 : i32, i32
  }
  func.func @transform_3(%arg0: i32, %arg1: i32) -> (i32, i32) {
    %c0_i32 = arith.constant 0 : i32
    %c0_i32_0 = arith.constant 0 : i32
    %c0_i32_1 = arith.constant 0 : i32
    return %c0_i32, %c0_i32_0 : i32, i32
  }
  func.func @transform_4(%arg0: i32, %arg1: i32) -> (i32, i32, i32) {
    %c0_i32 = arith.constant 0 : i32
    %c0_i32_0 = arith.constant 0 : i32
    return %arg0, %arg1, %c0_i32 : i32, i32, i32
  }
}

module attributes {stable_mosaic.version = 11 : i64} {
  func.func @_proj_kernel(%arg0: i32, %arg1: i32, %arg2: i32, %arg3: memref<64x32xf32, #tpu.memory_space<vmem>>, %arg4: memref<32x128xf32, #tpu.memory_space<vmem>>, %arg5: memref<1x128xf32, #tpu.memory_space<vmem>>, %arg6: memref<64x128xf32, #tpu.memory_space<vmem>>, %arg7: memref<64x128xf32, #tpu.memory_space<vmem>>) attributes {dimension_semantics = [#tpu.dimension_semantics<parallel>, #tpu.dimension_semantics<parallel>, #tpu.dimension_semantics<arbitrary>], iteration_bounds = array<i64: 1, 1, 1>, scalar_prefetch = 0 : i64, scratch_operands = 1 : i64, tpu.core_type = #tpu.core_type<tc>, window_params = [{transform_indices = @transform_0, window_bounds = array<i64: 64, 32>}, {transform_indices = @transform_1, window_bounds = array<i64: 32, 128>}, {transform_indices = @transform_2, window_bounds = array<i64: 1, 128>}, {transform_indices = @transform_3, window_bounds = array<i64: 64, 128>}]} {
    %c0_i32 = arith.constant 0 : i32
    %0 = arith.cmpi eq, %arg2, %c0_i32 : i32
    %1 = arith.extui %0 : i1 to i32
    %c0_i32_0 = arith.constant 0 : i32
    %2 = arith.cmpi ne, %1, %c0_i32_0 : i32
    scf.if %2 {
      %cst_10 = arith.constant 0.000000e+00 : f32
      %12 = vector.broadcast %cst_10 : f32 to vector<64x128xf32>
      %c0_11 = arith.constant 0 : index
      %c0_12 = arith.constant 0 : index
      %13 = vector.load %arg7[%c0_11, %c0_12] : memref<64x128xf32, #tpu.memory_space<vmem>>, vector<64x128xf32>
      tpu.vector_store %arg7[%c0_11, %c0_12], %12 {strides = array<i32>} : memref<64x128xf32, #tpu.memory_space<vmem>>, vector<64x128xf32>,
    } else {
    }
    %c0 = arith.constant 0 : index
    %c0_1 = arith.constant 0 : index
    %3 = vector.load %arg7[%c0, %c0_1] : memref<64x128xf32, #tpu.memory_space<vmem>>, vector<64x128xf32>
    %c0_2 = arith.constant 0 : index
    %c0_3 = arith.constant 0 : index
    %4 = vector.load %arg3[%c0_2, %c0_3] : memref<64x32xf32, #tpu.memory_space<vmem>>, vector<64x32xf32>
    %c0_4 = arith.constant 0 : index
    %c0_5 = arith.constant 0 : index
    %5 = vector.load %arg4[%c0_4, %c0_5] : memref<32x128xf32, #tpu.memory_space<vmem>>, vector<32x128xf32>
    %cst = arith.constant dense<0.000000e+00> : vector<64x128xf32>
    %6 = tpu.matmul %4, %5, %cst {dimension_numbers = #tpu.dot_dimension_numbers<[1], [0], [0], [1], [0, 0, 1, 1], [], []>} : vector<64x32xf32>, vector<32x128xf32>, vector<64x128xf32> -> vector<64x128xf32>
    %7 = arith.addf %3, %6 : vector<64x128xf32>
    %c0_6 = arith.constant 0 : index
    %c0_7 = arith.constant 0 : index
    %8 = vector.load %arg7[%c0_6, %c0_7] : memref<64x128xf32, #tpu.memory_space<vmem>>, vector<64x128xf32>
    tpu.vector_store %arg7[%c0_6, %c0_7], %7 {strides = array<i32>} : memref<64x128xf32, #tpu.memory_space<vmem>>, vector<64x128xf32>,
    %c0_i32_8 = arith.constant 0 : i32
    %9 = arith.cmpi eq, %arg2, %c0_i32_8 : i32
    %10 = arith.extui %9 : i1 to i32
    %c0_i32_9 = arith.constant 0 : i32
    %11 = arith.cmpi ne, %10, %c0_i32_9 : i32
    scf.if %11 {
      %c0_10 = arith.constant 0 : index
      %c0_11 = arith.constant 0 : index
      %12 = vector.load %arg7[%c0_10, %c0_11] : memref<64x128xf32, #tpu.memory_space<vmem>>, vector<64x128xf32>
      %c0_12 = arith.constant 0 : index
      %c0_13 = arith.constant 0 : index
      %13 = vector.load %arg5[%c0_12, %c0_13] : memref<1x128xf32, #tpu.memory_space<vmem>>, vector<1x128xf32>
      %14 = vector.broadcast %13 : vector<1x128xf32> to vector<64x128xf32>
      %15 = arith.addf %12, %14 : vector<64x128xf32>
      %c0_14 = arith.constant 0 : index
      %c0_15 = arith.constant 0 : index
      %16 = vector.load %arg6[%c0_14, %c0_15] : memref<64x128xf32, #tpu.memory_space<vmem>>, vector<64x128xf32>
      tpu.vector_store %arg6[%c0_14, %c0_15], %15 {strides = array<i32>} : memref<64x128xf32, #tpu.memory_space<vmem>>, vector<64x128xf32>,
    } else {
    }
    return
  }
  func.func @transform_0(%arg0: i32, %arg1: i32, %arg2: i32) -> (i32, i32) {
    %c0_i32 = arith.constant 0 : i32
    return %arg0, %arg2 : i32, i32
  }
  func.func @transform_1(%arg0: i32, %arg1: i32, %arg2: i32) -> (i32, i32) {
    %c0_i32 = arith.constant 0 : i32
    return %arg2, %arg1 : i32, i32
  }
  func.func @transform_2(%arg0: i32, %arg1: i32, %arg2: i32) -> (i32, i32) {
    %c0_i32 = arith.constant 0 : i32
    %c0_i32_0 = arith.constant 0 : i32
    return %c0_i32, %arg1 : i32, i32
  }
  func.func @transform_3(%arg0: i32, %arg1: i32, %arg2: i32) -> (i32, i32) {
    %c0_i32 = arith.constant 0 : i32
    return %arg0, %arg1 : i32, i32
  }
}

module attributes {stable_mosaic.version = 11 : i64} {
  func.func @_rnn_fused_kernel(%arg0: i32, %arg1: i32, %arg2: memref<8x8x128xf32, #tpu.memory_space<vmem>>, %arg3: memref<128x128xf32, #tpu.memory_space<vmem>>, %arg4: memref<128x128xf32, #tpu.memory_space<vmem>>, %arg5: memref<1x128xf32, #tpu.memory_space<vmem>>, %arg6: memref<8x8x128xf32, #tpu.memory_space<vmem>>, %arg7: memref<8x128xf32, #tpu.memory_space<vmem>>, %arg8: memref<8x8x128xf32, #tpu.memory_space<vmem>>) attributes {dimension_semantics = [#tpu.dimension_semantics<parallel>, #tpu.dimension_semantics<arbitrary>], iteration_bounds = array<i64: 1, 1>, scalar_prefetch = 0 : i64, scratch_operands = 2 : i64, tpu.core_type = #tpu.core_type<tc>, window_params = [{transform_indices = @transform_0, window_bounds = array<i64: 8, 8, 128>}, {pipeline_mode = #tpu.pipeline_mode<synchronous>, transform_indices = @transform_1, window_bounds = array<i64: 128, 128>}, {pipeline_mode = #tpu.pipeline_mode<synchronous>, transform_indices = @transform_2, window_bounds = array<i64: 128, 128>}, {pipeline_mode = #tpu.pipeline_mode<synchronous>, transform_indices = @transform_3, window_bounds = array<i64: 1, 128>}, {transform_indices = @transform_4, window_bounds = array<i64: 8, 8, 128>}]} {
    %c0_i32 = arith.constant 0 : i32
    %0 = arith.cmpi eq, %arg1, %c0_i32 : i32
    %1 = arith.extui %0 : i1 to i32
    %c0_i32_0 = arith.constant 0 : i32
    %2 = arith.cmpi ne, %1, %c0_i32_0 : i32
    scf.if %2 {
      %cst_65 = arith.constant 0.000000e+00 : f32
      %80 = vector.broadcast %cst_65 : f32 to vector<8x128xf32>
      %c0_66 = arith.constant 0 : index
      %c0_67 = arith.constant 0 : index
      %81 = vector.load %arg7[%c0_66, %c0_67] : memref<8x128xf32, #tpu.memory_space<vmem>>, vector<8x128xf32>
      tpu.vector_store %arg7[%c0_66, %c0_67], %80 {strides = array<i32>} : memref<8x128xf32, #tpu.memory_space<vmem>>, vector<8x128xf32>,
    } else {
    }
    %c0 = arith.constant 0 : index
    %c0_1 = arith.constant 0 : index
    %3 = vector.load %arg3[%c0, %c0_1] : memref<128x128xf32, #tpu.memory_space<vmem>>, vector<128x128xf32>
    %c0_2 = arith.constant 0 : index
    %c0_3 = arith.constant 0 : index
    %4 = vector.load %arg7[%c0_2, %c0_3] : memref<8x128xf32, #tpu.memory_space<vmem>>, vector<8x128xf32>
    %cst = arith.constant dense<0.000000e+00> : vector<8x128xf32>
    %5 = tpu.matmul %4, %3, %cst {dimension_numbers = #tpu.dot_dimension_numbers<[1], [0], [0], [1], [0, 0, 1, 1], [], []>} : vector<8x128xf32>, vector<128x128xf32>, vector<8x128xf32> -> vector<8x128xf32>
    %c0_4 = arith.constant 0 : index
    %c0_5 = arith.constant 0 : index
    %c0_6 = arith.constant 0 : index
    %6 = vector.load %arg2[%c0_4, %c0_5, %c0_6] : memref<8x8x128xf32, #tpu.memory_space<vmem>>, vector<1x8x128xf32>
    %7 = vector.shape_cast %6 : vector<1x8x128xf32> to vector<8x128xf32>
    %8 = arith.addf %7, %5 : vector<8x128xf32>
    %9 = math.tanh %8 : vector<8x128xf32>
    %c0_7 = arith.constant 0 : index
    %c0_8 = arith.constant 0 : index
    %c0_9 = arith.constant 0 : index
    %10 = vector.load %arg8[%c0_7, %c0_8, %c0_9] : memref<8x8x128xf32, #tpu.memory_space<vmem>>, vector<8x1x128xf32>
    %11 = vector.shape_cast %10 : vector<8x1x128xf32> to vector<8x128xf32>
    %12 = vector.shape_cast %9 : vector<8x128xf32> to vector<8x1x128xf32>
    tpu.vector_store %arg8[%c0_7, %c0_8, %c0_9], %12 {strides = array<i32>} : memref<8x8x128xf32, #tpu.memory_space<vmem>>, vector<8x1x128xf32>,
    %cst_10 = arith.constant dense<0.000000e+00> : vector<8x128xf32>
    %13 = tpu.matmul %9, %3, %cst_10 {dimension_numbers = #tpu.dot_dimension_numbers<[1], [0], [0], [1], [0, 0, 1, 1], [], []>} : vector<8x128xf32>, vector<128x128xf32>, vector<8x128xf32> -> vector<8x128xf32>
    %c1 = arith.constant 1 : index
    %c0_11 = arith.constant 0 : index
    %c0_12 = arith.constant 0 : index
    %14 = vector.load %arg2[%c1, %c0_11, %c0_12] : memref<8x8x128xf32, #tpu.memory_space<vmem>>, vector<1x8x128xf32>
    %15 = vector.shape_cast %14 : vector<1x8x128xf32> to vector<8x128xf32>
    %16 = arith.addf %15, %13 : vector<8x128xf32>
    %17 = math.tanh %16 : vector<8x128xf32>
    %c0_13 = arith.constant 0 : index
    %c1_14 = arith.constant 1 : index
    %c0_15 = arith.constant 0 : index
    %18 = vector.load %arg8[%c0_13, %c1_14, %c0_15] : memref<8x8x128xf32, #tpu.memory_space<vmem>>, vector<8x1x128xf32>
    %19 = vector.shape_cast %18 : vector<8x1x128xf32> to vector<8x128xf32>
    %20 = vector.shape_cast %17 : vector<8x128xf32> to vector<8x1x128xf32>
    tpu.vector_store %arg8[%c0_13, %c1_14, %c0_15], %20 {strides = array<i32>} : memref<8x8x128xf32, #tpu.memory_space<vmem>>, vector<8x1x128xf32>,
    %cst_16 = arith.constant dense<0.000000e+00> : vector<8x128xf32>
    %21 = tpu.matmul %17, %3, %cst_16 {dimension_numbers = #tpu.dot_dimension_numbers<[1], [0], [0], [1], [0, 0, 1, 1], [], []>} : vector<8x128xf32>, vector<128x128xf32>, vector<8x128xf32> -> vector<8x128xf32>
    %c2 = arith.constant 2 : index
    %c0_17 = arith.constant 0 : index
    %c0_18 = arith.constant 0 : index
    %22 = vector.load %arg2[%c2, %c0_17, %c0_18] : memref<8x8x128xf32, #tpu.memory_space<vmem>>, vector<1x8x128xf32>
    %23 = vector.shape_cast %22 : vector<1x8x128xf32> to vector<8x128xf32>
    %24 = arith.addf %23, %21 : vector<8x128xf32>
    %25 = math.tanh %24 : vector<8x128xf32>
    %c0_19 = arith.constant 0 : index
    %c2_20 = arith.constant 2 : index
    %c0_21 = arith.constant 0 : index
    %26 = vector.load %arg8[%c0_19, %c2_20, %c0_21] : memref<8x8x128xf32, #tpu.memory_space<vmem>>, vector<8x1x128xf32>
    %27 = vector.shape_cast %26 : vector<8x1x128xf32> to vector<8x128xf32>
    %28 = vector.shape_cast %25 : vector<8x128xf32> to vector<8x1x128xf32>
    tpu.vector_store %arg8[%c0_19, %c2_20, %c0_21], %28 {strides = array<i32>} : memref<8x8x128xf32, #tpu.memory_space<vmem>>, vector<8x1x128xf32>,
    %cst_22 = arith.constant dense<0.000000e+00> : vector<8x128xf32>
    %29 = tpu.matmul %25, %3, %cst_22 {dimension_numbers = #tpu.dot_dimension_numbers<[1], [0], [0], [1], [0, 0, 1, 1], [], []>} : vector<8x128xf32>, vector<128x128xf32>, vector<8x128xf32> -> vector<8x128xf32>
    %c3 = arith.constant 3 : index
    %c0_23 = arith.constant 0 : index
    %c0_24 = arith.constant 0 : index
    %30 = vector.load %arg2[%c3, %c0_23, %c0_24] : memref<8x8x128xf32, #tpu.memory_space<vmem>>, vector<1x8x128xf32>
    %31 = vector.shape_cast %30 : vector<1x8x128xf32> to vector<8x128xf32>
    %32 = arith.addf %31, %29 : vector<8x128xf32>
    %33 = math.tanh %32 : vector<8x128xf32>
    %c0_25 = arith.constant 0 : index
    %c3_26 = arith.constant 3 : index
    %c0_27 = arith.constant 0 : index
    %34 = vector.load %arg8[%c0_25, %c3_26, %c0_27] : memref<8x8x128xf32, #tpu.memory_space<vmem>>, vector<8x1x128xf32>
    %35 = vector.shape_cast %34 : vector<8x1x128xf32> to vector<8x128xf32>
    %36 = vector.shape_cast %33 : vector<8x128xf32> to vector<8x1x128xf32>
    tpu.vector_store %arg8[%c0_25, %c3_26, %c0_27], %36 {strides = array<i32>} : memref<8x8x128xf32, #tpu.memory_space<vmem>>, vector<8x1x128xf32>,
    %cst_28 = arith.constant dense<0.000000e+00> : vector<8x128xf32>
    %37 = tpu.matmul %33, %3, %cst_28 {dimension_numbers = #tpu.dot_dimension_numbers<[1], [0], [0], [1], [0, 0, 1, 1], [], []>} : vector<8x128xf32>, vector<128x128xf32>, vector<8x128xf32> -> vector<8x128xf32>
    %c4 = arith.constant 4 : index
    %c0_29 = arith.constant 0 : index
    %c0_30 = arith.constant 0 : index
    %38 = vector.load %arg2[%c4, %c0_29, %c0_30] : memref<8x8x128xf32, #tpu.memory_space<vmem>>, vector<1x8x128xf32>
    %39 = vector.shape_cast %38 : vector<1x8x128xf32> to vector<8x128xf32>
    %40 = arith.addf %39, %37 : vector<8x128xf32>
    %41 = math.tanh %40 : vector<8x128xf32>
    %c0_31 = arith.constant 0 : index
    %c4_32 = arith.constant 4 : index
    %c0_33 = arith.constant 0 : index
    %42 = vector.load %arg8[%c0_31, %c4_32, %c0_33] : memref<8x8x128xf32, #tpu.memory_space<vmem>>, vector<8x1x128xf32>
    %43 = vector.shape_cast %42 : vector<8x1x128xf32> to vector<8x128xf32>
    %44 = vector.shape_cast %41 : vector<8x128xf32> to vector<8x1x128xf32>
    tpu.vector_store %arg8[%c0_31, %c4_32, %c0_33], %44 {strides = array<i32>} : memref<8x8x128xf32, #tpu.memory_space<vmem>>, vector<8x1x128xf32>,
    %cst_34 = arith.constant dense<0.000000e+00> : vector<8x128xf32>
    %45 = tpu.matmul %41, %3, %cst_34 {dimension_numbers = #tpu.dot_dimension_numbers<[1], [0], [0], [1], [0, 0, 1, 1], [], []>} : vector<8x128xf32>, vector<128x128xf32>, vector<8x128xf32> -> vector<8x128xf32>
    %c5 = arith.constant 5 : index
    %c0_35 = arith.constant 0 : index
    %c0_36 = arith.constant 0 : index
    %46 = vector.load %arg2[%c5, %c0_35, %c0_36] : memref<8x8x128xf32, #tpu.memory_space<vmem>>, vector<1x8x128xf32>
    %47 = vector.shape_cast %46 : vector<1x8x128xf32> to vector<8x128xf32>
    %48 = arith.addf %47, %45 : vector<8x128xf32>
    %49 = math.tanh %48 : vector<8x128xf32>
    %c0_37 = arith.constant 0 : index
    %c5_38 = arith.constant 5 : index
    %c0_39 = arith.constant 0 : index
    %50 = vector.load %arg8[%c0_37, %c5_38, %c0_39] : memref<8x8x128xf32, #tpu.memory_space<vmem>>, vector<8x1x128xf32>
    %51 = vector.shape_cast %50 : vector<8x1x128xf32> to vector<8x128xf32>
    %52 = vector.shape_cast %49 : vector<8x128xf32> to vector<8x1x128xf32>
    tpu.vector_store %arg8[%c0_37, %c5_38, %c0_39], %52 {strides = array<i32>} : memref<8x8x128xf32, #tpu.memory_space<vmem>>, vector<8x1x128xf32>,
    %cst_40 = arith.constant dense<0.000000e+00> : vector<8x128xf32>
    %53 = tpu.matmul %49, %3, %cst_40 {dimension_numbers = #tpu.dot_dimension_numbers<[1], [0], [0], [1], [0, 0, 1, 1], [], []>} : vector<8x128xf32>, vector<128x128xf32>, vector<8x128xf32> -> vector<8x128xf32>
    %c6 = arith.constant 6 : index
    %c0_41 = arith.constant 0 : index
    %c0_42 = arith.constant 0 : index
    %54 = vector.load %arg2[%c6, %c0_41, %c0_42] : memref<8x8x128xf32, #tpu.memory_space<vmem>>, vector<1x8x128xf32>
    %55 = vector.shape_cast %54 : vector<1x8x128xf32> to vector<8x128xf32>
    %56 = arith.addf %55, %53 : vector<8x128xf32>
    %57 = math.tanh %56 : vector<8x128xf32>
    %c0_43 = arith.constant 0 : index
    %c6_44 = arith.constant 6 : index
    %c0_45 = arith.constant 0 : index
    %58 = vector.load %arg8[%c0_43, %c6_44, %c0_45] : memref<8x8x128xf32, #tpu.memory_space<vmem>>, vector<8x1x128xf32>
    %59 = vector.shape_cast %58 : vector<8x1x128xf32> to vector<8x128xf32>
    %60 = vector.shape_cast %57 : vector<8x128xf32> to vector<8x1x128xf32>
    tpu.vector_store %arg8[%c0_43, %c6_44, %c0_45], %60 {strides = array<i32>} : memref<8x8x128xf32, #tpu.memory_space<vmem>>, vector<8x1x128xf32>,
    %cst_46 = arith.constant dense<0.000000e+00> : vector<8x128xf32>
    %61 = tpu.matmul %57, %3, %cst_46 {dimension_numbers = #tpu.dot_dimension_numbers<[1], [0], [0], [1], [0, 0, 1, 1], [], []>} : vector<8x128xf32>, vector<128x128xf32>, vector<8x128xf32> -> vector<8x128xf32>
    %c7 = arith.constant 7 : index
    %c0_47 = arith.constant 0 : index
    %c0_48 = arith.constant 0 : index
    %62 = vector.load %arg2[%c7, %c0_47, %c0_48] : memref<8x8x128xf32, #tpu.memory_space<vmem>>, vector<1x8x128xf32>
    %63 = vector.shape_cast %62 : vector<1x8x128xf32> to vector<8x128xf32>
    %64 = arith.addf %63, %61 : vector<8x128xf32>
    %65 = math.tanh %64 : vector<8x128xf32>
    %c0_49 = arith.constant 0 : index
    %c7_50 = arith.constant 7 : index
    %c0_51 = arith.constant 0 : index
    %66 = vector.load %arg8[%c0_49, %c7_50, %c0_51] : memref<8x8x128xf32, #tpu.memory_space<vmem>>, vector<8x1x128xf32>
    %67 = vector.shape_cast %66 : vector<8x1x128xf32> to vector<8x128xf32>
    %68 = vector.shape_cast %65 : vector<8x128xf32> to vector<8x1x128xf32>
    tpu.vector_store %arg8[%c0_49, %c7_50, %c0_51], %68 {strides = array<i32>} : memref<8x8x128xf32, #tpu.memory_space<vmem>>, vector<8x1x128xf32>,
    %c0_52 = arith.constant 0 : index
    %c0_53 = arith.constant 0 : index
    %69 = vector.load %arg7[%c0_52, %c0_53] : memref<8x128xf32, #tpu.memory_space<vmem>>, vector<8x128xf32>
    tpu.vector_store %arg7[%c0_52, %c0_53], %65 {strides = array<i32>} : memref<8x128xf32, #tpu.memory_space<vmem>>, vector<8x128xf32>,
    %c0_54 = arith.constant 0 : index
    %c0_55 = arith.constant 0 : index
    %70 = vector.load %arg4[%c0_54, %c0_55] : memref<128x128xf32, #tpu.memory_space<vmem>>, vector<128x128xf32>
    %c0_56 = arith.constant 0 : index
    %c0_57 = arith.constant 0 : index
    %c0_58 = arith.constant 0 : index
    %71 = vector.load %arg8[%c0_56, %c0_57, %c0_58] : memref<8x8x128xf32, #tpu.memory_space<vmem>>, vector<8x8x128xf32>
    %72 = vector.shape_cast %71 : vector<8x8x128xf32> to vector<64x128xf32>
    %cst_59 = arith.constant dense<0.000000e+00> : vector<64x128xf32>
    %73 = tpu.matmul %72, %70, %cst_59 {dimension_numbers = #tpu.dot_dimension_numbers<[1], [0], [0], [1], [0, 0, 1, 1], [], []>} : vector<64x128xf32>, vector<128x128xf32>, vector<64x128xf32> -> vector<64x128xf32>
    %74 = vector.shape_cast %73 : vector<64x128xf32> to vector<8x8x128xf32>
    %c0_60 = arith.constant 0 : index
    %c0_61 = arith.constant 0 : index
    %75 = vector.load %arg5[%c0_60, %c0_61] : memref<1x128xf32, #tpu.memory_space<vmem>>, vector<1x128xf32>
    %76 = vector.shape_cast %75 : vector<1x128xf32> to vector<1x1x128xf32>
    %77 = vector.broadcast %76 : vector<1x1x128xf32> to vector<8x8x128xf32>
    %78 = arith.addf %74, %77 : vector<8x8x128xf32>
    %c0_62 = arith.constant 0 : index
    %c0_63 = arith.constant 0 : index
    %c0_64 = arith.constant 0 : index
    %79 = vector.load %arg6[%c0_62, %c0_63, %c0_64] : memref<8x8x128xf32, #tpu.memory_space<vmem>>, vector<8x8x128xf32>
    tpu.vector_store %arg6[%c0_62, %c0_63, %c0_64], %78 {strides = array<i32>} : memref<8x8x128xf32, #tpu.memory_space<vmem>>, vector<8x8x128xf32>,
    return
  }
  func.func @transform_0(%arg0: i32, %arg1: i32) -> (i32, i32, i32) {
    %c0_i32 = arith.constant 0 : i32
    %c0_i32_0 = arith.constant 0 : i32
    return %arg1, %arg0, %c0_i32 : i32, i32, i32
  }
  func.func @transform_1(%arg0: i32, %arg1: i32) -> (i32, i32) {
    %c0_i32 = arith.constant 0 : i32
    %c0_i32_0 = arith.constant 0 : i32
    %c0_i32_1 = arith.constant 0 : i32
    return %c0_i32, %c0_i32_0 : i32, i32
  }
  func.func @transform_2(%arg0: i32, %arg1: i32) -> (i32, i32) {
    %c0_i32 = arith.constant 0 : i32
    %c0_i32_0 = arith.constant 0 : i32
    %c0_i32_1 = arith.constant 0 : i32
    return %c0_i32, %c0_i32_0 : i32, i32
  }
  func.func @transform_3(%arg0: i32, %arg1: i32) -> (i32, i32) {
    %c0_i32 = arith.constant 0 : i32
    %c0_i32_0 = arith.constant 0 : i32
    %c0_i32_1 = arith.constant 0 : i32
    return %c0_i32, %c0_i32_0 : i32, i32
  }
  func.func @transform_4(%arg0: i32, %arg1: i32) -> (i32, i32, i32) {
    %c0_i32 = arith.constant 0 : i32
    %c0_i32_0 = arith.constant 0 : i32
    return %arg0, %arg1, %c0_i32 : i32, i32, i32
  }
}

</mosaic_0001>

<llo_original>
// kernel: rnn_forward.2
$region0: #{rnn_forward.2}
  #allocation0 [shape = 'u32[]', space=smem, size = 0x4, offset = 0x4, fixed_abs, tag = 'smem constant byte address 0x4 - core index']
  #allocation1 [shape = 'u32[144,128]{1,0:T(1,128)}', space=vmem, size = 0x12000, scoped, tag = 'internal scratch']
  #allocation2 [shape = 'f32[64,128]{1,0:T(8,128)}', space=vmem, size = 0x8000, scoped, tag = 'scratch operand']
  %s0 = inlined_call_operand.hbm [shape: f32[64,32], index: 0, kind: input, shape index: {}]
  %s1 = inlined_call_operand.hbm [shape: f32[32,128], index: 1, kind: input, shape index: {}]
  %s2 = inlined_call_operand.hbm [shape: f32[1,128], index: 2, kind: input, shape index: {}]
  %s3 = inlined_call_operand.hbm [shape: f32[64,128], index: 3, kind: output, shape index: {}]
  %s4 = sld [smem:[#allocation0]]
  $region42: #{rnn_forward.2} parent=0
    _
  %s6 = ssub.s32 1, %s4
  %s7 = scalar_select 0, %s6, %s4
  $region1: #{rnn_forward.2} parent=0
    #allocation3 [shape = 'u8[32768]{0}', space=vmem, size = 0x8000, scoped, tag = 'input window, operand 0, single buffered']
    #allocation4 [shape = 's32[1]{0}', space=sflag, size = 0x4, scoped, tag = 'scoped memory for rnn_forward.2']
    #allocation5 [shape = 's32[1]{0}', space=sflag, size = 0x4, scoped, tag = 'scoped memory for rnn_forward.2']
    #allocation6 [shape = 'u8[16384]{0}', space=vmem, size = 0x4000, scoped, tag = 'input window, operand 1, single buffered']
    #allocation7 [shape = 's32[1]{0}', space=sflag, size = 0x4, scoped, tag = 'scoped memory for rnn_forward.2']
    #allocation8 [shape = 'u8[512]{0}', space=vmem, size = 0x400, scoped, tag = 'input window, operand 2, single buffered']
    #allocation9 [shape = 'u8[32768]{0}', space=vmem, size = 0x8000, scoped, tag = 'output window, operand 0, single buffered']
    %8 = vsyncpa [#allocation4], 0
    %9 = vsyncpa [#allocation7], 0
    %10 = vsyncpa [#allocation5], 0
    // Predicated region
    $region2: #{rnn_forward.2} parent=1 // pred_check
      _
    $region3: #{rnn_forward.2} parent=1 // pred_check_branch
      %12 = sbr.rel (0) target = $region5
    $region4: #{rnn_forward.2} parent=1 // pred_region
      %s14 = ssub.s32 1024, 1024
      %15 = vsyncadd [#allocation4], %s14
      %s16 = sshll.u32 [#allocation3], 4
      %s17 = int_to_ptr.vmem [resolvable:$true] %s16
      %22 = dma.hbm_to_vmem [thread:$0]  %s0, 1024, %s17, [#allocation4], 128, 128, 8
    $region5: #{rnn_forward.2} parent=1 // pred_fallthru
      _
    // Predicated region
    $region6: #{rnn_forward.2} parent=1 // pred_check
      _
    $region7: #{rnn_forward.2} parent=1 // pred_check_branch
      %24 = sbr.rel (0) target = $region9
    $region8: #{rnn_forward.2} parent=1 // pred_region
      %s26 = ssub.s32 512, 512
      %27 = vsyncadd [#allocation7], %s26
      %s28 = sshll.u32 [#allocation6], 4
      %s29 = int_to_ptr.vmem [resolvable:$true] %s28
      %34 = dma.hbm_to_vmem [thread:$0]  %s1, 512, %s29, [#allocation7], 128, 128, 8
    $region9: #{rnn_forward.2} parent=1 // pred_fallthru
      _
    // Predicated region
    $region10: #{rnn_forward.2} parent=1 // pred_check
      _
    $region11: #{rnn_forward.2} parent=1 // pred_check_branch
      %36 = sbr.rel (0) target = $region13
    $region12: #{rnn_forward.2} parent=1 // pred_region
      %s38 = ssub.s32 16, 16
      %39 = vsyncadd [#allocation7], %s38
      %s41 = sshll.u32 [#allocation8], 4
      %s42 = int_to_ptr.vmem [resolvable:$true] %s41
      %44 = dma.hbm_to_vmem [thread:$0]  %s2, 16, %s42, [#allocation7]
    $region13: #{rnn_forward.2} parent=1 // pred_fallthru
      _
    // Predicated region
    $region14: #{rnn_forward.2} parent=1 // pred_check
      _
    $region15: #{rnn_forward.2} parent=1 // pred_check_branch
      %46 = sbr.rel (0) target = $region17
    $region16: #{rnn_forward.2} parent=1 // pred_region
      %47 = dma.done [#allocation4], 1024
    $region17: #{rnn_forward.2} parent=1 // pred_fallthru
      _
    // Predicated region
    $region18: #{rnn_forward.2} parent=1 // pred_check
      _
    $region19: #{rnn_forward.2} parent=1 // pred_check_branch
      %49 = sbr.rel (0) target = $region21
    $region20: #{rnn_forward.2} parent=1 // pred_region
      %50 = dma.done [#allocation7], 512
    $region21: #{rnn_forward.2} parent=1 // pred_fallthru
      _
    // Predicated region
    $region22: #{rnn_forward.2} parent=1 // pred_check
      _
    $region23: #{rnn_forward.2} parent=1 // pred_check_branch
      %52 = sbr.rel (0) target = $region25
    $region24: #{rnn_forward.2} parent=1 // pred_region
      %53 = dma.done [#allocation7], 16
    $region25: #{rnn_forward.2} parent=1 // pred_fallthru
      _
    %p54 = scmp.eq.s32.totalorder 0, 0
    // Predicated region
    $region26: #{rnn_forward.2} parent=1 // pred_check
      %p55 = pneg %p54
    $region27: #{rnn_forward.2} parent=1 // pred_check_branch
      %57 = sbr.rel (%p55) target = $region29
    $region28: #{rnn_forward.2} parent=1 // pred_region
      %58 = vst [vmem:[#allocation2] sm:$0xff] 0.0
      %59 = vst [vmem:[#allocation2 + $0x8] sm:$0xff] 0.0
      %60 = vst [vmem:[#allocation2 + $0x10] sm:$0xff] 0.0
      %61 = vst [vmem:[#allocation2 + $0x18] sm:$0xff] 0.0
      %62 = vst [vmem:[#allocation2 + $0x20] sm:$0xff] 0.0
      %63 = vst [vmem:[#allocation2 + $0x28] sm:$0xff] 0.0
      %64 = vst [vmem:[#allocation2 + $0x30] sm:$0xff] 0.0
      %65 = vst [vmem:[#allocation2 + $0x38] sm:$0xff] 0.0
    $region29: #{rnn_forward.2} parent=1 // pred_fallthru
      _
    %v66 = vld [vmem:[#allocation2] sm:$0xff]
    %v67 = vld [vmem:[#allocation2 + $0x8] sm:$0xff]
    %v68 = vld [vmem:[#allocation2 + $0x10] sm:$0xff]
    %v69 = vld [vmem:[#allocation2 + $0x18] sm:$0xff]
    %v70 = vld [vmem:[#allocation2 + $0x20] sm:$0xff]
    %v71 = vld [vmem:[#allocation2 + $0x28] sm:$0xff]
    %v72 = vld [vmem:[#allocation2 + $0x30] sm:$0xff]
    %v73 = vld [vmem:[#allocation2 + $0x38] sm:$0xff]
    %v74 = vld [vmem:[#allocation3] sm:$0xff]
    %v75 = vld [vmem:[#allocation3 + $0x8] sm:$0xff]
    %v76 = vld [vmem:[#allocation3 + $0x10] sm:$0xff]
    %v77 = vld [vmem:[#allocation3 + $0x18] sm:$0xff]
    %v78 = vld [vmem:[#allocation3 + $0x20] sm:$0xff]
    %v79 = vld [vmem:[#allocation3 + $0x28] sm:$0xff]
    %v80 = vld [vmem:[#allocation3 + $0x30] sm:$0xff]
    %v81 = vld [vmem:[#allocation3 + $0x38] sm:$0xff]
    %v82 = vld [vmem:[#allocation6] sm:$0xff]
    %v83 = vld [vmem:[#allocation6 + $0x8] sm:$0xff]
    %v84 = vld [vmem:[#allocation6 + $0x10] sm:$0xff]
    %v85 = vld [vmem:[#allocation6 + $0x18] sm:$0xff]
    %vm86 = vcmask 261120
    %v88 = vsel %vm86, %v74, 0
    %v91 = vsel %vm86, %v75, 0
    %v94 = vsel %vm86, %v76, 0
    %v97 = vsel %vm86, %v77, 0
    %v100 = vsel %vm86, %v78, 0
    %v103 = vsel %vm86, %v79, 0
    %v106 = vsel %vm86, %v80, 0
    %v109 = vsel %vm86, %v81, 0
    %111 = vmatprep.subr.mxu0 0.0
    %112 = vmatpush1.msra.mxu0 %v82
    %113 = vmatprep.subr.mxu0 0.0
    %114 = vmatpush1.msra.mxu0 %v83
    %115 = vmatprep.subr.mxu0 0.0
    %116 = vmatpush1.msra.mxu0 %v84
    %117 = vmatprep.subr.mxu0 0.0
    %118 = vmatpush1.msra.mxu0 %v85
    %119 = vmatprep.subr.mxu0 0.0
    %120 = vmatpush1.msra.mxu0 0.0
    %121 = vmatprep.subr.mxu0 0.0
    %122 = vmatpush1.msra.mxu0 0.0
    %123 = vmatprep.subr.mxu0 0.0
    %124 = vmatpush1.msra.mxu0 0.0
    %125 = vmatprep.subr.mxu0 0.0
    %126 = vmatpush1.msra.mxu0 0.0
    %127 = vmatprep.subr.mxu0 0.0
    %128 = vmatpush1.msra.mxu0 0.0
    %129 = vmatprep.subr.mxu0 0.0
    %130 = vmatpush1.msra.mxu0 0.0
    %131 = vmatprep.subr.mxu0 0.0
    %132 = vmatpush1.msra.mxu0 0.0
    %133 = vmatprep.subr.mxu0 0.0
    %134 = vmatpush1.msra.mxu0 0.0
    %135 = vmatprep.subr.mxu0 0.0
    %136 = vmatpush1.msra.mxu0 0.0
    %137 = vmatprep.subr.mxu0 0.0
    %138 = vmatpush1.msra.mxu0 0.0
    %139 = vmatprep.subr.mxu0 0.0
    %140 = vmatpush1.msra.mxu0 0.0
    %141 = vmatprep.subr.mxu0 0.0
    %142 = vmatpush1.msra.mxu0 0.0
    %143 = vmatprep.subr.mxu0 0.0
    %144 = vmatpush1.msra.mxu0 0.0
    %145 = vmatprep.subr.mxu0 0.0
    %146 = vmatpush1.msra.mxu0 0.0
    %147 = vmatprep.subr.mxu0 0.0
    %148 = vmatpush1.msra.mxu0 0.0
    %149 = vmatprep.subr.mxu0 0.0
    %150 = vmatpush1.msra.mxu0 0.0
    %151 = vmatprep.subr.mxu0 0.0
    %152 = vmatpush1.msra.mxu0 0.0
    %153 = vmatprep.subr.mxu0 0.0
    %154 = vmatpush1.msra.mxu0 0.0
    %155 = vmatprep.subr.mxu0 0.0
    %156 = vmatpush1.msra.mxu0 0.0
    %157 = vmatprep.subr.mxu0 0.0
    %158 = vmatpush1.msra.mxu0 0.0
    %159 = vmatprep.subr.mxu0 0.0
    %160 = vmatpush1.msra.mxu0 0.0
    %161 = vmatprep.subr.mxu0 0.0
    %162 = vmatpush1.msra.mxu0 0.0
    %163 = vmatprep.subr.mxu0 0.0
    %164 = vmatpush1.msra.mxu0 0.0
    %165 = vmatprep.subr.mxu0 0.0
    %166 = vmatpush1.msra.mxu0 0.0
    %167 = vmatprep.subr.mxu0 0.0
    %168 = vmatpush1.msra.mxu0 0.0
    %169 = vmatprep.subr.mxu0 0.0
    %170 = vmatpush1.msra.mxu0 0.0
    %171 = vmatprep.subr.mxu0 0.0
    %172 = vmatpush1.msra.mxu0 0.0
    %173 = vmatprep.subr.mxu0 0.0
    %174 = vmatpush1.msra.mxu0 0.0
    %175 = vmatprep.mubr.f32.mxu0 0.0
    %176 = vmatmul.mubr.f32.gmra.mrb[0].mxu0 %v88
    %v177 = vpop.f32.mrb[0].mxu0
    %v178 = vadd.f32 0.0, %v177
    %v179 = vpop.f32.mrb[0].mxu0
    %180 = vmatprep.mubr.f32.mxu0 0.0
    %181 = vmatmul.mubr.f32.gmra.mrb[0].mxu0 %v91
    %v182 = vpop.f32.mrb[0].mxu0
    %v183 = vadd.f32 0.0, %v182
    %v184 = vpop.f32.mrb[0].mxu0
    %185 = vmatprep.mubr.f32.mxu0 0.0
    %186 = vmatmul.mubr.f32.gmra.mrb[0].mxu0 %v94
    %v187 = vpop.f32.mrb[0].mxu0
    %v188 = vadd.f32 0.0, %v187
    %v189 = vpop.f32.mrb[0].mxu0
    %190 = vmatprep.mubr.f32.mxu0 0.0
    %191 = vmatmul.mubr.f32.gmra.mrb[0].mxu0 %v97
    %v192 = vpop.f32.mrb[0].mxu0
    %v193 = vadd.f32 0.0, %v192
    %v194 = vpop.f32.mrb[0].mxu0
    %195 = vmatprep.mubr.f32.mxu0 0.0
    %196 = vmatmul.mubr.f32.gmra.mrb[0].mxu0 %v100
    %v197 = vpop.f32.mrb[0].mxu0
    %v198 = vadd.f32 0.0, %v197
    %v199 = vpop.f32.mrb[0].mxu0
    %200 = vmatprep.mubr.f32.mxu0 0.0
    %201 = vmatmul.mubr.f32.gmra.mrb[0].mxu0 %v103
    %v202 = vpop.f32.mrb[0].mxu0
    %v203 = vadd.f32 0.0, %v202
    %v204 = vpop.f32.mrb[0].mxu0
    %205 = vmatprep.mubr.f32.mxu0 0.0
    %206 = vmatmul.mubr.f32.gmra.mrb[0].mxu0 %v106
    %v207 = vpop.f32.mrb[0].mxu0
    %v208 = vadd.f32 0.0, %v207
    %v209 = vpop.f32.mrb[0].mxu0
    %210 = vmatprep.mubr.f32.mxu0 0.0
    %211 = vmatmul.mubr.f32.gmra.mrb[0].mxu0 %v109
    %v212 = vpop.f32.mrb[0].mxu0
    %v213 = vadd.f32 0.0, %v212
    %v214 = vpop.f32.mrb[0].mxu0
    %215 = vdwg.mxu0
    %v216 = vadd.f32 %v66, %v178
    %v217 = vadd.f32 %v67, %v183
    %v218 = vadd.f32 %v68, %v188
    %v219 = vadd.f32 %v69, %v193
    %v220 = vadd.f32 %v70, %v198
    %v221 = vadd.f32 %v71, %v203
    %v222 = vadd.f32 %v72, %v208
    %v223 = vadd.f32 %v73, %v213
    %224 = vst [vmem:[#allocation2] sm:$0xff] %v216
    %225 = vst [vmem:[#allocation2 + $0x8] sm:$0xff] %v217
    %226 = vst [vmem:[#allocation2 + $0x10] sm:$0xff] %v218
    %227 = vst [vmem:[#allocation2 + $0x18] sm:$0xff] %v219
    %228 = vst [vmem:[#allocation2 + $0x20] sm:$0xff] %v220
    %229 = vst [vmem:[#allocation2 + $0x28] sm:$0xff] %v221
    %230 = vst [vmem:[#allocation2 + $0x30] sm:$0xff] %v222
    %231 = vst [vmem:[#allocation2 + $0x38] sm:$0xff] %v223
    // Predicated region
    $region30: #{rnn_forward.2} parent=1 // pred_check
      %p232 = pneg %p54
    $region31: #{rnn_forward.2} parent=1 // pred_check_branch
      %234 = sbr.rel (%p232) target = $region33
    $region32: #{rnn_forward.2} parent=1 // pred_region
      %v235 = vld [vmem:[#allocation2] sm:$0xff]
      %v236 = vld [vmem:[#allocation2 + $0x8] sm:$0xff]
      %v237 = vld [vmem:[#allocation2 + $0x10] sm:$0xff]
      %v238 = vld [vmem:[#allocation2 + $0x18] sm:$0xff]
      %v239 = vld [vmem:[#allocation2 + $0x20] sm:$0xff]
      %v240 = vld [vmem:[#allocation2 + $0x28] sm:$0xff]
      %v241 = vld [vmem:[#allocation2 + $0x30] sm:$0xff]
      %v242 = vld [vmem:[#allocation2 + $0x38] sm:$0xff]
      %v243 = vld [vmem:[#allocation8] sm:$0x1]
      %v245 = vlaneseq
      %v246 = vshrl.u32 %v245, 7
      %v247 = vsub.s32 0, %v246
      %v248 = vrot.slane %v243, %v247
      %v250 = vadd.f32 %v235, %v248
      %v251 = vadd.f32 %v236, %v248
      %v252 = vadd.f32 %v237, %v248
      %v253 = vadd.f32 %v238, %v248
      %v254 = vadd.f32 %v239, %v248
      %v255 = vadd.f32 %v240, %v248
      %v256 = vadd.f32 %v241, %v248
      %v257 = vadd.f32 %v242, %v248
      %258 = vst [vmem:[#allocation9] sm:$0xff] %v250
      %259 = vst [vmem:[#allocation9 + $0x8] sm:$0xff] %v251
      %260 = vst [vmem:[#allocation9 + $0x10] sm:$0xff] %v252
      %261 = vst [vmem:[#allocation9 + $0x18] sm:$0xff] %v253
      %262 = vst [vmem:[#allocation9 + $0x20] sm:$0xff] %v254
      %263 = vst [vmem:[#allocation9 + $0x28] sm:$0xff] %v255
      %264 = vst [vmem:[#allocation9 + $0x30] sm:$0xff] %v256
      %265 = vst [vmem:[#allocation9 + $0x38] sm:$0xff] %v257
    $region33: #{rnn_forward.2} parent=1 // pred_fallthru
      _
    // Predicated region
    $region34: #{rnn_forward.2} parent=1 // pred_check
      _
    $region35: #{rnn_forward.2} parent=1 // pred_check_branch
      %267 = sbr.rel (0) target = $region37
    $region36: #{rnn_forward.2} parent=1 // pred_region
      %s269 = ssub.s32 1024, 1024
      %270 = vsyncadd [#allocation5], %s269
      %s271 = sshll.u32 [#allocation9], 4
      %s272 = int_to_ptr.vmem [resolvable:$true] %s271
      %277 = dma.vmem_to_hbm [thread:$0]  %s272, 1024, %s3, [#allocation5], 128, 128, 8
    $region37: #{rnn_forward.2} parent=1 // pred_fallthru
      _
    // Predicated region
    $region38: #{rnn_forward.2} parent=1 // pred_check
      _
    $region39: #{rnn_forward.2} parent=1 // pred_check_branch
      %279 = sbr.rel (0) target = $region41
    $region40: #{rnn_forward.2} parent=1 // pred_region
      %280 = dma.done [#allocation5], 1024
    $region41: #{rnn_forward.2} parent=1 // pred_fallthru
      _
    %281 = vsyncpa [#allocation4], 1
    %282 = vsyncpa [#allocation7], 1
    %283 = vsyncpa [#allocation5], 1

// kernel: rnn_forward.3
$region0: #{rnn_forward.3}
  #allocation0 [shape = 'u32[]', space=smem, size = 0x4, offset = 0x4, fixed_abs, tag = 'smem constant byte address 0x4 - core index']
  #allocation1 [shape = 'u32[144,128]{1,0:T(1,128)}', space=vmem, size = 0x12000, scoped, tag = 'internal scratch']
  #allocation2 [shape = 'f32[8,128]{1,0:T(8,128)}', space=vmem, size = 0x1000, scoped, tag = 'scratch operand']
  #allocation3 [shape = 'f32[8,8,128]{2,1,0:T(8,128)}', space=vmem, size = 0x8000, scoped, tag = 'scratch operand']
  %s0 = inlined_call_operand.hbm [shape: f32[8,8,128], index: 0, kind: input, shape index: {}]
  %s1 = inlined_call_operand.hbm [shape: f32[128,128], index: 1, kind: input, shape index: {}]
  %s2 = inlined_call_operand.hbm [shape: f32[128,128], index: 2, kind: input, shape index: {}]
  %s3 = inlined_call_operand.hbm [shape: f32[1,128], index: 3, kind: input, shape index: {}]
  %s4 = inlined_call_operand.hbm [shape: f32[8,8,128], index: 4, kind: output, shape index: {}]
  %s5 = sld [smem:[#allocation0]]
  $region46: #{rnn_forward.3} parent=0
    _
  %s7 = ssub.s32 1, %s5
  %s8 = scalar_select 0, %s7, %s5
  $region1: #{rnn_forward.3} parent=0
    #allocation4 [shape = 'u8[32768]{0}', space=vmem, size = 0x8000, scoped, tag = 'input window, operand 0, single buffered']
    #allocation5 [shape = 's32[1]{0}', space=sflag, size = 0x4, scoped, tag = 'scoped memory for rnn_forward.3']
    #allocation6 [shape = 's32[1]{0}', space=sflag, size = 0x4, scoped, tag = 'scoped memory for rnn_forward.3']
    #allocation7 [shape = 'u8[65536]{0}', space=vmem, size = 0x10000, scoped, tag = 'input window, operand 1, single buffered']
    #allocation8 [shape = 's32[1]{0}', space=sflag, size = 0x4, scoped, tag = 'scoped memory for rnn_forward.3']
    #allocation9 [shape = 'u8[65536]{0}', space=vmem, size = 0x10000, scoped, tag = 'input window, operand 2, single buffered']
    #allocation10 [shape = 'u8[512]{0}', space=vmem, size = 0x400, scoped, tag = 'input window, operand 3, single buffered']
    #allocation11 [shape = 's32[1]{0}', space=sflag, size = 0x4, scoped, tag = 'scoped memory for rnn_forward.3']
    #allocation12 [shape = 'u8[32768]{0}', space=vmem, size = 0x8000, scoped, tag = 'output window, operand 0, single buffered']
    %9 = vsyncpa [#allocation5], 0
    %10 = vsyncpa [#allocation8], 0
    %11 = vsyncpa [#allocation11], 0
    %12 = vsyncpa [#allocation6], 0
    // Predicated region
    $region2: #{rnn_forward.3} parent=1 // pred_check
      _
    $region3: #{rnn_forward.3} parent=1 // pred_check_branch
      %14 = sbr.rel (0) target = $region5
    $region4: #{rnn_forward.3} parent=1 // pred_region
      %s16 = ssub.s32 1024, 1024
      %17 = vsyncadd [#allocation5], %s16
      %s18 = sshll.u32 [#allocation4], 4
      %s19 = int_to_ptr.vmem [resolvable:$true] %s18
      %24 = dma.hbm_to_vmem [thread:$0]  %s0, 1024, %s19, [#allocation5], 128, 128, 8
    $region5: #{rnn_forward.3} parent=1 // pred_fallthru
      _
    // Predicated region
    $region6: #{rnn_forward.3} parent=1 // pred_check
      _
    $region7: #{rnn_forward.3} parent=1 // pred_check_branch
      %26 = sbr.rel (0) target = $region9
    $region8: #{rnn_forward.3} parent=1 // pred_region
      %s28 = ssub.s32 2048, 2048
      %29 = vsyncadd [#allocation8], %s28
      %s30 = sshll.u32 [#allocation7], 4
      %s31 = int_to_ptr.vmem [resolvable:$true] %s30
      %36 = dma.hbm_to_vmem [thread:$0]  %s1, 2048, %s31, [#allocation8], 128, 128, 8
    $region9: #{rnn_forward.3} parent=1 // pred_fallthru
      _
    // Predicated region
    $region10: #{rnn_forward.3} parent=1 // pred_check
      _
    $region11: #{rnn_forward.3} parent=1 // pred_check_branch
      %38 = sbr.rel (0) target = $region13
    $region12: #{rnn_forward.3} parent=1 // pred_region
      %s40 = ssub.s32 2048, 2048
      %41 = vsyncadd [#allocation8], %s40
      %s42 = sshll.u32 [#allocation9], 4
      %s43 = int_to_ptr.vmem [resolvable:$true] %s42
      %48 = dma.hbm_to_vmem [thread:$0]  %s2, 2048, %s43, [#allocation8], 128, 128, 8
    $region13: #{rnn_forward.3} parent=1 // pred_fallthru
      _
    // Predicated region
    $region14: #{rnn_forward.3} parent=1 // pred_check
      _
    $region15: #{rnn_forward.3} parent=1 // pred_check_branch
      %50 = sbr.rel (0) target = $region17
    $region16: #{rnn_forward.3} parent=1 // pred_region
      %s52 = ssub.s32 16, 16
      %53 = vsyncadd [#allocation11], %s52
      %s55 = sshll.u32 [#allocation10], 4
      %s56 = int_to_ptr.vmem [resolvable:$true] %s55
      %58 = dma.hbm_to_vmem [thread:$0]  %s3, 16, %s56, [#allocation11]
    $region17: #{rnn_forward.3} parent=1 // pred_fallthru
      _
    // Predicated region
    $region18: #{rnn_forward.3} parent=1 // pred_check
      _
    $region19: #{rnn_forward.3} parent=1 // pred_check_branch
      %60 = sbr.rel (0) target = $region21
    $region20: #{rnn_forward.3} parent=1 // pred_region
      %61 = dma.done [#allocation5], 1024
    $region21: #{rnn_forward.3} parent=1 // pred_fallthru
      _
    // Predicated region
    $region22: #{rnn_forward.3} parent=1 // pred_check
      _
    $region23: #{rnn_forward.3} parent=1 // pred_check_branch
      %63 = sbr.rel (0) target = $region25
    $region24: #{rnn_forward.3} parent=1 // pred_region
      %64 = dma.done [#allocation8], 2048
    $region25: #{rnn_forward.3} parent=1 // pred_fallthru
      _
    // Predicated region
    $region26: #{rnn_forward.3} parent=1 // pred_check
      _
    $region27: #{rnn_forward.3} parent=1 // pred_check_branch
      %66 = sbr.rel (0) target = $region29
    $region28: #{rnn_forward.3} parent=1 // pred_region
      %67 = dma.done [#allocation8], 2048
    $region29: #{rnn_forward.3} parent=1 // pred_fallthru
      _
    // Predicated region
    $region30: #{rnn_forward.3} parent=1 // pred_check
      _
    $region31: #{rnn_forward.3} parent=1 // pred_check_branch
      %69 = sbr.rel (0) target = $region33
    $region32: #{rnn_forward.3} parent=1 // pred_region
      %70 = dma.done [#allocation11], 16
    $region33: #{rnn_forward.3} parent=1 // pred_fallthru
      _
    %p71 = scmp.eq.s32.totalorder 0, 0
    // Predicated region
    $region34: #{rnn_forward.3} parent=1 // pred_check
      %p72 = pneg %p71
    $region35: #{rnn_forward.3} parent=1 // pred_check_branch
      %74 = sbr.rel (%p72) target = $region37
    $region36: #{rnn_forward.3} parent=1 // pred_region
      %75 = vst [vmem:[#allocation2] sm:$0xff] 0.0
    $region37: #{rnn_forward.3} parent=1 // pred_fallthru
      _
    %v76 = vld [vmem:[#allocation7] sm:$0xff]
    %v77 = vld [vmem:[#allocation7 + $0x8] sm:$0xff]
    %v78 = vld [vmem:[#allocation7 + $0x10] sm:$0xff]
    %v79 = vld [vmem:[#allocation7 + $0x18] sm:$0xff]
    %v80 = vld [vmem:[#allocation7 + $0x20] sm:$0xff]
    %v81 = vld [vmem:[#allocation7 + $0x28] sm:$0xff]
    %v82 = vld [vmem:[#allocation7 + $0x30] sm:$0xff]
    %v83 = vld [vmem:[#allocation7 + $0x38] sm:$0xff]
    %v84 = vld [vmem:[#allocation7 + $0x40] sm:$0xff]
    %v85 = vld [vmem:[#allocation7 + $0x48] sm:$0xff]
    %v86 = vld [vmem:[#allocation7 + $0x50] sm:$0xff]
    %v87 = vld [vmem:[#allocation7 + $0x58] sm:$0xff]
    %v88 = vld [vmem:[#allocation7 + $0x60] sm:$0xff]
    %v89 = vld [vmem:[#allocation7 + $0x68] sm:$0xff]
    %v90 = vld [vmem:[#allocation7 + $0x70] sm:$0xff]
    %v91 = vld [vmem:[#allocation7 + $0x78] sm:$0xff]
    %v92 = vld [vmem:[#allocation2] sm:$0xff]
    %93 = vmatprep.subr.mxu0 0.0
    %94 = vmatpush1.msra.mxu0 %v76
    %95 = vmatprep.subr.mxu0 0.0
    %96 = vmatpush1.msra.mxu0 %v77
    %97 = vmatprep.subr.mxu0 0.0
    %98 = vmatpush1.msra.mxu0 %v78
    %99 = vmatprep.subr.mxu0 0.0
    %100 = vmatpush1.msra.mxu0 %v79
    %101 = vmatprep.subr.mxu0 0.0
    %102 = vmatpush1.msra.mxu0 %v80
    %103 = vmatprep.subr.mxu0 0.0
    %104 = vmatpush1.msra.mxu0 %v81
    %105 = vmatprep.subr.mxu0 0.0
    %106 = vmatpush1.msra.mxu0 %v82
    %107 = vmatprep.subr.mxu0 0.0
    %108 = vmatpush1.msra.mxu0 %v83
    %109 = vmatprep.subr.mxu0 0.0
    %110 = vmatpush1.msra.mxu0 %v84
    %111 = vmatprep.subr.mxu0 0.0
    %112 = vmatpush1.msra.mxu0 %v85
    %113 = vmatprep.subr.mxu0 0.0
    %114 = vmatpush1.msra.mxu0 %v86
    %115 = vmatprep.subr.mxu0 0.0
    %116 = vmatpush1.msra.mxu0 %v87
    %117 = vmatprep.subr.mxu0 0.0
    %118 = vmatpush1.msra.mxu0 %v88
    %119 = vmatprep.subr.mxu0 0.0
    %120 = vmatpush1.msra.mxu0 %v89
    %121 = vmatprep.subr.mxu0 0.0
    %122 = vmatpush1.msra.mxu0 %v90
    %123 = vmatprep.subr.mxu0 0.0
    %124 = vmatpush1.msra.mxu0 %v91
    %125 = vmatprep.subr.mxu0 0.0
    %126 = vmatpush1.msra.mxu0 0.0
    %127 = vmatprep.subr.mxu0 0.0
    %128 = vmatpush1.msra.mxu0 0.0
    %129 = vmatprep.subr.mxu0 0.0
    %130 = vmatpush1.msra.mxu0 0.0
    %131 = vmatprep.subr.mxu0 0.0
    %132 = vmatpush1.msra.mxu0 0.0
    %133 = vmatprep.subr.mxu0 0.0
    %134 = vmatpush1.msra.mxu0 0.0
    %135 = vmatprep.subr.mxu0 0.0
    %136 = vmatpush1.msra.mxu0 0.0
    %137 = vmatprep.subr.mxu0 0.0
    %138 = vmatpush1.msra.mxu0 0.0
    %139 = vmatprep.subr.mxu0 0.0
    %140 = vmatpush1.msra.mxu0 0.0
    %141 = vmatprep.subr.mxu0 0.0
    %142 = vmatpush1.msra.mxu0 0.0
    %143 = vmatprep.subr.mxu0 0.0
    %144 = vmatpush1.msra.mxu0 0.0
    %145 = vmatprep.subr.mxu0 0.0
    %146 = vmatpush1.msra.mxu0 0.0
    %147 = vmatprep.subr.mxu0 0.0
    %148 = vmatpush1.msra.mxu0 0.0
    %149 = vmatprep.subr.mxu0 0.0
    %150 = vmatpush1.msra.mxu0 0.0
    %151 = vmatprep.subr.mxu0 0.0
    %152 = vmatpush1.msra.mxu0 0.0
    %153 = vmatprep.subr.mxu0 0.0
    %154 = vmatpush1.msra.mxu0 0.0
    %155 = vmatprep.subr.mxu0 0.0
    %156 = vmatpush1.msra.mxu0 0.0
    %157 = vmatprep.mubr.f32.mxu0 0.0
    %158 = vmatmul.mubr.f32.gmra.mrb[0].mxu0 %v92
    %v159 = vpop.f32.mrb[0].mxu0
    %v160 = vadd.f32 0.0, %v159
    %v161 = vpop.f32.mrb[0].mxu0
    %162 = vdwg.mxu0
    %v163 = vld [vmem:[#allocation4] sm:$0xff]
    %v164 = vadd.f32 %v163, %v160
    %v165 = vtanh.pop %v164
    %v167 = vcombine.high %v165, %v165
    %v169 = vunpack.c.l.s4 1966171168
    %v170 = vunpack.c.0.s8 %v169
    %v171 = vlaneseq
    %v172 = vshrl.u32 %v171, 7
    %v173 = vsub.s32 %v170, %v172
    %v174 = vrot.slane %v165, %v173
    %v176 = vunpack.c.l.s4 1966171168
    %v177 = vunpack.c.0.s8 %v176
    %v178 = vlaneseq
    %v179 = vshrl.u32 %v178, 7
    %v180 = vsub.s32 %v177, %v179
    %v181 = vrot.slane %v167, %v180
    %v182 = vcombine.high %v174, %v174
    %v183 = vcombine.high %v181, %v181
    %v185 = vunpack.c.l.s4 1966171168
    %v186 = vunpack.c.0.s8 %v185
    %v187 = vlaneseq
    %v188 = vshrl.u32 %v187, 7
    %v189 = vsub.s32 %v186, %v188
    %v190 = vrot.slane %v174, %v189
    %v192 = vunpack.c.l.s4 1966171168
    %v193 = vunpack.c.0.s8 %v192
    %v194 = vlaneseq
    %v195 = vshrl.u32 %v194, 7
    %v196 = vsub.s32 %v193, %v195
    %v197 = vrot.slane %v181, %v196
    %v199 = vunpack.c.l.s4 1966171168
    %v200 = vunpack.c.0.s8 %v199
    %v201 = vlaneseq
    %v202 = vshrl.u32 %v201, 7
    %v203 = vsub.s32 %v200, %v202
    %v204 = vrot.slane %v182, %v203
    %v206 = vunpack.c.l.s4 1966171168
    %v207 = vunpack.c.0.s8 %v206
    %v208 = vlaneseq
    %v209 = vshrl.u32 %v208, 7
    %v210 = vsub.s32 %v207, %v209
    %v211 = vrot.slane %v183, %v210
    %v212 = vcombine.high %v190, %v190
    %v213 = vcombine.high %v197, %v197
    %v214 = vcombine.high %v204, %v204
    %v215 = vcombine.high %v211, %v211
    %224 = vst [vmem:[#allocation3] sm:$0x1] %v190
    %225 = vst [vmem:[#allocation3 + $0x8] sm:$0x1] %v204
    %226 = vst [vmem:[#allocation3 + $0x10] sm:$0x1] %v212
    %227 = vst [vmem:[#allocation3 + $0x18] sm:$0x1] %v214
    %228 = vst [vmem:[#allocation3 + $0x20] sm:$0x1] %v197
    %229 = vst [vmem:[#allocation3 + $0x28] sm:$0x1] %v211
    %230 = vst [vmem:[#allocation3 + $0x30] sm:$0x1] %v213
    %231 = vst [vmem:[#allocation3 + $0x38] sm:$0x1] %v215
    %232 = vmatprep.subr.mxu0 0.0
    %233 = vmatpush1.msra.mxu0 %v76
    %234 = vmatprep.subr.mxu0 0.0
    %235 = vmatpush1.msra.mxu0 %v77
    %236 = vmatprep.subr.mxu0 0.0
    %237 = vmatpush1.msra.mxu0 %v78
    %238 = vmatprep.subr.mxu0 0.0
    %239 = vmatpush1.msra.mxu0 %v79
    %240 = vmatprep.subr.mxu0 0.0
    %241 = vmatpush1.msra.mxu0 %v80
    %242 = vmatprep.subr.mxu0 0.0
    %243 = vmatpush1.msra.mxu0 %v81
    %244 = vmatprep.subr.mxu0 0.0
    %245 = vmatpush1.msra.mxu0 %v82
    %246 = vmatprep.subr.mxu0 0.0
    %247 = vmatpush1.msra.mxu0 %v83
    %248 = vmatprep.subr.mxu0 0.0
    %249 = vmatpush1.msra.mxu0 %v84
    %250 = vmatprep.subr.mxu0 0.0
    %251 = vmatpush1.msra.mxu0 %v85
    %252 = vmatprep.subr.mxu0 0.0
    %253 = vmatpush1.msra.mxu0 %v86
    %254 = vmatprep.subr.mxu0 0.0
    %255 = vmatpush1.msra.mxu0 %v87
    %256 = vmatprep.subr.mxu0 0.0
    %257 = vmatpush1.msra.mxu0 %v88
    %258 = vmatprep.subr.mxu0 0.0
    %259 = vmatpush1.msra.mxu0 %v89
    %260 = vmatprep.subr.mxu0 0.0
    %261 = vmatpush1.msra.mxu0 %v90
    %262 = vmatprep.subr.mxu0 0.0
    %263 = vmatpush1.msra.mxu0 %v91
    %264 = vmatprep.subr.mxu0 0.0
    %265 = vmatpush1.msra.mxu0 0.0
    %266 = vmatprep.subr.mxu0 0.0
    %267 = vmatpush1.msra.mxu0 0.0
    %268 = vmatprep.subr.mxu0 0.0
    %269 = vmatpush1.msra.mxu0 0.0
    %270 = vmatprep.subr.mxu0 0.0
    %271 = vmatpush1.msra.mxu0 0.0
    %272 = vmatprep.subr.mxu0 0.0
    %273 = vmatpush1.msra.mxu0 0.0
    %274 = vmatprep.subr.mxu0 0.0
    %275 = vmatpush1.msra.mxu0 0.0
    %276 = vmatprep.subr.mxu0 0.0
    %277 = vmatpush1.msra.mxu0 0.0
    %278 = vmatprep.subr.mxu0 0.0
    %279 = vmatpush1.msra.mxu0 0.0
    %280 = vmatprep.subr.mxu0 0.0
    %281 = vmatpush1.msra.mxu0 0.0
    %282 = vmatprep.subr.mxu0 0.0
    %283 = vmatpush1.msra.mxu0 0.0
    %284 = vmatprep.subr.mxu0 0.0
    %285 = vmatpush1.msra.mxu0 0.0
    %286 = vmatprep.subr.mxu0 0.0
    %287 = vmatpush1.msra.mxu0 0.0
    %288 = vmatprep.subr.mxu0 0.0
    %289 = vmatpush1.msra.mxu0 0.0
    %290 = vmatprep.subr.mxu0 0.0
    %291 = vmatpush1.msra.mxu0 0.0
    %292 = vmatprep.subr.mxu0 0.0
    %293 = vmatpush1.msra.mxu0 0.0
    %294 = vmatprep.subr.mxu0 0.0
    %295 = vmatpush1.msra.mxu0 0.0
    %296 = vmatprep.mubr.f32.mxu0 0.0
    %297 = vmatmul.mubr.f32.gmra.mrb[0].mxu0 %v165
    %v298 = vpop.f32.mrb[0].mxu0
    %v299 = vadd.f32 0.0, %v298
    %v300 = vpop.f32.mrb[0].mxu0
    %301 = vdwg.mxu0
    %s302 = scalar_lea.vmem [#allocation4], 8
    %v303 = vld [vmem:[%s302] sm:$0xff]
    %v304 = vadd.f32 %v303, %v299
    %v305 = vtanh.pop %v304
    %v307 = vcombine.high %v305, %v305
    %v309 = vunpack.c.l.s4 1966171168
    %v310 = vunpack.c.0.s8 %v309
    %v311 = vlaneseq
    %v312 = vshrl.u32 %v311, 7
    %v313 = vsub.s32 %v310, %v312
    %v314 = vrot.slane %v305, %v313
    %v316 = vunpack.c.l.s4 1966171168
    %v317 = vunpack.c.0.s8 %v316
    %v318 = vlaneseq
    %v319 = vshrl.u32 %v318, 7
    %v320 = vsub.s32 %v317, %v319
    %v321 = vrot.slane %v307, %v320
    %v322 = vcombine.high %v314, %v314
    %v323 = vcombine.high %v321, %v321
    %v325 = vunpack.c.l.s4 1966171168
    %v326 = vunpack.c.0.s8 %v325
    %v327 = vlaneseq
    %v328 = vshrl.u32 %v327, 7
    %v329 = vsub.s32 %v326, %v328
    %v330 = vrot.slane %v314, %v329
    %v332 = vunpack.c.l.s4 1966171168
    %v333 = vunpack.c.0.s8 %v332
    %v334 = vlaneseq
    %v335 = vshrl.u32 %v334, 7
    %v336 = vsub.s32 %v333, %v335
    %v337 = vrot.slane %v321, %v336
    %v339 = vunpack.c.l.s4 1966171168
    %v340 = vunpack.c.0.s8 %v339
    %v341 = vlaneseq
    %v342 = vshrl.u32 %v341, 7
    %v343 = vsub.s32 %v340, %v342
    %v344 = vrot.slane %v322, %v343
    %v346 = vunpack.c.l.s4 1966171168
    %v347 = vunpack.c.0.s8 %v346
    %v348 = vlaneseq
    %v349 = vshrl.u32 %v348, 7
    %v350 = vsub.s32 %v347, %v349
    %v351 = vrot.slane %v323, %v350
    %v352 = vcombine.high %v330, %v330
    %v353 = vcombine.high %v337, %v337
    %v354 = vcombine.high %v344, %v344
    %v355 = vcombine.high %v351, %v351
    %364 = vst [vmem:[#allocation3 + $0x1] sm:$0x1] %v330
    %365 = vst [vmem:[#allocation3 + $0x9] sm:$0x1] %v344
    %366 = vst [vmem:[#allocation3 + $0x11] sm:$0x1] %v352
    %367 = vst [vmem:[#allocation3 + $0x19] sm:$0x1] %v354
    %368 = vst [vmem:[#allocation3 + $0x21] sm:$0x1] %v337
    %369 = vst [vmem:[#allocation3 + $0x29] sm:$0x1] %v351
    %370 = vst [vmem:[#allocation3 + $0x31] sm:$0x1] %v353
    %371 = vst [vmem:[#allocation3 + $0x39] sm:$0x1] %v355
    %372 = vmatprep.subr.mxu0 0.0
    %373 = vmatpush1.msra.mxu0 %v76
    %374 = vmatprep.subr.mxu0 0.0
    %375 = vmatpush1.msra.mxu0 %v77
    %376 = vmatprep.subr.mxu0 0.0
    %377 = vmatpush1.msra.mxu0 %v78
    %378 = vmatprep.subr.mxu0 0.0
    %379 = vmatpush1.msra.mxu0 %v79
    %380 = vmatprep.subr.mxu0 0.0
    %381 = vmatpush1.msra.mxu0 %v80
    %382 = vmatprep.subr.mxu0 0.0
    %383 = vmatpush1.msra.mxu0 %v81
    %384 = vmatprep.subr.mxu0 0.0
    %385 = vmatpush1.msra.mxu0 %v82
    %386 = vmatprep.subr.mxu0 0.0
    %387 = vmatpush1.msra.mxu0 %v83
    %388 = vmatprep.subr.mxu0 0.0
    %389 = vmatpush1.msra.mxu0 %v84
    %390 = vmatprep.subr.mxu0 0.0
    %391 = vmatpush1.msra.mxu0 %v85
    %392 = vmatprep.subr.mxu0 0.0
    %393 = vmatpush1.msra.mxu0 %v86
    %394 = vmatprep.subr.mxu0 0.0
    %395 = vmatpush1.msra.mxu0 %v87
    %396 = vmatprep.subr.mxu0 0.0
    %397 = vmatpush1.msra.mxu0 %v88
    %398 = vmatprep.subr.mxu0 0.0
    %399 = vmatpush1.msra.mxu0 %v89
    %400 = vmatprep.subr.mxu0 0.0
    %401 = vmatpush1.msra.mxu0 %v90
    %402 = vmatprep.subr.mxu0 0.0
    %403 = vmatpush1.msra.mxu0 %v91
    %404 = vmatprep.subr.mxu0 0.0
    %405 = vmatpush1.msra.mxu0 0.0
    %406 = vmatprep.subr.mxu0 0.0
    %407 = vmatpush1.msra.mxu0 0.0
    %408 = vmatprep.subr.mxu0 0.0
    %409 = vmatpush1.msra.mxu0 0.0
    %410 = vmatprep.subr.mxu0 0.0
    %411 = vmatpush1.msra.mxu0 0.0
    %412 = vmatprep.subr.mxu0 0.0
    %413 = vmatpush1.msra.mxu0 0.0
    %414 = vmatprep.subr.mxu0 0.0
    %415 = vmatpush1.msra.mxu0 0.0
    %416 = vmatprep.subr.mxu0 0.0
    %417 = vmatpush1.msra.mxu0 0.0
    %418 = vmatprep.subr.mxu0 0.0
    %419 = vmatpush1.msra.mxu0 0.0
    %420 = vmatprep.subr.mxu0 0.0
    %421 = vmatpush1.msra.mxu0 0.0
    %422 = vmatprep.subr.mxu0 0.0
    %423 = vmatpush1.msra.mxu0 0.0
    %424 = vmatprep.subr.mxu0 0.0
    %425 = vmatpush1.msra.mxu0 0.0
    %426 = vmatprep.subr.mxu0 0.0
    %427 = vmatpush1.msra.mxu0 0.0
    %428 = vmatprep.subr.mxu0 0.0
    %429 = vmatpush1.msra.mxu0 0.0
    %430 = vmatprep.subr.mxu0 0.0
    %431 = vmatpush1.msra.mxu0 0.0
    %432 = vmatprep.subr.mxu0 0.0
    %433 = vmatpush1.msra.mxu0 0.0
    %434 = vmatprep.subr.mxu0 0.0
    %435 = vmatpush1.msra.mxu0 0.0
    %436 = vmatprep.mubr.f32.mxu0 0.0
    %437 = vmatmul.mubr.f32.gmra.mrb[0].mxu0 %v305
    %v438 = vpop.f32.mrb[0].mxu0
    %v439 = vadd.f32 0.0, %v438
    %v440 = vpop.f32.mrb[0].mxu0
    %441 = vdwg.mxu0
    %s442 = scalar_lea.vmem [#allocation4], 16
    %v443 = vld [vmem:[%s442] sm:$0xff]
    %v444 = vadd.f32 %v443, %v439
    %v445 = vtanh.pop %v444
    %v447 = vcombine.high %v445, %v445
    %v449 = vunpack.c.l.s4 1966171168
    %v450 = vunpack.c.0.s8 %v449
    %v451 = vlaneseq
    %v452 = vshrl.u32 %v451, 7
    %v453 = vsub.s32 %v450, %v452
    %v454 = vrot.slane %v445, %v453
    %v456 = vunpack.c.l.s4 1966171168
    %v457 = vunpack.c.0.s8 %v456
    %v458 = vlaneseq
    %v459 = vshrl.u32 %v458, 7
    %v460 = vsub.s32 %v457, %v459
    %v461 = vrot.slane %v447, %v460
    %v462 = vcombine.high %v454, %v454
    %v463 = vcombine.high %v461, %v461
    %v465 = vunpack.c.l.s4 1966171168
    %v466 = vunpack.c.0.s8 %v465
    %v467 = vlaneseq
    %v468 = vshrl.u32 %v467, 7
    %v469 = vsub.s32 %v466, %v468
    %v470 = vrot.slane %v454, %v469
    %v472 = vunpack.c.l.s4 1966171168
    %v473 = vunpack.c.0.s8 %v472
    %v474 = vlaneseq
    %v475 = vshrl.u32 %v474, 7
    %v476 = vsub.s32 %v473, %v475
    %v477 = vrot.slane %v461, %v476
    %v479 = vunpack.c.l.s4 1966171168
    %v480 = vunpack.c.0.s8 %v479
    %v481 = vlaneseq
    %v482 = vshrl.u32 %v481, 7
    %v483 = vsub.s32 %v480, %v482
    %v484 = vrot.slane %v462, %v483
    %v486 = vunpack.c.l.s4 1966171168
    %v487 = vunpack.c.0.s8 %v486
    %v488 = vlaneseq
    %v489 = vshrl.u32 %v488, 7
    %v490 = vsub.s32 %v487, %v489
    %v491 = vrot.slane %v463, %v490
    %v492 = vcombine.high %v470, %v470
    %v493 = vcombine.high %v477, %v477
    %v494 = vcombine.high %v484, %v484
    %v495 = vcombine.high %v491, %v491
    %504 = vst [vmem:[#allocation3 + $0x2] sm:$0x1] %v470
    %505 = vst [vmem:[#allocation3 + $0xa] sm:$0x1] %v484
    %506 = vst [vmem:[#allocation3 + $0x12] sm:$0x1] %v492
    %507 = vst [vmem:[#allocation3 + $0x1a] sm:$0x1] %v494
    %508 = vst [vmem:[#allocation3 + $0x22] sm:$0x1] %v477
    %509 = vst [vmem:[#allocation3 + $0x2a] sm:$0x1] %v491
    %510 = vst [vmem:[#allocation3 + $0x32] sm:$0x1] %v493
    %511 = vst [vmem:[#allocation3 + $0x3a] sm:$0x1] %v495
    %512 = vmatprep.subr.mxu0 0.0
    %513 = vmatpush1.msra.mxu0 %v76
    %514 = vmatprep.subr.mxu0 0.0
    %515 = vmatpush1.msra.mxu0 %v77
    %516 = vmatprep.subr.mxu0 0.0
    %517 = vmatpush1.msra.mxu0 %v78
    %518 = vmatprep.subr.mxu0 0.0
    %519 = vmatpush1.msra.mxu0 %v79
    %520 = vmatprep.subr.mxu0 0.0
    %521 = vmatpush1.msra.mxu0 %v80
    %522 = vmatprep.subr.mxu0 0.0
    %523 = vmatpush1.msra.mxu0 %v81
    %524 = vmatprep.subr.mxu0 0.0
    %525 = vmatpush1.msra.mxu0 %v82
    %526 = vmatprep.subr.mxu0 0.0
    %527 = vmatpush1.msra.mxu0 %v83
    %528 = vmatprep.subr.mxu0 0.0
    %529 = vmatpush1.msra.mxu0 %v84
    %530 = vmatprep.subr.mxu0 0.0
    %531 = vmatpush1.msra.mxu0 %v85
    %532 = vmatprep.subr.mxu0 0.0
    %533 = vmatpush1.msra.mxu0 %v86
    %534 = vmatprep.subr.mxu0 0.0
    %535 = vmatpush1.msra.mxu0 %v87
    %536 = vmatprep.subr.mxu0 0.0
    %537 = vmatpush1.msra.mxu0 %v88
    %538 = vmatprep.subr.mxu0 0.0
    %539 = vmatpush1.msra.mxu0 %v89
    %540 = vmatprep.subr.mxu0 0.0
    %541 = vmatpush1.msra.mxu0 %v90
    %542 = vmatprep.subr.mxu0 0.0
    %543 = vmatpush1.msra.mxu0 %v91
    %544 = vmatprep.subr.mxu0 0.0
    %545 = vmatpush1.msra.mxu0 0.0
    %546 = vmatprep.subr.mxu0 0.0
    %547 = vmatpush1.msra.mxu0 0.0
    %548 = vmatprep.subr.mxu0 0.0
    %549 = vmatpush1.msra.mxu0 0.0
    %550 = vmatprep.subr.mxu0 0.0
    %551 = vmatpush1.msra.mxu0 0.0
    %552 = vmatprep.subr.mxu0 0.0
    %553 = vmatpush1.msra.mxu0 0.0
    %554 = vmatprep.subr.mxu0 0.0
    %555 = vmatpush1.msra.mxu0 0.0
    %556 = vmatprep.subr.mxu0 0.0
    %557 = vmatpush1.msra.mxu0 0.0
    %558 = vmatprep.subr.mxu0 0.0
    %559 = vmatpush1.msra.mxu0 0.0
    %560 = vmatprep.subr.mxu0 0.0
    %561 = vmatpush1.msra.mxu0 0.0
    %562 = vmatprep.subr.mxu0 0.0
    %563 = vmatpush1.msra.mxu0 0.0
    %564 = vmatprep.subr.mxu0 0.0
    %565 = vmatpush1.msra.mxu0 0.0
    %566 = vmatprep.subr.mxu0 0.0
    %567 = vmatpush1.msra.mxu0 0.0
    %568 = vmatprep.subr.mxu0 0.0
    %569 = vmatpush1.msra.mxu0 0.0
    %570 = vmatprep.subr.mxu0 0.0
    %571 = vmatpush1.msra.mxu0 0.0
    %572 = vmatprep.subr.mxu0 0.0
    %573 = vmatpush1.msra.mxu0 0.0
    %574 = vmatprep.subr.mxu0 0.0
    %575 = vmatpush1.msra.mxu0 0.0
    %576 = vmatprep.mubr.f32.mxu0 0.0
    %577 = vmatmul.mubr.f32.gmra.mrb[0].mxu0 %v445
    %v578 = vpop.f32.mrb[0].mxu0
    %v579 = vadd.f32 0.0, %v578
    %v580 = vpop.f32.mrb[0].mxu0
    %581 = vdwg.mxu0
    %s582 = scalar_lea.vmem [#allocation4], 24
    %v583 = vld [vmem:[%s582] sm:$0xff]
    %v584 = vadd.f32 %v583, %v579
    %v585 = vtanh.pop %v584
    %v587 = vcombine.high %v585, %v585
    %v589 = vunpack.c.l.s4 1966171168
    %v590 = vunpack.c.0.s8 %v589
    %v591 = vlaneseq
    %v592 = vshrl.u32 %v591, 7
    %v593 = vsub.s32 %v590, %v592
    %v594 = vrot.slane %v585, %v593
    %v596 = vunpack.c.l.s4 1966171168
    %v597 = vunpack.c.0.s8 %v596
    %v598 = vlaneseq
    %v599 = vshrl.u32 %v598, 7
    %v600 = vsub.s32 %v597, %v599
    %v601 = vrot.slane %v587, %v600
    %v602 = vcombine.high %v594, %v594
    %v603 = vcombine.high %v601, %v601
    %v605 = vunpack.c.l.s4 1966171168
    %v606 = vunpack.c.0.s8 %v605
    %v607 = vlaneseq
    %v608 = vshrl.u32 %v607, 7
    %v609 = vsub.s32 %v606, %v608
    %v610 = vrot.slane %v594, %v609
    %v612 = vunpack.c.l.s4 1966171168
    %v613 = vunpack.c.0.s8 %v612
    %v614 = vlaneseq
    %v615 = vshrl.u32 %v614, 7
    %v616 = vsub.s32 %v613, %v615
    %v617 = vrot.slane %v601, %v616
    %v619 = vunpack.c.l.s4 1966171168
    %v620 = vunpack.c.0.s8 %v619
    %v621 = vlaneseq
    %v622 = vshrl.u32 %v621, 7
    %v623 = vsub.s32 %v620, %v622
    %v624 = vrot.slane %v602, %v623
    %v626 = vunpack.c.l.s4 1966171168
    %v627 = vunpack.c.0.s8 %v626
    %v628 = vlaneseq
    %v629 = vshrl.u32 %v628, 7
    %v630 = vsub.s32 %v627, %v629
    %v631 = vrot.slane %v603, %v630
    %v632 = vcombine.high %v610, %v610
    %v633 = vcombine.high %v617, %v617
    %v634 = vcombine.high %v624, %v624
    %v635 = vcombine.high %v631, %v631
    %644 = vst [vmem:[#allocation3 + $0x3] sm:$0x1] %v610
    %645 = vst [vmem:[#allocation3 + $0xb] sm:$0x1] %v624
    %646 = vst [vmem:[#allocation3 + $0x13] sm:$0x1] %v632
    %647 = vst [vmem:[#allocation3 + $0x1b] sm:$0x1] %v634
    %648 = vst [vmem:[#allocation3 + $0x23] sm:$0x1] %v617
    %649 = vst [vmem:[#allocation3 + $0x2b] sm:$0x1] %v631
    %650 = vst [vmem:[#allocation3 + $0x33] sm:$0x1] %v633
    %651 = vst [vmem:[#allocation3 + $0x3b] sm:$0x1] %v635
    %652 = vmatprep.subr.mxu0 0.0
    %653 = vmatpush1.msra.mxu0 %v76
    %654 = vmatprep.subr.mxu0 0.0
    %655 = vmatpush1.msra.mxu0 %v77
    %656 = vmatprep.subr.mxu0 0.0
    %657 = vmatpush1.msra.mxu0 %v78
    %658 = vmatprep.subr.mxu0 0.0
    %659 = vmatpush1.msra.mxu0 %v79
    %660 = vmatprep.subr.mxu0 0.0
    %661 = vmatpush1.msra.mxu0 %v80
    %662 = vmatprep.subr.mxu0 0.0
    %663 = vmatpush1.msra.mxu0 %v81
    %664 = vmatprep.subr.mxu0 0.0
    %665 = vmatpush1.msra.mxu0 %v82
    %666 = vmatprep.subr.mxu0 0.0
    %667 = vmatpush1.msra.mxu0 %v83
    %668 = vmatprep.subr.mxu0 0.0
    %669 = vmatpush1.msra.mxu0 %v84
    %670 = vmatprep.subr.mxu0 0.0
    %671 = vmatpush1.msra.mxu0 %v85
    %672 = vmatprep.subr.mxu0 0.0
    %673 = vmatpush1.msra.mxu0 %v86
    %674 = vmatprep.subr.mxu0 0.0
    %675 = vmatpush1.msra.mxu0 %v87
    %676 = vmatprep.subr.mxu0 0.0
    %677 = vmatpush1.msra.mxu0 %v88
    %678 = vmatprep.subr.mxu0 0.0
    %679 = vmatpush1.msra.mxu0 %v89
    %680 = vmatprep.subr.mxu0 0.0
    %681 = vmatpush1.msra.mxu0 %v90
    %682 = vmatprep.subr.mxu0 0.0
    %683 = vmatpush1.msra.mxu0 %v91
    %684 = vmatprep.subr.mxu0 0.0
    %685 = vmatpush1.msra.mxu0 0.0
    %686 = vmatprep.subr.mxu0 0.0
    %687 = vmatpush1.msra.mxu0 0.0
    %688 = vmatprep.subr.mxu0 0.0
    %689 = vmatpush1.msra.mxu0 0.0
    %690 = vmatprep.subr.mxu0 0.0
    %691 = vmatpush1.msra.mxu0 0.0
    %692 = vmatprep.subr.mxu0 0.0
    %693 = vmatpush1.msra.mxu0 0.0
    %694 = vmatprep.subr.mxu0 0.0
    %695 = vmatpush1.msra.mxu0 0.0
    %696 = vmatprep.subr.mxu0 0.0
    %697 = vmatpush1.msra.mxu0 0.0
    %698 = vmatprep.subr.mxu0 0.0
    %699 = vmatpush1.msra.mxu0 0.0
    %700 = vmatprep.subr.mxu0 0.0
    %701 = vmatpush1.msra.mxu0 0.0
    %702 = vmatprep.subr.mxu0 0.0
    %703 = vmatpush1.msra.mxu0 0.0
    %704 = vmatprep.subr.mxu0 0.0
    %705 = vmatpush1.msra.mxu0 0.0
    %706 = vmatprep.subr.mxu0 0.0
    %707 = vmatpush1.msra.mxu0 0.0
    %708 = vmatprep.subr.mxu0 0.0
    %709 = vmatpush1.msra.mxu0 0.0
    %710 = vmatprep.subr.mxu0 0.0
    %711 = vmatpush1.msra.mxu0 0.0
    %712 = vmatprep.subr.mxu0 0.0
    %713 = vmatpush1.msra.mxu0 0.0
    %714 = vmatprep.subr.mxu0 0.0
    %715 = vmatpush1.msra.mxu0 0.0
    %716 = vmatprep.mubr.f32.mxu0 0.0
    %717 = vmatmul.mubr.f32.gmra.mrb[0].mxu0 %v585
    %v718 = vpop.f32.mrb[0].mxu0
    %v719 = vadd.f32 0.0, %v718
    %v720 = vpop.f32.mrb[0].mxu0
    %721 = vdwg.mxu0
    %s722 = scalar_lea.vmem [#allocation4], 32
    %v723 = vld [vmem:[%s722] sm:$0xff]
    %v724 = vadd.f32 %v723, %v719
    %v725 = vtanh.pop %v724
    %v727 = vcombine.high %v725, %v725
    %v729 = vunpack.c.l.s4 1966171168
    %v730 = vunpack.c.0.s8 %v729
    %v731 = vlaneseq
    %v732 = vshrl.u32 %v731, 7
    %v733 = vsub.s32 %v730, %v732
    %v734 = vrot.slane %v725, %v733
    %v736 = vunpack.c.l.s4 1966171168
    %v737 = vunpack.c.0.s8 %v736
    %v738 = vlaneseq
    %v739 = vshrl.u32 %v738, 7
    %v740 = vsub.s32 %v737, %v739
    %v741 = vrot.slane %v727, %v740
    %v742 = vcombine.high %v734, %v734
    %v743 = vcombine.high %v741, %v741
    %v745 = vunpack.c.l.s4 1966171168
    %v746 = vunpack.c.0.s8 %v745
    %v747 = vlaneseq
    %v748 = vshrl.u32 %v747, 7
    %v749 = vsub.s32 %v746, %v748
    %v750 = vrot.slane %v734, %v749
    %v752 = vunpack.c.l.s4 1966171168
    %v753 = vunpack.c.0.s8 %v752
    %v754 = vlaneseq
    %v755 = vshrl.u32 %v754, 7
    %v756 = vsub.s32 %v753, %v755
    %v757 = vrot.slane %v741, %v756
    %v759 = vunpack.c.l.s4 1966171168
    %v760 = vunpack.c.0.s8 %v759
    %v761 = vlaneseq
    %v762 = vshrl.u32 %v761, 7
    %v763 = vsub.s32 %v760, %v762
    %v764 = vrot.slane %v742, %v763
    %v766 = vunpack.c.l.s4 1966171168
    %v767 = vunpack.c.0.s8 %v766
    %v768 = vlaneseq
    %v769 = vshrl.u32 %v768, 7
    %v770 = vsub.s32 %v767, %v769
    %v771 = vrot.slane %v743, %v770
    %v772 = vcombine.high %v750, %v750
    %v773 = vcombine.high %v757, %v757
    %v774 = vcombine.high %v764, %v764
    %v775 = vcombine.high %v771, %v771
    %784 = vst [vmem:[#allocation3 + $0x4] sm:$0x1] %v750
    %785 = vst [vmem:[#allocation3 + $0xc] sm:$0x1] %v764
    %786 = vst [vmem:[#allocation3 + $0x14] sm:$0x1] %v772
    %787 = vst [vmem:[#allocation3 + $0x1c] sm:$0x1] %v774
    %788 = vst [vmem:[#allocation3 + $0x24] sm:$0x1] %v757
    %789 = vst [vmem:[#allocation3 + $0x2c] sm:$0x1] %v771
    %790 = vst [vmem:[#allocation3 + $0x34] sm:$0x1] %v773
    %791 = vst [vmem:[#allocation3 + $0x3c] sm:$0x1] %v775
    %792 = vmatprep.subr.mxu0 0.0
    %793 = vmatpush1.msra.mxu0 %v76
    %794 = vmatprep.subr.mxu0 0.0
    %795 = vmatpush1.msra.mxu0 %v77
    %796 = vmatprep.subr.mxu0 0.0
    %797 = vmatpush1.msra.mxu0 %v78
    %798 = vmatprep.subr.mxu0 0.0
    %799 = vmatpush1.msra.mxu0 %v79
    %800 = vmatprep.subr.mxu0 0.0
    %801 = vmatpush1.msra.mxu0 %v80
    %802 = vmatprep.subr.mxu0 0.0
    %803 = vmatpush1.msra.mxu0 %v81
    %804 = vmatprep.subr.mxu0 0.0
    %805 = vmatpush1.msra.mxu0 %v82
    %806 = vmatprep.subr.mxu0 0.0
    %807 = vmatpush1.msra.mxu0 %v83
    %808 = vmatprep.subr.mxu0 0.0
    %809 = vmatpush1.msra.mxu0 %v84
    %810 = vmatprep.subr.mxu0 0.0
    %811 = vmatpush1.msra.mxu0 %v85
    %812 = vmatprep.subr.mxu0 0.0
    %813 = vmatpush1.msra.mxu0 %v86
    %814 = vmatprep.subr.mxu0 0.0
    %815 = vmatpush1.msra.mxu0 %v87
    %816 = vmatprep.subr.mxu0 0.0
    %817 = vmatpush1.msra.mxu0 %v88
    %818 = vmatprep.subr.mxu0 0.0
    %819 = vmatpush1.msra.mxu0 %v89
    %820 = vmatprep.subr.mxu0 0.0
    %821 = vmatpush1.msra.mxu0 %v90
    %822 = vmatprep.subr.mxu0 0.0
    %823 = vmatpush1.msra.mxu0 %v91
    %824 = vmatprep.subr.mxu0 0.0
    %825 = vmatpush1.msra.mxu0 0.0
    %826 = vmatprep.subr.mxu0 0.0
    %827 = vmatpush1.msra.mxu0 0.0
    %828 = vmatprep.subr.mxu0 0.0
    %829 = vmatpush1.msra.mxu0 0.0
    %830 = vmatprep.subr.mxu0 0.0
    %831 = vmatpush1.msra.mxu0 0.0
    %832 = vmatprep.subr.mxu0 0.0
    %833 = vmatpush1.msra.mxu0 0.0
    %834 = vmatprep.subr.mxu0 0.0
    %835 = vmatpush1.msra.mxu0 0.0
    %836 = vmatprep.subr.mxu0 0.0
    %837 = vmatpush1.msra.mxu0 0.0
    %838 = vmatprep.subr.mxu0 0.0
    %839 = vmatpush1.msra.mxu0 0.0
    %840 = vmatprep.subr.mxu0 0.0
    %841 = vmatpush1.msra.mxu0 0.0
    %842 = vmatprep.subr.mxu0 0.0
    %843 = vmatpush1.msra.mxu0 0.0
    %844 = vmatprep.subr.mxu0 0.0
    %845 = vmatpush1.msra.mxu0 0.0
    %846 = vmatprep.subr.mxu0 0.0
    %847 = vmatpush1.msra.mxu0 0.0
    %848 = vmatprep.subr.mxu0 0.0
    %849 = vmatpush1.msra.mxu0 0.0
    %850 = vmatprep.subr.mxu0 0.0
    %851 = vmatpush1.msra.mxu0 0.0
    %852 = vmatprep.subr.mxu0 0.0
    %853 = vmatpush1.msra.mxu0 0.0
    %854 = vmatprep.subr.mxu0 0.0
    %855 = vmatpush1.msra.mxu0 0.0
    %856 = vmatprep.mubr.f32.mxu0 0.0
    %857 = vmatmul.mubr.f32.gmra.mrb[0].mxu0 %v725
    %v858 = vpop.f32.mrb[0].mxu0
    %v859 = vadd.f32 0.0, %v858
    %v860 = vpop.f32.mrb[0].mxu0
    %861 = vdwg.mxu0
    %s862 = scalar_lea.vmem [#allocation4], 40
    %v863 = vld [vmem:[%s862] sm:$0xff]
    %v864 = vadd.f32 %v863, %v859
    %v865 = vtanh.pop %v864
    %v867 = vcombine.high %v865, %v865
    %v869 = vunpack.c.l.s4 1966171168
    %v870 = vunpack.c.0.s8 %v869
    %v871 = vlaneseq
    %v872 = vshrl.u32 %v871, 7
    %v873 = vsub.s32 %v870, %v872
    %v874 = vrot.slane %v865, %v873
    %v876 = vunpack.c.l.s4 1966171168
    %v877 = vunpack.c.0.s8 %v876
    %v878 = vlaneseq
    %v879 = vshrl.u32 %v878, 7
    %v880 = vsub.s32 %v877, %v879
    %v881 = vrot.slane %v867, %v880
    %v882 = vcombine.high %v874, %v874
    %v883 = vcombine.high %v881, %v881
    %v885 = vunpack.c.l.s4 1966171168
    %v886 = vunpack.c.0.s8 %v885
    %v887 = vlaneseq
    %v888 = vshrl.u32 %v887, 7
    %v889 = vsub.s32 %v886, %v888
    %v890 = vrot.slane %v874, %v889
    %v892 = vunpack.c.l.s4 1966171168
    %v893 = vunpack.c.0.s8 %v892
    %v894 = vlaneseq
    %v895 = vshrl.u32 %v894, 7
    %v896 = vsub.s32 %v893, %v895
    %v897 = vrot.slane %v881, %v896
    %v899 = vunpack.c.l.s4 1966171168
    %v900 = vunpack.c.0.s8 %v899
    %v901 = vlaneseq
    %v902 = vshrl.u32 %v901, 7
    %v903 = vsub.s32 %v900, %v902
    %v904 = vrot.slane %v882, %v903
    %v906 = vunpack.c.l.s4 1966171168
    %v907 = vunpack.c.0.s8 %v906
    %v908 = vlaneseq
    %v909 = vshrl.u32 %v908, 7
    %v910 = vsub.s32 %v907, %v909
    %v911 = vrot.slane %v883, %v910
    %v912 = vcombine.high %v890, %v890
    %v913 = vcombine.high %v897, %v897
    %v914 = vcombine.high %v904, %v904
    %v915 = vcombine.high %v911, %v911
    %924 = vst [vmem:[#allocation3 + $0x5] sm:$0x1] %v890
    %925 = vst [vmem:[#allocation3 + $0xd] sm:$0x1] %v904
    %926 = vst [vmem:[#allocation3 + $0x15] sm:$0x1] %v912
    %927 = vst [vmem:[#allocation3 + $0x1d] sm:$0x1] %v914
    %928 = vst [vmem:[#allocation3 + $0x25] sm:$0x1] %v897
    %929 = vst [vmem:[#allocation3 + $0x2d] sm:$0x1] %v911
    %930 = vst [vmem:[#allocation3 + $0x35] sm:$0x1] %v913
    %931 = vst [vmem:[#allocation3 + $0x3d] sm:$0x1] %v915
    %932 = vmatprep.subr.mxu0 0.0
    %933 = vmatpush1.msra.mxu0 %v76
    %934 = vmatprep.subr.mxu0 0.0
    %935 = vmatpush1.msra.mxu0 %v77
    %936 = vmatprep.subr.mxu0 0.0
    %937 = vmatpush1.msra.mxu0 %v78
    %938 = vmatprep.subr.mxu0 0.0
    %939 = vmatpush1.msra.mxu0 %v79
    %940 = vmatprep.subr.mxu0 0.0
    %941 = vmatpush1.msra.mxu0 %v80
    %942 = vmatprep.subr.mxu0 0.0
    %943 = vmatpush1.msra.mxu0 %v81
    %944 = vmatprep.subr.mxu0 0.0
    %945 = vmatpush1.msra.mxu0 %v82
    %946 = vmatprep.subr.mxu0 0.0
    %947 = vmatpush1.msra.mxu0 %v83
    %948 = vmatprep.subr.mxu0 0.0
    %949 = vmatpush1.msra.mxu0 %v84
    %950 = vmatprep.subr.mxu0 0.0
    %951 = vmatpush1.msra.mxu0 %v85
    %952 = vmatprep.subr.mxu0 0.0
    %953 = vmatpush1.msra.mxu0 %v86
    %954 = vmatprep.subr.mxu0 0.0
    %955 = vmatpush1.msra.mxu0 %v87
    %956 = vmatprep.subr.mxu0 0.0
    %957 = vmatpush1.msra.mxu0 %v88
    %958 = vmatprep.subr.mxu0 0.0
    %959 = vmatpush1.msra.mxu0 %v89
    %960 = vmatprep.subr.mxu0 0.0
    %961 = vmatpush1.msra.mxu0 %v90
    %962 = vmatprep.subr.mxu0 0.0
    %963 = vmatpush1.msra.mxu0 %v91
    %964 = vmatprep.subr.mxu0 0.0
    %965 = vmatpush1.msra.mxu0 0.0
    %966 = vmatprep.subr.mxu0 0.0
    %967 = vmatpush1.msra.mxu0 0.0
    %968 = vmatprep.subr.mxu0 0.0
    %969 = vmatpush1.msra.mxu0 0.0
    %970 = vmatprep.subr.mxu0 0.0
    %971 = vmatpush1.msra.mxu0 0.0
    %972 = vmatprep.subr.mxu0 0.0
    %973 = vmatpush1.msra.mxu0 0.0
    %974 = vmatprep.subr.mxu0 0.0
    %975 = vmatpush1.msra.mxu0 0.0
    %976 = vmatprep.subr.mxu0 0.0
    %977 = vmatpush1.msra.mxu0 0.0
    %978 = vmatprep.subr.mxu0 0.0
    %979 = vmatpush1.msra.mxu0 0.0
    %980 = vmatprep.subr.mxu0 0.0
    %981 = vmatpush1.msra.mxu0 0.0
    %982 = vmatprep.subr.mxu0 0.0
    %983 = vmatpush1.msra.mxu0 0.0
    %984 = vmatprep.subr.mxu0 0.0
    %985 = vmatpush1.msra.mxu0 0.0
    %986 = vmatprep.subr.mxu0 0.0
    %987 = vmatpush1.msra.mxu0 0.0
    %988 = vmatprep.subr.mxu0 0.0
    %989 = vmatpush1.msra.mxu0 0.0
    %990 = vmatprep.subr.mxu0 0.0
    %991 = vmatpush1.msra.mxu0 0.0
    %992 = vmatprep.subr.mxu0 0.0
    %993 = vmatpush1.msra.mxu0 0.0
    %994 = vmatprep.subr.mxu0 0.0
    %995 = vmatpush1.msra.mxu0 0.0
    %996 = vmatprep.mubr.f32.mxu0 0.0
    %997 = vmatmul.mubr.f32.gmra.mrb[0].mxu0 %v865
    %v998 = vpop.f32.mrb[0].mxu0
    %v999 = vadd.f32 0.0, %v998
    %v1000 = vpop.f32.mrb[0].mxu0
    %1001 = vdwg.mxu0
    %s1002 = scalar_lea.vmem [#allocation4], 48
    %v1003 = vld [vmem:[%s1002] sm:$0xff]
    %v1004 = vadd.f32 %v1003, %v999
    %v1005 = vtanh.pop %v1004
    %v1007 = vcombine.high %v1005, %v1005
    %v1009 = vunpack.c.l.s4 1966171168
    %v1010 = vunpack.c.0.s8 %v1009
    %v1011 = vlaneseq
    %v1012 = vshrl.u32 %v1011, 7
    %v1013 = vsub.s32 %v1010, %v1012
    %v1014 = vrot.slane %v1005, %v1013
    %v1016 = vunpack.c.l.s4 1966171168
    %v1017 = vunpack.c.0.s8 %v1016
    %v1018 = vlaneseq
    %v1019 = vshrl.u32 %v1018, 7
    %v1020 = vsub.s32 %v1017, %v1019
    %v1021 = vrot.slane %v1007, %v1020
    %v1022 = vcombine.high %v1014, %v1014
    %v1023 = vcombine.high %v1021, %v1021
    %v1025 = vunpack.c.l.s4 1966171168
    %v1026 = vunpack.c.0.s8 %v1025
    %v1027 = vlaneseq
    %v1028 = vshrl.u32 %v1027, 7
    %v1029 = vsub.s32 %v1026, %v1028
    %v1030 = vrot.slane %v1014, %v1029
    %v1032 = vunpack.c.l.s4 1966171168
    %v1033 = vunpack.c.0.s8 %v1032
    %v1034 = vlaneseq
    %v1035 = vshrl.u32 %v1034, 7
    %v1036 = vsub.s32 %v1033, %v1035
    %v1037 = vrot.slane %v1021, %v1036
    %v1039 = vunpack.c.l.s4 1966171168
    %v1040 = vunpack.c.0.s8 %v1039
    %v1041 = vlaneseq
    %v1042 = vshrl.u32 %v1041, 7
    %v1043 = vsub.s32 %v1040, %v1042
    %v1044 = vrot.slane %v1022, %v1043
    %v1046 = vunpack.c.l.s4 1966171168
    %v1047 = vunpack.c.0.s8 %v1046
    %v1048 = vlaneseq
    %v1049 = vshrl.u32 %v1048, 7
    %v1050 = vsub.s32 %v1047, %v1049
    %v1051 = vrot.slane %v1023, %v1050
    %v1052 = vcombine.high %v1030, %v1030
    %v1053 = vcombine.high %v1037, %v1037
    %v1054 = vcombine.high %v1044, %v1044
    %v1055 = vcombine.high %v1051, %v1051
    %1064 = vst [vmem:[#allocation3 + $0x6] sm:$0x1] %v1030
    %1065 = vst [vmem:[#allocation3 + $0xe] sm:$0x1] %v1044
    %1066 = vst [vmem:[#allocation3 + $0x16] sm:$0x1] %v1052
    %1067 = vst [vmem:[#allocation3 + $0x1e] sm:$0x1] %v1054
    %1068 = vst [vmem:[#allocation3 + $0x26] sm:$0x1] %v1037
    %1069 = vst [vmem:[#allocation3 + $0x2e] sm:$0x1] %v1051
    %1070 = vst [vmem:[#allocation3 + $0x36] sm:$0x1] %v1053
    %1071 = vst [vmem:[#allocation3 + $0x3e] sm:$0x1] %v1055
    %1072 = vmatprep.subr.mxu0 0.0
    %1073 = vmatpush1.msra.mxu0 %v76
    %1074 = vmatprep.subr.mxu0 0.0
    %1075 = vmatpush1.msra.mxu0 %v77
    %1076 = vmatprep.subr.mxu0 0.0
    %1077 = vmatpush1.msra.mxu0 %v78
    %1078 = vmatprep.subr.mxu0 0.0
    %1079 = vmatpush1.msra.mxu0 %v79
    %1080 = vmatprep.subr.mxu0 0.0
    %1081 = vmatpush1.msra.mxu0 %v80
    %1082 = vmatprep.subr.mxu0 0.0
    %1083 = vmatpush1.msra.mxu0 %v81
    %1084 = vmatprep.subr.mxu0 0.0
    %1085 = vmatpush1.msra.mxu0 %v82
    %1086 = vmatprep.subr.mxu0 0.0
    %1087 = vmatpush1.msra.mxu0 %v83
    %1088 = vmatprep.subr.mxu0 0.0
    %1089 = vmatpush1.msra.mxu0 %v84
    %1090 = vmatprep.subr.mxu0 0.0
    %1091 = vmatpush1.msra.mxu0 %v85
    %1092 = vmatprep.subr.mxu0 0.0
    %1093 = vmatpush1.msra.mxu0 %v86
    %1094 = vmatprep.subr.mxu0 0.0
    %1095 = vmatpush1.msra.mxu0 %v87
    %1096 = vmatprep.subr.mxu0 0.0
    %1097 = vmatpush1.msra.mxu0 %v88
    %1098 = vmatprep.subr.mxu0 0.0
    %1099 = vmatpush1.msra.mxu0 %v89
    %1100 = vmatprep.subr.mxu0 0.0
    %1101 = vmatpush1.msra.mxu0 %v90
    %1102 = vmatprep.subr.mxu0 0.0
    %1103 = vmatpush1.msra.mxu0 %v91
    %1104 = vmatprep.subr.mxu0 0.0
    %1105 = vmatpush1.msra.mxu0 0.0
    %1106 = vmatprep.subr.mxu0 0.0
    %1107 = vmatpush1.msra.mxu0 0.0
    %1108 = vmatprep.subr.mxu0 0.0
    %1109 = vmatpush1.msra.mxu0 0.0
    %1110 = vmatprep.subr.mxu0 0.0
    %1111 = vmatpush1.msra.mxu0 0.0
    %1112 = vmatprep.subr.mxu0 0.0
    %1113 = vmatpush1.msra.mxu0 0.0
    %1114 = vmatprep.subr.mxu0 0.0
    %1115 = vmatpush1.msra.mxu0 0.0
    %1116 = vmatprep.subr.mxu0 0.0
    %1117 = vmatpush1.msra.mxu0 0.0
    %1118 = vmatprep.subr.mxu0 0.0
    %1119 = vmatpush1.msra.mxu0 0.0
    %1120 = vmatprep.subr.mxu0 0.0
    %1121 = vmatpush1.msra.mxu0 0.0
    %1122 = vmatprep.subr.mxu0 0.0
    %1123 = vmatpush1.msra.mxu0 0.0
    %1124 = vmatprep.subr.mxu0 0.0
    %1125 = vmatpush1.msra.mxu0 0.0
    %1126 = vmatprep.subr.mxu0 0.0
    %1127 = vmatpush1.msra.mxu0 0.0
    %1128 = vmatprep.subr.mxu0 0.0
    %1129 = vmatpush1.msra.mxu0 0.0
    %1130 = vmatprep.subr.mxu0 0.0
    %1131 = vmatpush1.msra.mxu0 0.0
    %1132 = vmatprep.subr.mxu0 0.0
    %1133 = vmatpush1.msra.mxu0 0.0
    %1134 = vmatprep.subr.mxu0 0.0
    %1135 = vmatpush1.msra.mxu0 0.0
    %1136 = vmatprep.mubr.f32.mxu0 0.0
    %1137 = vmatmul.mubr.f32.gmra.mrb[0].mxu0 %v1005
    %v1138 = vpop.f32.mrb[0].mxu0
    %v1139 = vadd.f32 0.0, %v1138
    %v1140 = vpop.f32.mrb[0].mxu0
    %1141 = vdwg.mxu0
    %s1142 = scalar_lea.vmem [#allocation4], 56
    %v1143 = vld [vmem:[%s1142] sm:$0xff]
    %v1144 = vadd.f32 %v1143, %v1139
    %v1145 = vtanh.pop %v1144
    %v1147 = vcombine.high %v1145, %v1145
    %v1149 = vunpack.c.l.s4 1966171168
    %v1150 = vunpack.c.0.s8 %v1149
    %v1151 = vlaneseq
    %v1152 = vshrl.u32 %v1151, 7
    %v1153 = vsub.s32 %v1150, %v1152
    %v1154 = vrot.slane %v1145, %v1153
    %v1156 = vunpack.c.l.s4 1966171168
    %v1157 = vunpack.c.0.s8 %v1156
    %v1158 = vlaneseq
    %v1159 = vshrl.u32 %v1158, 7
    %v1160 = vsub.s32 %v1157, %v1159
    %v1161 = vrot.slane %v1147, %v1160
    %v1162 = vcombine.high %v1154, %v1154
    %v1163 = vcombine.high %v1161, %v1161
    %v1165 = vunpack.c.l.s4 1966171168
    %v1166 = vunpack.c.0.s8 %v1165
    %v1167 = vlaneseq
    %v1168 = vshrl.u32 %v1167, 7
    %v1169 = vsub.s32 %v1166, %v1168
    %v1170 = vrot.slane %v1154, %v1169
    %v1172 = vunpack.c.l.s4 1966171168
    %v1173 = vunpack.c.0.s8 %v1172
    %v1174 = vlaneseq
    %v1175 = vshrl.u32 %v1174, 7
    %v1176 = vsub.s32 %v1173, %v1175
    %v1177 = vrot.slane %v1161, %v1176
    %v1179 = vunpack.c.l.s4 1966171168
    %v1180 = vunpack.c.0.s8 %v1179
    %v1181 = vlaneseq
    %v1182 = vshrl.u32 %v1181, 7
    %v1183 = vsub.s32 %v1180, %v1182
    %v1184 = vrot.slane %v1162, %v1183
    %v1186 = vunpack.c.l.s4 1966171168
    %v1187 = vunpack.c.0.s8 %v1186
    %v1188 = vlaneseq
    %v1189 = vshrl.u32 %v1188, 7
    %v1190 = vsub.s32 %v1187, %v1189
    %v1191 = vrot.slane %v1163, %v1190
    %v1192 = vcombine.high %v1170, %v1170
    %v1193 = vcombine.high %v1177, %v1177
    %v1194 = vcombine.high %v1184, %v1184
    %v1195 = vcombine.high %v1191, %v1191
    %1204 = vst [vmem:[#allocation3 + $0x7] sm:$0x1] %v1170
    %1205 = vst [vmem:[#allocation3 + $0xf] sm:$0x1] %v1184
    %1206 = vst [vmem:[#allocation3 + $0x17] sm:$0x1] %v1192
    %1207 = vst [vmem:[#allocation3 + $0x1f] sm:$0x1] %v1194
    %1208 = vst [vmem:[#allocation3 + $0x27] sm:$0x1] %v1177
    %1209 = vst [vmem:[#allocation3 + $0x2f] sm:$0x1] %v1191
    %1210 = vst [vmem:[#allocation3 + $0x37] sm:$0x1] %v1193
    %1211 = vst [vmem:[#allocation3 + $0x3f] sm:$0x1] %v1195
    %1212 = vst [vmem:[#allocation2] sm:$0xff] %v1145
    %v1213 = vld [vmem:[#allocation9] sm:$0xff]
    %v1214 = vld [vmem:[#allocation9 + $0x8] sm:$0xff]
    %v1215 = vld [vmem:[#allocation9 + $0x10] sm:$0xff]
    %v1216 = vld [vmem:[#allocation9 + $0x18] sm:$0xff]
    %v1217 = vld [vmem:[#allocation9 + $0x20] sm:$0xff]
    %v1218 = vld [vmem:[#allocation9 + $0x28] sm:$0xff]
    %v1219 = vld [vmem:[#allocation9 + $0x30] sm:$0xff]
    %v1220 = vld [vmem:[#allocation9 + $0x38] sm:$0xff]
    %v1221 = vld [vmem:[#allocation9 + $0x40] sm:$0xff]
    %v1222 = vld [vmem:[#allocation9 + $0x48] sm:$0xff]
    %v1223 = vld [vmem:[#allocation9 + $0x50] sm:$0xff]
    %v1224 = vld [vmem:[#allocation9 + $0x58] sm:$0xff]
    %v1225 = vld [vmem:[#allocation9 + $0x60] sm:$0xff]
    %v1226 = vld [vmem:[#allocation9 + $0x68] sm:$0xff]
    %v1227 = vld [vmem:[#allocation9 + $0x70] sm:$0xff]
    %v1228 = vld [vmem:[#allocation9 + $0x78] sm:$0xff]
    %v1229 = vld [vmem:[#allocation3] sm:$0xff]
    %v1230 = vld [vmem:[#allocation3 + $0x8] sm:$0xff]
    %v1231 = vld [vmem:[#allocation3 + $0x10] sm:$0xff]
    %v1232 = vld [vmem:[#allocation3 + $0x18] sm:$0xff]
    %v1233 = vld [vmem:[#allocation3 + $0x20] sm:$0xff]
    %v1234 = vld [vmem:[#allocation3 + $0x28] sm:$0xff]
    %v1235 = vld [vmem:[#allocation3 + $0x30] sm:$0xff]
    %v1236 = vld [vmem:[#allocation3 + $0x38] sm:$0xff]
    %1237 = vmatprep.subr.mxu0 0.0
    %1238 = vmatpush1.msra.mxu0 %v1213
    %1239 = vmatprep.subr.mxu0 0.0
    %1240 = vmatpush1.msra.mxu0 %v1214
    %1241 = vmatprep.subr.mxu0 0.0
    %1242 = vmatpush1.msra.mxu0 %v1215
    %1243 = vmatprep.subr.mxu0 0.0
    %1244 = vmatpush1.msra.mxu0 %v1216
    %1245 = vmatprep.subr.mxu0 0.0
    %1246 = vmatpush1.msra.mxu0 %v1217
    %1247 = vmatprep.subr.mxu0 0.0
    %1248 = vmatpush1.msra.mxu0 %v1218
    %1249 = vmatprep.subr.mxu0 0.0
    %1250 = vmatpush1.msra.mxu0 %v1219
    %1251 = vmatprep.subr.mxu0 0.0
    %1252 = vmatpush1.msra.mxu0 %v1220
    %1253 = vmatprep.subr.mxu0 0.0
    %1254 = vmatpush1.msra.mxu0 %v1221
    %1255 = vmatprep.subr.mxu0 0.0
    %1256 = vmatpush1.msra.mxu0 %v1222
    %1257 = vmatprep.subr.mxu0 0.0
    %1258 = vmatpush1.msra.mxu0 %v1223
    %1259 = vmatprep.subr.mxu0 0.0
    %1260 = vmatpush1.msra.mxu0 %v1224
    %1261 = vmatprep.subr.mxu0 0.0
    %1262 = vmatpush1.msra.mxu0 %v1225
    %1263 = vmatprep.subr.mxu0 0.0
    %1264 = vmatpush1.msra.mxu0 %v1226
    %1265 = vmatprep.subr.mxu0 0.0
    %1266 = vmatpush1.msra.mxu0 %v1227
    %1267 = vmatprep.subr.mxu0 0.0
    %1268 = vmatpush1.msra.mxu0 %v1228
    %1269 = vmatprep.subr.mxu0 0.0
    %1270 = vmatpush1.msra.mxu0 0.0
    %1271 = vmatprep.subr.mxu0 0.0
    %1272 = vmatpush1.msra.mxu0 0.0
    %1273 = vmatprep.subr.mxu0 0.0
    %1274 = vmatpush1.msra.mxu0 0.0
    %1275 = vmatprep.subr.mxu0 0.0
    %1276 = vmatpush1.msra.mxu0 0.0
    %1277 = vmatprep.subr.mxu0 0.0
    %1278 = vmatpush1.msra.mxu0 0.0
    %1279 = vmatprep.subr.mxu0 0.0
    %1280 = vmatpush1.msra.mxu0 0.0
    %1281 = vmatprep.subr.mxu0 0.0
    %1282 = vmatpush1.msra.mxu0 0.0
    %1283 = vmatprep.subr.mxu0 0.0
    %1284 = vmatpush1.msra.mxu0 0.0
    %1285 = vmatprep.subr.mxu0 0.0
    %1286 = vmatpush1.msra.mxu0 0.0
    %1287 = vmatprep.subr.mxu0 0.0
    %1288 = vmatpush1.msra.mxu0 0.0
    %1289 = vmatprep.subr.mxu0 0.0
    %1290 = vmatpush1.msra.mxu0 0.0
    %1291 = vmatprep.subr.mxu0 0.0
    %1292 = vmatpush1.msra.mxu0 0.0
    %1293 = vmatprep.subr.mxu0 0.0
    %1294 = vmatpush1.msra.mxu0 0.0
    %1295 = vmatprep.subr.mxu0 0.0
    %1296 = vmatpush1.msra.mxu0 0.0
    %1297 = vmatprep.subr.mxu0 0.0
    %1298 = vmatpush1.msra.mxu0 0.0
    %1299 = vmatprep.subr.mxu0 0.0
    %1300 = vmatpush1.msra.mxu0 0.0
    %1301 = vmatprep.mubr.f32.mxu0 0.0
    %1302 = vmatmul.mubr.f32.gmra.mrb[0].mxu0 %v1229
    %v1303 = vpop.f32.mrb[0].mxu0
    %v1304 = vadd.f32 0.0, %v1303
    %v1305 = vpop.f32.mrb[0].mxu0
    %1306 = vmatprep.mubr.f32.mxu0 0.0
    %1307 = vmatmul.mubr.f32.gmra.mrb[0].mxu0 %v1230
    %v1308 = vpop.f32.mrb[0].mxu0
    %v1309 = vadd.f32 0.0, %v1308
    %v1310 = vpop.f32.mrb[0].mxu0
    %1311 = vmatprep.mubr.f32.mxu0 0.0
    %1312 = vmatmul.mubr.f32.gmra.mrb[0].mxu0 %v1231
    %v1313 = vpop.f32.mrb[0].mxu0
    %v1314 = vadd.f32 0.0, %v1313
    %v1315 = vpop.f32.mrb[0].mxu0
    %1316 = vmatprep.mubr.f32.mxu0 0.0
    %1317 = vmatmul.mubr.f32.gmra.mrb[0].mxu0 %v1232
    %v1318 = vpop.f32.mrb[0].mxu0
    %v1319 = vadd.f32 0.0, %v1318
    %v1320 = vpop.f32.mrb[0].mxu0
    %1321 = vmatprep.mubr.f32.mxu0 0.0
    %1322 = vmatmul.mubr.f32.gmra.mrb[0].mxu0 %v1233
    %v1323 = vpop.f32.mrb[0].mxu0
    %v1324 = vadd.f32 0.0, %v1323
    %v1325 = vpop.f32.mrb[0].mxu0
    %1326 = vmatprep.mubr.f32.mxu0 0.0
    %1327 = vmatmul.mubr.f32.gmra.mrb[0].mxu0 %v1234
    %v1328 = vpop.f32.mrb[0].mxu0
    %v1329 = vadd.f32 0.0, %v1328
    %v1330 = vpop.f32.mrb[0].mxu0
    %1331 = vmatprep.mubr.f32.mxu0 0.0
    %1332 = vmatmul.mubr.f32.gmra.mrb[0].mxu0 %v1235
    %v1333 = vpop.f32.mrb[0].mxu0
    %v1334 = vadd.f32 0.0, %v1333
    %v1335 = vpop.f32.mrb[0].mxu0
    %1336 = vmatprep.mubr.f32.mxu0 0.0
    %1337 = vmatmul.mubr.f32.gmra.mrb[0].mxu0 %v1236
    %v1338 = vpop.f32.mrb[0].mxu0
    %v1339 = vadd.f32 0.0, %v1338
    %v1340 = vpop.f32.mrb[0].mxu0
    %1341 = vdwg.mxu0
    %v1342 = vld [vmem:[#allocation10] sm:$0x1]
    %v1344 = vlaneseq
    %v1345 = vshrl.u32 %v1344, 7
    %v1346 = vsub.s32 0, %v1345
    %v1347 = vrot.slane %v1342, %v1346
    %v1349 = vadd.f32 %v1304, %v1347
    %v1350 = vadd.f32 %v1309, %v1347
    %v1351 = vadd.f32 %v1314, %v1347
    %v1352 = vadd.f32 %v1319, %v1347
    %v1353 = vadd.f32 %v1324, %v1347
    %v1354 = vadd.f32 %v1329, %v1347
    %v1355 = vadd.f32 %v1334, %v1347
    %v1356 = vadd.f32 %v1339, %v1347
    %1357 = vst [vmem:[#allocation12] sm:$0xff] %v1349
    %1358 = vst [vmem:[#allocation12 + $0x8] sm:$0xff] %v1350
    %1359 = vst [vmem:[#allocation12 + $0x10] sm:$0xff] %v1351
    %1360 = vst [vmem:[#allocation12 + $0x18] sm:$0xff] %v1352
    %1361 = vst [vmem:[#allocation12 + $0x20] sm:$0xff] %v1353
    %1362 = vst [vmem:[#allocation12 + $0x28] sm:$0xff] %v1354
    %1363 = vst [vmem:[#allocation12 + $0x30] sm:$0xff] %v1355
    %1364 = vst [vmem:[#allocation12 + $0x38] sm:$0xff] %v1356
    // Predicated region
    $region38: #{rnn_forward.3} parent=1 // pred_check
      _
    $region39: #{rnn_forward.3} parent=1 // pred_check_branch
      %1366 = sbr.rel (0) target = $region41
    $region40: #{rnn_forward.3} parent=1 // pred_region
      %s1368 = ssub.s32 1024, 1024
      %1369 = vsyncadd [#allocation6], %s1368
      %s1370 = sshll.u32 [#allocation12], 4
      %s1371 = int_to_ptr.vmem [resolvable:$true] %s1370
      %1376 = dma.vmem_to_hbm [thread:$0]  %s1371, 1024, %s4, [#allocation6], 128, 128, 8
    $region41: #{rnn_forward.3} parent=1 // pred_fallthru
      _
    // Predicated region
    $region42: #{rnn_forward.3} parent=1 // pred_check
      _
    $region43: #{rnn_forward.3} parent=1 // pred_check_branch
      %1378 = sbr.rel (0) target = $region45
    $region44: #{rnn_forward.3} parent=1 // pred_region
      %1379 = dma.done [#allocation6], 1024
    $region45: #{rnn_forward.3} parent=1 // pred_fallthru
      _
    %1380 = vsyncpa [#allocation5], 1
    %1381 = vsyncpa [#allocation8], 1
    %1382 = vsyncpa [#allocation11], 1
    %1383 = vsyncpa [#allocation6], 1

// kernel: rnn_forward.2
$region0: #{rnn_forward.2}
  #allocation0 [shape = 'u32[]', space=smem, size = 0x4, offset = 0x4, fixed_abs, tag = 'smem constant byte address 0x4 - core index']
  #allocation1 [shape = 'u32[144,128]{1,0:T(1,128)}', space=vmem, size = 0x12000, scoped, tag = 'internal scratch']
  #allocation2 [shape = 'f32[64,128]{1,0:T(8,128)}', space=vmem, size = 0x8000, scoped, tag = 'scratch operand']
  %s0 = inlined_call_operand.hbm [shape: f32[64,32], index: 0, kind: input, shape index: {}]
  %s1 = inlined_call_operand.hbm [shape: f32[32,128], index: 1, kind: input, shape index: {}]
  %s2 = inlined_call_operand.hbm [shape: f32[1,128], index: 2, kind: input, shape index: {}]
  %s3 = inlined_call_operand.hbm [shape: f32[64,128], index: 3, kind: output, shape index: {}]
  %s4 = sld [smem:[#allocation0]]
  $region42: #{rnn_forward.2} parent=0
    _
  %s6 = ssub.s32 1, %s4
  %s7 = scalar_select 0, %s6, %s4
  $region1: #{rnn_forward.2} parent=0
    #allocation3 [shape = 'u8[32768]{0}', space=vmem, size = 0x8000, scoped, tag = 'input window, operand 0, single buffered']
    #allocation4 [shape = 's32[1]{0}', space=sflag, size = 0x4, scoped, tag = 'scoped memory for rnn_forward.2']
    #allocation5 [shape = 's32[1]{0}', space=sflag, size = 0x4, scoped, tag = 'scoped memory for rnn_forward.2']
    #allocation6 [shape = 'u8[16384]{0}', space=vmem, size = 0x4000, scoped, tag = 'input window, operand 1, single buffered']
    #allocation7 [shape = 's32[1]{0}', space=sflag, size = 0x4, scoped, tag = 'scoped memory for rnn_forward.2']
    #allocation8 [shape = 'u8[512]{0}', space=vmem, size = 0x400, scoped, tag = 'input window, operand 2, single buffered']
    #allocation9 [shape = 'u8[32768]{0}', space=vmem, size = 0x8000, scoped, tag = 'output window, operand 0, single buffered']
    %8 = vsyncpa [#allocation4], 0
    %9 = vsyncpa [#allocation7], 0
    %10 = vsyncpa [#allocation5], 0
    // Predicated region
    $region2: #{rnn_forward.2} parent=1 // pred_check
      _
    $region3: #{rnn_forward.2} parent=1 // pred_check_branch
      %12 = sbr.rel (0) target = $region5
    $region4: #{rnn_forward.2} parent=1 // pred_region
      %s14 = ssub.s32 1024, 1024
      %15 = vsyncadd [#allocation4], %s14
      %s16 = sshll.u32 [#allocation3], 4
      %s17 = int_to_ptr.vmem [resolvable:$true] %s16
      %22 = dma.hbm_to_vmem [thread:$0]  %s0, 1024, %s17, [#allocation4], 128, 128, 8
    $region5: #{rnn_forward.2} parent=1 // pred_fallthru
      _
    // Predicated region
    $region6: #{rnn_forward.2} parent=1 // pred_check
      _
    $region7: #{rnn_forward.2} parent=1 // pred_check_branch
      %24 = sbr.rel (0) target = $region9
    $region8: #{rnn_forward.2} parent=1 // pred_region
      %s26 = ssub.s32 512, 512
      %27 = vsyncadd [#allocation7], %s26
      %s28 = sshll.u32 [#allocation6], 4
      %s29 = int_to_ptr.vmem [resolvable:$true] %s28
      %34 = dma.hbm_to_vmem [thread:$0]  %s1, 512, %s29, [#allocation7], 128, 128, 8
    $region9: #{rnn_forward.2} parent=1 // pred_fallthru
      _
    // Predicated region
    $region10: #{rnn_forward.2} parent=1 // pred_check
      _
    $region11: #{rnn_forward.2} parent=1 // pred_check_branch
      %36 = sbr.rel (0) target = $region13
    $region12: #{rnn_forward.2} parent=1 // pred_region
      %s38 = ssub.s32 16, 16
      %39 = vsyncadd [#allocation7], %s38
      %s41 = sshll.u32 [#allocation8], 4
      %s42 = int_to_ptr.vmem [resolvable:$true] %s41
      %44 = dma.hbm_to_vmem [thread:$0]  %s2, 16, %s42, [#allocation7]
    $region13: #{rnn_forward.2} parent=1 // pred_fallthru
      _
    // Predicated region
    $region14: #{rnn_forward.2} parent=1 // pred_check
      _
    $region15: #{rnn_forward.2} parent=1 // pred_check_branch
      %46 = sbr.rel (0) target = $region17
    $region16: #{rnn_forward.2} parent=1 // pred_region
      %47 = dma.done [#allocation4], 1024
    $region17: #{rnn_forward.2} parent=1 // pred_fallthru
      _
    // Predicated region
    $region18: #{rnn_forward.2} parent=1 // pred_check
      _
    $region19: #{rnn_forward.2} parent=1 // pred_check_branch
      %49 = sbr.rel (0) target = $region21
    $region20: #{rnn_forward.2} parent=1 // pred_region
      %50 = dma.done [#allocation7], 512
    $region21: #{rnn_forward.2} parent=1 // pred_fallthru
      _
    // Predicated region
    $region22: #{rnn_forward.2} parent=1 // pred_check
      _
    $region23: #{rnn_forward.2} parent=1 // pred_check_branch
      %52 = sbr.rel (0) target = $region25
    $region24: #{rnn_forward.2} parent=1 // pred_region
      %53 = dma.done [#allocation7], 16
    $region25: #{rnn_forward.2} parent=1 // pred_fallthru
      _
    %p54 = scmp.eq.s32.totalorder 0, 0
    // Predicated region
    $region26: #{rnn_forward.2} parent=1 // pred_check
      %p55 = pneg %p54
    $region27: #{rnn_forward.2} parent=1 // pred_check_branch
      %57 = sbr.rel (%p55) target = $region29
    $region28: #{rnn_forward.2} parent=1 // pred_region
      %58 = vst [vmem:[#allocation2] sm:$0xff] 0.0
      %59 = vst [vmem:[#allocation2 + $0x8] sm:$0xff] 0.0
      %60 = vst [vmem:[#allocation2 + $0x10] sm:$0xff] 0.0
      %61 = vst [vmem:[#allocation2 + $0x18] sm:$0xff] 0.0
      %62 = vst [vmem:[#allocation2 + $0x20] sm:$0xff] 0.0
      %63 = vst [vmem:[#allocation2 + $0x28] sm:$0xff] 0.0
      %64 = vst [vmem:[#allocation2 + $0x30] sm:$0xff] 0.0
      %65 = vst [vmem:[#allocation2 + $0x38] sm:$0xff] 0.0
    $region29: #{rnn_forward.2} parent=1 // pred_fallthru
      _
    %v66 = vld [vmem:[#allocation2] sm:$0xff]
    %v67 = vld [vmem:[#allocation2 + $0x8] sm:$0xff]
    %v68 = vld [vmem:[#allocation2 + $0x10] sm:$0xff]
    %v69 = vld [vmem:[#allocation2 + $0x18] sm:$0xff]
    %v70 = vld [vmem:[#allocation2 + $0x20] sm:$0xff]
    %v71 = vld [vmem:[#allocation2 + $0x28] sm:$0xff]
    %v72 = vld [vmem:[#allocation2 + $0x30] sm:$0xff]
    %v73 = vld [vmem:[#allocation2 + $0x38] sm:$0xff]
    %v74 = vld [vmem:[#allocation3] sm:$0xff]
    %v75 = vld [vmem:[#allocation3 + $0x8] sm:$0xff]
    %v76 = vld [vmem:[#allocation3 + $0x10] sm:$0xff]
    %v77 = vld [vmem:[#allocation3 + $0x18] sm:$0xff]
    %v78 = vld [vmem:[#allocation3 + $0x20] sm:$0xff]
    %v79 = vld [vmem:[#allocation3 + $0x28] sm:$0xff]
    %v80 = vld [vmem:[#allocation3 + $0x30] sm:$0xff]
    %v81 = vld [vmem:[#allocation3 + $0x38] sm:$0xff]
    %v82 = vld [vmem:[#allocation6] sm:$0xff]
    %v83 = vld [vmem:[#allocation6 + $0x8] sm:$0xff]
    %v84 = vld [vmem:[#allocation6 + $0x10] sm:$0xff]
    %v85 = vld [vmem:[#allocation6 + $0x18] sm:$0xff]
    %vm86 = vcmask 261120
    %v88 = vsel %vm86, %v74, 0
    %v91 = vsel %vm86, %v75, 0
    %v94 = vsel %vm86, %v76, 0
    %v97 = vsel %vm86, %v77, 0
    %v100 = vsel %vm86, %v78, 0
    %v103 = vsel %vm86, %v79, 0
    %v106 = vsel %vm86, %v80, 0
    %v109 = vsel %vm86, %v81, 0
    %111 = vmatprep.subr.mxu0 0.0
    %112 = vmatpush1.msra.mxu0 %v82
    %113 = vmatprep.subr.mxu0 0.0
    %114 = vmatpush1.msra.mxu0 %v83
    %115 = vmatprep.subr.mxu0 0.0
    %116 = vmatpush1.msra.mxu0 %v84
    %117 = vmatprep.subr.mxu0 0.0
    %118 = vmatpush1.msra.mxu0 %v85
    %119 = vmatprep.subr.mxu0 0.0
    %120 = vmatpush1.msra.mxu0 0.0
    %121 = vmatprep.subr.mxu0 0.0
    %122 = vmatpush1.msra.mxu0 0.0
    %123 = vmatprep.subr.mxu0 0.0
    %124 = vmatpush1.msra.mxu0 0.0
    %125 = vmatprep.subr.mxu0 0.0
    %126 = vmatpush1.msra.mxu0 0.0
    %127 = vmatprep.subr.mxu0 0.0
    %128 = vmatpush1.msra.mxu0 0.0
    %129 = vmatprep.subr.mxu0 0.0
    %130 = vmatpush1.msra.mxu0 0.0
    %131 = vmatprep.subr.mxu0 0.0
    %132 = vmatpush1.msra.mxu0 0.0
    %133 = vmatprep.subr.mxu0 0.0
    %134 = vmatpush1.msra.mxu0 0.0
    %135 = vmatprep.subr.mxu0 0.0
    %136 = vmatpush1.msra.mxu0 0.0
    %137 = vmatprep.subr.mxu0 0.0
    %138 = vmatpush1.msra.mxu0 0.0
    %139 = vmatprep.subr.mxu0 0.0
    %140 = vmatpush1.msra.mxu0 0.0
    %141 = vmatprep.subr.mxu0 0.0
    %142 = vmatpush1.msra.mxu0 0.0
    %143 = vmatprep.subr.mxu0 0.0
    %144 = vmatpush1.msra.mxu0 0.0
    %145 = vmatprep.subr.mxu0 0.0
    %146 = vmatpush1.msra.mxu0 0.0
    %147 = vmatprep.subr.mxu0 0.0
    %148 = vmatpush1.msra.mxu0 0.0
    %149 = vmatprep.subr.mxu0 0.0
    %150 = vmatpush1.msra.mxu0 0.0
    %151 = vmatprep.subr.mxu0 0.0
    %152 = vmatpush1.msra.mxu0 0.0
    %153 = vmatprep.subr.mxu0 0.0
    %154 = vmatpush1.msra.mxu0 0.0
    %155 = vmatprep.subr.mxu0 0.0
    %156 = vmatpush1.msra.mxu0 0.0
    %157 = vmatprep.subr.mxu0 0.0
    %158 = vmatpush1.msra.mxu0 0.0
    %159 = vmatprep.subr.mxu0 0.0
    %160 = vmatpush1.msra.mxu0 0.0
    %161 = vmatprep.subr.mxu0 0.0
    %162 = vmatpush1.msra.mxu0 0.0
    %163 = vmatprep.subr.mxu0 0.0
    %164 = vmatpush1.msra.mxu0 0.0
    %165 = vmatprep.subr.mxu0 0.0
    %166 = vmatpush1.msra.mxu0 0.0
    %167 = vmatprep.subr.mxu0 0.0
    %168 = vmatpush1.msra.mxu0 0.0
    %169 = vmatprep.subr.mxu0 0.0
    %170 = vmatpush1.msra.mxu0 0.0
    %171 = vmatprep.subr.mxu0 0.0
    %172 = vmatpush1.msra.mxu0 0.0
    %173 = vmatprep.subr.mxu0 0.0
    %174 = vmatpush1.msra.mxu0 0.0
    %175 = vmatprep.mubr.f32.mxu0 0.0
    %176 = vmatmul.mubr.f32.gmra.mrb[0].mxu0 %v88
    %v177 = vpop.f32.mrb[0].mxu0
    %v178 = vadd.f32 0.0, %v177
    %v179 = vpop.f32.mrb[0].mxu0
    %180 = vmatprep.mubr.f32.mxu0 0.0
    %181 = vmatmul.mubr.f32.gmra.mrb[0].mxu0 %v91
    %v182 = vpop.f32.mrb[0].mxu0
    %v183 = vadd.f32 0.0, %v182
    %v184 = vpop.f32.mrb[0].mxu0
    %185 = vmatprep.mubr.f32.mxu0 0.0
    %186 = vmatmul.mubr.f32.gmra.mrb[0].mxu0 %v94
    %v187 = vpop.f32.mrb[0].mxu0
    %v188 = vadd.f32 0.0, %v187
    %v189 = vpop.f32.mrb[0].mxu0
    %190 = vmatprep.mubr.f32.mxu0 0.0
    %191 = vmatmul.mubr.f32.gmra.mrb[0].mxu0 %v97
    %v192 = vpop.f32.mrb[0].mxu0
    %v193 = vadd.f32 0.0, %v192
    %v194 = vpop.f32.mrb[0].mxu0
    %195 = vmatprep.mubr.f32.mxu0 0.0
    %196 = vmatmul.mubr.f32.gmra.mrb[0].mxu0 %v100
    %v197 = vpop.f32.mrb[0].mxu0
    %v198 = vadd.f32 0.0, %v197
    %v199 = vpop.f32.mrb[0].mxu0
    %200 = vmatprep.mubr.f32.mxu0 0.0
    %201 = vmatmul.mubr.f32.gmra.mrb[0].mxu0 %v103
    %v202 = vpop.f32.mrb[0].mxu0
    %v203 = vadd.f32 0.0, %v202
    %v204 = vpop.f32.mrb[0].mxu0
    %205 = vmatprep.mubr.f32.mxu0 0.0
    %206 = vmatmul.mubr.f32.gmra.mrb[0].mxu0 %v106
    %v207 = vpop.f32.mrb[0].mxu0
    %v208 = vadd.f32 0.0, %v207
    %v209 = vpop.f32.mrb[0].mxu0
    %210 = vmatprep.mubr.f32.mxu0 0.0
    %211 = vmatmul.mubr.f32.gmra.mrb[0].mxu0 %v109
    %v212 = vpop.f32.mrb[0].mxu0
    %v213 = vadd.f32 0.0, %v212
    %v214 = vpop.f32.mrb[0].mxu0
    %215 = vdwg.mxu0
    %v216 = vadd.f32 %v66, %v178
    %v217 = vadd.f32 %v67, %v183
    %v218 = vadd.f32 %v68, %v188
    %v219 = vadd.f32 %v69, %v193
    %v220 = vadd.f32 %v70, %v198
    %v221 = vadd.f32 %v71, %v203
    %v222 = vadd.f32 %v72, %v208
    %v223 = vadd.f32 %v73, %v213
    %224 = vst [vmem:[#allocation2] sm:$0xff] %v216
    %225 = vst [vmem:[#allocation2 + $0x8] sm:$0xff] %v217
    %226 = vst [vmem:[#allocation2 + $0x10] sm:$0xff] %v218
    %227 = vst [vmem:[#allocation2 + $0x18] sm:$0xff] %v219
    %228 = vst [vmem:[#allocation2 + $0x20] sm:$0xff] %v220
    %229 = vst [vmem:[#allocation2 + $0x28] sm:$0xff] %v221
    %230 = vst [vmem:[#allocation2 + $0x30] sm:$0xff] %v222
    %231 = vst [vmem:[#allocation2 + $0x38] sm:$0xff] %v223
    // Predicated region
    $region30: #{rnn_forward.2} parent=1 // pred_check
      %p232 = pneg %p54
    $region31: #{rnn_forward.2} parent=1 // pred_check_branch
      %234 = sbr.rel (%p232) target = $region33
    $region32: #{rnn_forward.2} parent=1 // pred_region
      %v235 = vld [vmem:[#allocation2] sm:$0xff]
      %v236 = vld [vmem:[#allocation2 + $0x8] sm:$0xff]
      %v237 = vld [vmem:[#allocation2 + $0x10] sm:$0xff]
      %v238 = vld [vmem:[#allocation2 + $0x18] sm:$0xff]
      %v239 = vld [vmem:[#allocation2 + $0x20] sm:$0xff]
      %v240 = vld [vmem:[#allocation2 + $0x28] sm:$0xff]
      %v241 = vld [vmem:[#allocation2 + $0x30] sm:$0xff]
      %v242 = vld [vmem:[#allocation2 + $0x38] sm:$0xff]
      %v243 = vld [vmem:[#allocation8] sm:$0x1]
      %v245 = vlaneseq
      %v246 = vshrl.u32 %v245, 7
      %v247 = vsub.s32 0, %v246
      %v248 = vrot.slane %v243, %v247
      %v250 = vadd.f32 %v235, %v248
      %v251 = vadd.f32 %v236, %v248
      %v252 = vadd.f32 %v237, %v248
      %v253 = vadd.f32 %v238, %v248
      %v254 = vadd.f32 %v239, %v248
      %v255 = vadd.f32 %v240, %v248
      %v256 = vadd.f32 %v241, %v248
      %v257 = vadd.f32 %v242, %v248
      %258 = vst [vmem:[#allocation9] sm:$0xff] %v250
      %259 = vst [vmem:[#allocation9 + $0x8] sm:$0xff] %v251
      %260 = vst [vmem:[#allocation9 + $0x10] sm:$0xff] %v252
      %261 = vst [vmem:[#allocation9 + $0x18] sm:$0xff] %v253
      %262 = vst [vmem:[#allocation9 + $0x20] sm:$0xff] %v254
      %263 = vst [vmem:[#allocation9 + $0x28] sm:$0xff] %v255
      %264 = vst [vmem:[#allocation9 + $0x30] sm:$0xff] %v256
      %265 = vst [vmem:[#allocation9 + $0x38] sm:$0xff] %v257
    $region33: #{rnn_forward.2} parent=1 // pred_fallthru
      _
    // Predicated region
    $region34: #{rnn_forward.2} parent=1 // pred_check
      _
    $region35: #{rnn_forward.2} parent=1 // pred_check_branch
      %267 = sbr.rel (0) target = $region37
    $region36: #{rnn_forward.2} parent=1 // pred_region
      %s269 = ssub.s32 1024, 1024
      %270 = vsyncadd [#allocation5], %s269
      %s271 = sshll.u32 [#allocation9], 4
      %s272 = int_to_ptr.vmem [resolvable:$true] %s271
      %277 = dma.vmem_to_hbm [thread:$0]  %s272, 1024, %s3, [#allocation5], 128, 128, 8
    $region37: #{rnn_forward.2} parent=1 // pred_fallthru
      _
    // Predicated region
    $region38: #{rnn_forward.2} parent=1 // pred_check
      _
    $region39: #{rnn_forward.2} parent=1 // pred_check_branch
      %279 = sbr.rel (0) target = $region41
    $region40: #{rnn_forward.2} parent=1 // pred_region
      %280 = dma.done [#allocation5], 1024
    $region41: #{rnn_forward.2} parent=1 // pred_fallthru
      _
    %281 = vsyncpa [#allocation4], 1
    %282 = vsyncpa [#allocation7], 1
    %283 = vsyncpa [#allocation5], 1

// kernel: rnn_forward.3
$region0: #{rnn_forward.3}
  #allocation0 [shape = 'u32[]', space=smem, size = 0x4, offset = 0x4, fixed_abs, tag = 'smem constant byte address 0x4 - core index']
  #allocation1 [shape = 'u32[144,128]{1,0:T(1,128)}', space=vmem, size = 0x12000, scoped, tag = 'internal scratch']
  #allocation2 [shape = 'f32[8,128]{1,0:T(8,128)}', space=vmem, size = 0x1000, scoped, tag = 'scratch operand']
  #allocation3 [shape = 'f32[8,8,128]{2,1,0:T(8,128)}', space=vmem, size = 0x8000, scoped, tag = 'scratch operand']
  %s0 = inlined_call_operand.hbm [shape: f32[8,8,128], index: 0, kind: input, shape index: {}]
  %s1 = inlined_call_operand.hbm [shape: f32[128,128], index: 1, kind: input, shape index: {}]
  %s2 = inlined_call_operand.hbm [shape: f32[128,128], index: 2, kind: input, shape index: {}]
  %s3 = inlined_call_operand.hbm [shape: f32[1,128], index: 3, kind: input, shape index: {}]
  %s4 = inlined_call_operand.hbm [shape: f32[8,8,128], index: 4, kind: output, shape index: {}]
  %s5 = sld [smem:[#allocation0]]
  $region46: #{rnn_forward.3} parent=0
    _
  %s7 = ssub.s32 1, %s5
  %s8 = scalar_select 0, %s7, %s5
  $region1: #{rnn_forward.3} parent=0
    #allocation4 [shape = 'u8[32768]{0}', space=vmem, size = 0x8000, scoped, tag = 'input window, operand 0, single buffered']
    #allocation5 [shape = 's32[1]{0}', space=sflag, size = 0x4, scoped, tag = 'scoped memory for rnn_forward.3']
    #allocation6 [shape = 's32[1]{0}', space=sflag, size = 0x4, scoped, tag = 'scoped memory for rnn_forward.3']
    #allocation7 [shape = 'u8[65536]{0}', space=vmem, size = 0x10000, scoped, tag = 'input window, operand 1, single buffered']
    #allocation8 [shape = 's32[1]{0}', space=sflag, size = 0x4, scoped, tag = 'scoped memory for rnn_forward.3']
    #allocation9 [shape = 'u8[65536]{0}', space=vmem, size = 0x10000, scoped, tag = 'input window, operand 2, single buffered']
    #allocation10 [shape = 'u8[512]{0}', space=vmem, size = 0x400, scoped, tag = 'input window, operand 3, single buffered']
    #allocation11 [shape = 's32[1]{0}', space=sflag, size = 0x4, scoped, tag = 'scoped memory for rnn_forward.3']
    #allocation12 [shape = 'u8[32768]{0}', space=vmem, size = 0x8000, scoped, tag = 'output window, operand 0, single buffered']
    %9 = vsyncpa [#allocation5], 0
    %10 = vsyncpa [#allocation8], 0
    %11 = vsyncpa [#allocation11], 0
    %12 = vsyncpa [#allocation6], 0
    // Predicated region
    $region2: #{rnn_forward.3} parent=1 // pred_check
      _
    $region3: #{rnn_forward.3} parent=1 // pred_check_branch
      %14 = sbr.rel (0) target = $region5
    $region4: #{rnn_forward.3} parent=1 // pred_region
      %s16 = ssub.s32 1024, 1024
      %17 = vsyncadd [#allocation5], %s16
      %s18 = sshll.u32 [#allocation4], 4
      %s19 = int_to_ptr.vmem [resolvable:$true] %s18
      %24 = dma.hbm_to_vmem [thread:$0]  %s0, 1024, %s19, [#allocation5], 128, 128, 8
    $region5: #{rnn_forward.3} parent=1 // pred_fallthru
      _
    // Predicated region
    $region6: #{rnn_forward.3} parent=1 // pred_check
      _
    $region7: #{rnn_forward.3} parent=1 // pred_check_branch
      %26 = sbr.rel (0) target = $region9
    $region8: #{rnn_forward.3} parent=1 // pred_region
      %s28 = ssub.s32 2048, 2048
      %29 = vsyncadd [#allocation8], %s28
      %s30 = sshll.u32 [#allocation7], 4
      %s31 = int_to_ptr.vmem [resolvable:$true] %s30
      %36 = dma.hbm_to_vmem [thread:$0]  %s1, 2048, %s31, [#allocation8], 128, 128, 8
    $region9: #{rnn_forward.3} parent=1 // pred_fallthru
      _
    // Predicated region
    $region10: #{rnn_forward.3} parent=1 // pred_check
      _
    $region11: #{rnn_forward.3} parent=1 // pred_check_branch
      %38 = sbr.rel (0) target = $region13
    $region12: #{rnn_forward.3} parent=1 // pred_region
      %s40 = ssub.s32 2048, 2048
      %41 = vsyncadd [#allocation8], %s40
      %s42 = sshll.u32 [#allocation9], 4
      %s43 = int_to_ptr.vmem [resolvable:$true] %s42
      %48 = dma.hbm_to_vmem [thread:$0]  %s2, 2048, %s43, [#allocation8], 128, 128, 8
    $region13: #{rnn_forward.3} parent=1 // pred_fallthru
      _
    // Predicated region
    $region14: #{rnn_forward.3} parent=1 // pred_check
      _
    $region15: #{rnn_forward.3} parent=1 // pred_check_branch
      %50 = sbr.rel (0) target = $region17
    $region16: #{rnn_forward.3} parent=1 // pred_region
      %s52 = ssub.s32 16, 16
      %53 = vsyncadd [#allocation11], %s52
      %s55 = sshll.u32 [#allocation10], 4
      %s56 = int_to_ptr.vmem [resolvable:$true] %s55
      %58 = dma.hbm_to_vmem [thread:$0]  %s3, 16, %s56, [#allocation11]
    $region17: #{rnn_forward.3} parent=1 // pred_fallthru
      _
    // Predicated region
    $region18: #{rnn_forward.3} parent=1 // pred_check
      _
    $region19: #{rnn_forward.3} parent=1 // pred_check_branch
      %60 = sbr.rel (0) target = $region21
    $region20: #{rnn_forward.3} parent=1 // pred_region
      %61 = dma.done [#allocation5], 1024
    $region21: #{rnn_forward.3} parent=1 // pred_fallthru
      _
    // Predicated region
    $region22: #{rnn_forward.3} parent=1 // pred_check
      _
    $region23: #{rnn_forward.3} parent=1 // pred_check_branch
      %63 = sbr.rel (0) target = $region25
    $region24: #{rnn_forward.3} parent=1 // pred_region
      %64 = dma.done [#allocation8], 2048
    $region25: #{rnn_forward.3} parent=1 // pred_fallthru
      _
    // Predicated region
    $region26: #{rnn_forward.3} parent=1 // pred_check
      _
    $region27: #{rnn_forward.3} parent=1 // pred_check_branch
      %66 = sbr.rel (0) target = $region29
    $region28: #{rnn_forward.3} parent=1 // pred_region
      %67 = dma.done [#allocation8], 2048
    $region29: #{rnn_forward.3} parent=1 // pred_fallthru
      _
    // Predicated region
    $region30: #{rnn_forward.3} parent=1 // pred_check
      _
    $region31: #{rnn_forward.3} parent=1 // pred_check_branch
      %69 = sbr.rel (0) target = $region33
    $region32: #{rnn_forward.3} parent=1 // pred_region
      %70 = dma.done [#allocation11], 16
    $region33: #{rnn_forward.3} parent=1 // pred_fallthru
      _
    %p71 = scmp.eq.s32.totalorder 0, 0
    // Predicated region
    $region34: #{rnn_forward.3} parent=1 // pred_check
      %p72 = pneg %p71
    $region35: #{rnn_forward.3} parent=1 // pred_check_branch
      %74 = sbr.rel (%p72) target = $region37
    $region36: #{rnn_forward.3} parent=1 // pred_region
      %75 = vst [vmem:[#allocation2] sm:$0xff] 0.0
    $region37: #{rnn_forward.3} parent=1 // pred_fallthru
      _
    %v76 = vld [vmem:[#allocation7] sm:$0xff]
    %v77 = vld [vmem:[#allocation7 + $0x8] sm:$0xff]
    %v78 = vld [vmem:[#allocation7 + $0x10] sm:$0xff]
    %v79 = vld [vmem:[#allocation7 + $0x18] sm:$0xff]
    %v80 = vld [vmem:[#allocation7 + $0x20] sm:$0xff]
    %v81 = vld [vmem:[#allocation7 + $0x28] sm:$0xff]
    %v82 = vld [vmem:[#allocation7 + $0x30] sm:$0xff]
    %v83 = vld [vmem:[#allocation7 + $0x38] sm:$0xff]
    %v84 = vld [vmem:[#allocation7 + $0x40] sm:$0xff]
    %v85 = vld [vmem:[#allocation7 + $0x48] sm:$0xff]
    %v86 = vld [vmem:[#allocation7 + $0x50] sm:$0xff]
    %v87 = vld [vmem:[#allocation7 + $0x58] sm:$0xff]
    %v88 = vld [vmem:[#allocation7 + $0x60] sm:$0xff]
    %v89 = vld [vmem:[#allocation7 + $0x68] sm:$0xff]
    %v90 = vld [vmem:[#allocation7 + $0x70] sm:$0xff]
    %v91 = vld [vmem:[#allocation7 + $0x78] sm:$0xff]
    %v92 = vld [vmem:[#allocation2] sm:$0xff]
    %93 = vmatprep.subr.mxu0 0.0
    %94 = vmatpush1.msra.mxu0 %v76
    %95 = vmatprep.subr.mxu0 0.0
    %96 = vmatpush1.msra.mxu0 %v77
    %97 = vmatprep.subr.mxu0 0.0
    %98 = vmatpush1.msra.mxu0 %v78
    %99 = vmatprep.subr.mxu0 0.0
    %100 = vmatpush1.msra.mxu0 %v79
    %101 = vmatprep.subr.mxu0 0.0
    %102 = vmatpush1.msra.mxu0 %v80
    %103 = vmatprep.subr.mxu0 0.0
    %104 = vmatpush1.msra.mxu0 %v81
    %105 = vmatprep.subr.mxu0 0.0
    %106 = vmatpush1.msra.mxu0 %v82
    %107 = vmatprep.subr.mxu0 0.0
    %108 = vmatpush1.msra.mxu0 %v83
    %109 = vmatprep.subr.mxu0 0.0
    %110 = vmatpush1.msra.mxu0 %v84
    %111 = vmatprep.subr.mxu0 0.0
    %112 = vmatpush1.msra.mxu0 %v85
    %113 = vmatprep.subr.mxu0 0.0
    %114 = vmatpush1.msra.mxu0 %v86
    %115 = vmatprep.subr.mxu0 0.0
    %116 = vmatpush1.msra.mxu0 %v87
    %117 = vmatprep.subr.mxu0 0.0
    %118 = vmatpush1.msra.mxu0 %v88
    %119 = vmatprep.subr.mxu0 0.0
    %120 = vmatpush1.msra.mxu0 %v89
    %121 = vmatprep.subr.mxu0 0.0
    %122 = vmatpush1.msra.mxu0 %v90
    %123 = vmatprep.subr.mxu0 0.0
    %124 = vmatpush1.msra.mxu0 %v91
    %125 = vmatprep.subr.mxu0 0.0
    %126 = vmatpush1.msra.mxu0 0.0
    %127 = vmatprep.subr.mxu0 0.0
    %128 = vmatpush1.msra.mxu0 0.0
    %129 = vmatprep.subr.mxu0 0.0
    %130 = vmatpush1.msra.mxu0 0.0
    %131 = vmatprep.subr.mxu0 0.0
    %132 = vmatpush1.msra.mxu0 0.0
    %133 = vmatprep.subr.mxu0 0.0
    %134 = vmatpush1.msra.mxu0 0.0
    %135 = vmatprep.subr.mxu0 0.0
    %136 = vmatpush1.msra.mxu0 0.0
    %137 = vmatprep.subr.mxu0 0.0
    %138 = vmatpush1.msra.mxu0 0.0
    %139 = vmatprep.subr.mxu0 0.0
    %140 = vmatpush1.msra.mxu0 0.0
    %141 = vmatprep.subr.mxu0 0.0
    %142 = vmatpush1.msra.mxu0 0.0
    %143 = vmatprep.subr.mxu0 0.0
    %144 = vmatpush1.msra.mxu0 0.0
    %145 = vmatprep.subr.mxu0 0.0
    %146 = vmatpush1.msra.mxu0 0.0
    %147 = vmatprep.subr.mxu0 0.0
    %148 = vmatpush1.msra.mxu0 0.0
    %149 = vmatprep.subr.mxu0 0.0
    %150 = vmatpush1.msra.mxu0 0.0
    %151 = vmatprep.subr.mxu0 0.0
    %152 = vmatpush1.msra.mxu0 0.0
    %153 = vmatprep.subr.mxu0 0.0
    %154 = vmatpush1.msra.mxu0 0.0
    %155 = vmatprep.subr.mxu0 0.0
    %156 = vmatpush1.msra.mxu0 0.0
    %157 = vmatprep.mubr.f32.mxu0 0.0
    %158 = vmatmul.mubr.f32.gmra.mrb[0].mxu0 %v92
    %v159 = vpop.f32.mrb[0].mxu0
    %v160 = vadd.f32 0.0, %v159
    %v161 = vpop.f32.mrb[0].mxu0
    %162 = vdwg.mxu0
    %v163 = vld [vmem:[#allocation4] sm:$0xff]
    %v164 = vadd.f32 %v163, %v160
    %v165 = vtanh.pop %v164
    %v167 = vcombine.high %v165, %v165
    %v169 = vunpack.c.l.s4 1966171168
    %v170 = vunpack.c.0.s8 %v169
    %v171 = vlaneseq
    %v172 = vshrl.u32 %v171, 7
    %v173 = vsub.s32 %v170, %v172
    %v174 = vrot.slane %v165, %v173
    %v176 = vunpack.c.l.s4 1966171168
    %v177 = vunpack.c.0.s8 %v176
    %v178 = vlaneseq
    %v179 = vshrl.u32 %v178, 7
    %v180 = vsub.s32 %v177, %v179
    %v181 = vrot.slane %v167, %v180
    %v182 = vcombine.high %v174, %v174
    %v183 = vcombine.high %v181, %v181
    %v185 = vunpack.c.l.s4 1966171168
    %v186 = vunpack.c.0.s8 %v185
    %v187 = vlaneseq
    %v188 = vshrl.u32 %v187, 7
    %v189 = vsub.s32 %v186, %v188
    %v190 = vrot.slane %v174, %v189
    %v192 = vunpack.c.l.s4 1966171168
    %v193 = vunpack.c.0.s8 %v192
    %v194 = vlaneseq
    %v195 = vshrl.u32 %v194, 7
    %v196 = vsub.s32 %v193, %v195
    %v197 = vrot.slane %v181, %v196
    %v199 = vunpack.c.l.s4 1966171168
    %v200 = vunpack.c.0.s8 %v199
    %v201 = vlaneseq
    %v202 = vshrl.u32 %v201, 7
    %v203 = vsub.s32 %v200, %v202
    %v204 = vrot.slane %v182, %v203
    %v206 = vunpack.c.l.s4 1966171168
    %v207 = vunpack.c.0.s8 %v206
    %v208 = vlaneseq
    %v209 = vshrl.u32 %v208, 7
    %v210 = vsub.s32 %v207, %v209
    %v211 = vrot.slane %v183, %v210
    %v212 = vcombine.high %v190, %v190
    %v213 = vcombine.high %v197, %v197
    %v214 = vcombine.high %v204, %v204
    %v215 = vcombine.high %v211, %v211
    %224 = vst [vmem:[#allocation3] sm:$0x1] %v190
    %225 = vst [vmem:[#allocation3 + $0x8] sm:$0x1] %v204
    %226 = vst [vmem:[#allocation3 + $0x10] sm:$0x1] %v212
    %227 = vst [vmem:[#allocation3 + $0x18] sm:$0x1] %v214
    %228 = vst [vmem:[#allocation3 + $0x20] sm:$0x1] %v197
    %229 = vst [vmem:[#allocation3 + $0x28] sm:$0x1] %v211
    %230 = vst [vmem:[#allocation3 + $0x30] sm:$0x1] %v213
    %231 = vst [vmem:[#allocation3 + $0x38] sm:$0x1] %v215
    %232 = vmatprep.subr.mxu0 0.0
    %233 = vmatpush1.msra.mxu0 %v76
    %234 = vmatprep.subr.mxu0 0.0
    %235 = vmatpush1.msra.mxu0 %v77
    %236 = vmatprep.subr.mxu0 0.0
    %237 = vmatpush1.msra.mxu0 %v78
    %238 = vmatprep.subr.mxu0 0.0
    %239 = vmatpush1.msra.mxu0 %v79
    %240 = vmatprep.subr.mxu0 0.0
    %241 = vmatpush1.msra.mxu0 %v80
    %242 = vmatprep.subr.mxu0 0.0
    %243 = vmatpush1.msra.mxu0 %v81
    %244 = vmatprep.subr.mxu0 0.0
    %245 = vmatpush1.msra.mxu0 %v82
    %246 = vmatprep.subr.mxu0 0.0
    %247 = vmatpush1.msra.mxu0 %v83
    %248 = vmatprep.subr.mxu0 0.0
    %249 = vmatpush1.msra.mxu0 %v84
    %250 = vmatprep.subr.mxu0 0.0
    %251 = vmatpush1.msra.mxu0 %v85
    %252 = vmatprep.subr.mxu0 0.0
    %253 = vmatpush1.msra.mxu0 %v86
    %254 = vmatprep.subr.mxu0 0.0
    %255 = vmatpush1.msra.mxu0 %v87
    %256 = vmatprep.subr.mxu0 0.0
    %257 = vmatpush1.msra.mxu0 %v88
    %258 = vmatprep.subr.mxu0 0.0
    %259 = vmatpush1.msra.mxu0 %v89
    %260 = vmatprep.subr.mxu0 0.0
    %261 = vmatpush1.msra.mxu0 %v90
    %262 = vmatprep.subr.mxu0 0.0
    %263 = vmatpush1.msra.mxu0 %v91
    %264 = vmatprep.subr.mxu0 0.0
    %265 = vmatpush1.msra.mxu0 0.0
    %266 = vmatprep.subr.mxu0 0.0
    %267 = vmatpush1.msra.mxu0 0.0
    %268 = vmatprep.subr.mxu0 0.0
    %269 = vmatpush1.msra.mxu0 0.0
    %270 = vmatprep.subr.mxu0 0.0
    %271 = vmatpush1.msra.mxu0 0.0
    %272 = vmatprep.subr.mxu0 0.0
    %273 = vmatpush1.msra.mxu0 0.0
    %274 = vmatprep.subr.mxu0 0.0
    %275 = vmatpush1.msra.mxu0 0.0
    %276 = vmatprep.subr.mxu0 0.0
    %277 = vmatpush1.msra.mxu0 0.0
    %278 = vmatprep.subr.mxu0 0.0
    %279 = vmatpush1.msra.mxu0 0.0
    %280 = vmatprep.subr.mxu0 0.0
    %281 = vmatpush1.msra.mxu0 0.0
    %282 = vmatprep.subr.mxu0 0.0
    %283 = vmatpush1.msra.mxu0 0.0
    %284 = vmatprep.subr.mxu0 0.0
    %285 = vmatpush1.msra.mxu0 0.0
    %286 = vmatprep.subr.mxu0 0.0
    %287 = vmatpush1.msra.mxu0 0.0
    %288 = vmatprep.subr.mxu0 0.0
    %289 = vmatpush1.msra.mxu0 0.0
    %290 = vmatprep.subr.mxu0 0.0
    %291 = vmatpush1.msra.mxu0 0.0
    %292 = vmatprep.subr.mxu0 0.0
    %293 = vmatpush1.msra.mxu0 0.0
    %294 = vmatprep.subr.mxu0 0.0
    %295 = vmatpush1.msra.mxu0 0.0
    %296 = vmatprep.mubr.f32.mxu0 0.0
    %297 = vmatmul.mubr.f32.gmra.mrb[0].mxu0 %v165
    %v298 = vpop.f32.mrb[0].mxu0
    %v299 = vadd.f32 0.0, %v298
    %v300 = vpop.f32.mrb[0].mxu0
    %301 = vdwg.mxu0
    %s302 = scalar_lea.vmem [#allocation4], 8
    %v303 = vld [vmem:[%s302] sm:$0xff]
    %v304 = vadd.f32 %v303, %v299
    %v305 = vtanh.pop %v304
    %v307 = vcombine.high %v305, %v305
    %v309 = vunpack.c.l.s4 1966171168
    %v310 = vunpack.c.0.s8 %v309
    %v311 = vlaneseq
    %v312 = vshrl.u32 %v311, 7
    %v313 = vsub.s32 %v310, %v312
    %v314 = vrot.slane %v305, %v313
    %v316 = vunpack.c.l.s4 1966171168
    %v317 = vunpack.c.0.s8 %v316
    %v318 = vlaneseq
    %v319 = vshrl.u32 %v318, 7
    %v320 = vsub.s32 %v317, %v319
    %v321 = vrot.slane %v307, %v320
    %v322 = vcombine.high %v314, %v314
    %v323 = vcombine.high %v321, %v321
    %v325 = vunpack.c.l.s4 1966171168
    %v326 = vunpack.c.0.s8 %v325
    %v327 = vlaneseq
    %v328 = vshrl.u32 %v327, 7
    %v329 = vsub.s32 %v326, %v328
    %v330 = vrot.slane %v314, %v329
    %v332 = vunpack.c.l.s4 1966171168
    %v333 = vunpack.c.0.s8 %v332
    %v334 = vlaneseq
    %v335 = vshrl.u32 %v334, 7
    %v336 = vsub.s32 %v333, %v335
    %v337 = vrot.slane %v321, %v336
    %v339 = vunpack.c.l.s4 1966171168
    %v340 = vunpack.c.0.s8 %v339
    %v341 = vlaneseq
    %v342 = vshrl.u32 %v341, 7
    %v343 = vsub.s32 %v340, %v342
    %v344 = vrot.slane %v322, %v343
    %v346 = vunpack.c.l.s4 1966171168
    %v347 = vunpack.c.0.s8 %v346
    %v348 = vlaneseq
    %v349 = vshrl.u32 %v348, 7
    %v350 = vsub.s32 %v347, %v349
    %v351 = vrot.slane %v323, %v350
    %v352 = vcombine.high %v330, %v330
    %v353 = vcombine.high %v337, %v337
    %v354 = vcombine.high %v344, %v344
    %v355 = vcombine.high %v351, %v351
    %364 = vst [vmem:[#allocation3 + $0x1] sm:$0x1] %v330
    %365 = vst [vmem:[#allocation3 + $0x9] sm:$0x1] %v344
    %366 = vst [vmem:[#allocation3 + $0x11] sm:$0x1] %v352
    %367 = vst [vmem:[#allocation3 + $0x19] sm:$0x1] %v354
    %368 = vst [vmem:[#allocation3 + $0x21] sm:$0x1] %v337
    %369 = vst [vmem:[#allocation3 + $0x29] sm:$0x1] %v351
    %370 = vst [vmem:[#allocation3 + $0x31] sm:$0x1] %v353
    %371 = vst [vmem:[#allocation3 + $0x39] sm:$0x1] %v355
    %372 = vmatprep.subr.mxu0 0.0
    %373 = vmatpush1.msra.mxu0 %v76
    %374 = vmatprep.subr.mxu0 0.0
    %375 = vmatpush1.msra.mxu0 %v77
    %376 = vmatprep.subr.mxu0 0.0
    %377 = vmatpush1.msra.mxu0 %v78
    %378 = vmatprep.subr.mxu0 0.0
    %379 = vmatpush1.msra.mxu0 %v79
    %380 = vmatprep.subr.mxu0 0.0
    %381 = vmatpush1.msra.mxu0 %v80
    %382 = vmatprep.subr.mxu0 0.0
    %383 = vmatpush1.msra.mxu0 %v81
    %384 = vmatprep.subr.mxu0 0.0
    %385 = vmatpush1.msra.mxu0 %v82
    %386 = vmatprep.subr.mxu0 0.0
    %387 = vmatpush1.msra.mxu0 %v83
    %388 = vmatprep.subr.mxu0 0.0
    %389 = vmatpush1.msra.mxu0 %v84
    %390 = vmatprep.subr.mxu0 0.0
    %391 = vmatpush1.msra.mxu0 %v85
    %392 = vmatprep.subr.mxu0 0.0
    %393 = vmatpush1.msra.mxu0 %v86
    %394 = vmatprep.subr.mxu0 0.0
    %395 = vmatpush1.msra.mxu0 %v87
    %396 = vmatprep.subr.mxu0 0.0
    %397 = vmatpush1.msra.mxu0 %v88
    %398 = vmatprep.subr.mxu0 0.0
    %399 = vmatpush1.msra.mxu0 %v89
    %400 = vmatprep.subr.mxu0 0.0
    %401 = vmatpush1.msra.mxu0 %v90
    %402 = vmatprep.subr.mxu0 0.0
    %403 = vmatpush1.msra.mxu0 %v91
    %404 = vmatprep.subr.mxu0 0.0
    %405 = vmatpush1.msra.mxu0 0.0
    %406 = vmatprep.subr.mxu0 0.0
    %407 = vmatpush1.msra.mxu0 0.0
    %408 = vmatprep.subr.mxu0 0.0
    %409 = vmatpush1.msra.mxu0 0.0
    %410 = vmatprep.subr.mxu0 0.0
    %411 = vmatpush1.msra.mxu0 0.0
    %412 = vmatprep.subr.mxu0 0.0
    %413 = vmatpush1.msra.mxu0 0.0
    %414 = vmatprep.subr.mxu0 0.0
    %415 = vmatpush1.msra.mxu0 0.0
    %416 = vmatprep.subr.mxu0 0.0
    %417 = vmatpush1.msra.mxu0 0.0
    %418 = vmatprep.subr.mxu0 0.0
    %419 = vmatpush1.msra.mxu0 0.0
    %420 = vmatprep.subr.mxu0 0.0
    %421 = vmatpush1.msra.mxu0 0.0
    %422 = vmatprep.subr.mxu0 0.0
    %423 = vmatpush1.msra.mxu0 0.0
    %424 = vmatprep.subr.mxu0 0.0
    %425 = vmatpush1.msra.mxu0 0.0
    %426 = vmatprep.subr.mxu0 0.0
    %427 = vmatpush1.msra.mxu0 0.0
    %428 = vmatprep.subr.mxu0 0.0
    %429 = vmatpush1.msra.mxu0 0.0
    %430 = vmatprep.subr.mxu0 0.0
    %431 = vmatpush1.msra.mxu0 0.0
    %432 = vmatprep.subr.mxu0 0.0
    %433 = vmatpush1.msra.mxu0 0.0
    %434 = vmatprep.subr.mxu0 0.0
    %435 = vmatpush1.msra.mxu0 0.0
    %436 = vmatprep.mubr.f32.mxu0 0.0
    %437 = vmatmul.mubr.f32.gmra.mrb[0].mxu0 %v305
    %v438 = vpop.f32.mrb[0].mxu0
    %v439 = vadd.f32 0.0, %v438
    %v440 = vpop.f32.mrb[0].mxu0
    %441 = vdwg.mxu0
    %s442 = scalar_lea.vmem [#allocation4], 16
    %v443 = vld [vmem:[%s442] sm:$0xff]
    %v444 = vadd.f32 %v443, %v439
    %v445 = vtanh.pop %v444
    %v447 = vcombine.high %v445, %v445
    %v449 = vunpack.c.l.s4 1966171168
    %v450 = vunpack.c.0.s8 %v449
    %v451 = vlaneseq
    %v452 = vshrl.u32 %v451, 7
    %v453 = vsub.s32 %v450, %v452
    %v454 = vrot.slane %v445, %v453
    %v456 = vunpack.c.l.s4 1966171168
    %v457 = vunpack.c.0.s8 %v456
    %v458 = vlaneseq
    %v459 = vshrl.u32 %v458, 7
    %v460 = vsub.s32 %v457, %v459
    %v461 = vrot.slane %v447, %v460
    %v462 = vcombine.high %v454, %v454
    %v463 = vcombine.high %v461, %v461
    %v465 = vunpack.c.l.s4 1966171168
    %v466 = vunpack.c.0.s8 %v465
    %v467 = vlaneseq
    %v468 = vshrl.u32 %v467, 7
    %v469 = vsub.s32 %v466, %v468
    %v470 = vrot.slane %v454, %v469
    %v472 = vunpack.c.l.s4 1966171168
    %v473 = vunpack.c.0.s8 %v472
    %v474 = vlaneseq
    %v475 = vshrl.u32 %v474, 7
    %v476 = vsub.s32 %v473, %v475
    %v477 = vrot.slane %v461, %v476
    %v479 = vunpack.c.l.s4 1966171168
    %v480 = vunpack.c.0.s8 %v479
    %v481 = vlaneseq
    %v482 = vshrl.u32 %v481, 7
    %v483 = vsub.s32 %v480, %v482
    %v484 = vrot.slane %v462, %v483
    %v486 = vunpack.c.l.s4 1966171168
    %v487 = vunpack.c.0.s8 %v486
    %v488 = vlaneseq
    %v489 = vshrl.u32 %v488, 7
    %v490 = vsub.s32 %v487, %v489
    %v491 = vrot.slane %v463, %v490
    %v492 = vcombine.high %v470, %v470
    %v493 = vcombine.high %v477, %v477
    %v494 = vcombine.high %v484, %v484
    %v495 = vcombine.high %v491, %v491
    %504 = vst [vmem:[#allocation3 + $0x2] sm:$0x1] %v470
    %505 = vst [vmem:[#allocation3 + $0xa] sm:$0x1] %v484
    %506 = vst [vmem:[#allocation3 + $0x12] sm:$0x1] %v492
    %507 = vst [vmem:[#allocation3 + $0x1a] sm:$0x1] %v494
    %508 = vst [vmem:[#allocation3 + $0x22] sm:$0x1] %v477
    %509 = vst [vmem:[#allocation3 + $0x2a] sm:$0x1] %v491
    %510 = vst [vmem:[#allocation3 + $0x32] sm:$0x1] %v493
    %511 = vst [vmem:[#allocation3 + $0x3a] sm:$0x1] %v495
    %512 = vmatprep.subr.mxu0 0.0
    %513 = vmatpush1.msra.mxu0 %v76
    %514 = vmatprep.subr.mxu0 0.0
    %515 = vmatpush1.msra.mxu0 %v77
    %516 = vmatprep.subr.mxu0 0.0
    %517 = vmatpush1.msra.mxu0 %v78
    %518 = vmatprep.subr.mxu0 0.0
    %519 = vmatpush1.msra.mxu0 %v79
    %520 = vmatprep.subr.mxu0 0.0
    %521 = vmatpush1.msra.mxu0 %v80
    %522 = vmatprep.subr.mxu0 0.0
    %523 = vmatpush1.msra.mxu0 %v81
    %524 = vmatprep.subr.mxu0 0.0
    %525 = vmatpush1.msra.mxu0 %v82
    %526 = vmatprep.subr.mxu0 0.0
    %527 = vmatpush1.msra.mxu0 %v83
    %528 = vmatprep.subr.mxu0 0.0
    %529 = vmatpush1.msra.mxu0 %v84
    %530 = vmatprep.subr.mxu0 0.0
    %531 = vmatpush1.msra.mxu0 %v85
    %532 = vmatprep.subr.mxu0 0.0
    %533 = vmatpush1.msra.mxu0 %v86
    %534 = vmatprep.subr.mxu0 0.0
    %535 = vmatpush1.msra.mxu0 %v87
    %536 = vmatprep.subr.mxu0 0.0
    %537 = vmatpush1.msra.mxu0 %v88
    %538 = vmatprep.subr.mxu0 0.0
    %539 = vmatpush1.msra.mxu0 %v89
    %540 = vmatprep.subr.mxu0 0.0
    %541 = vmatpush1.msra.mxu0 %v90
    %542 = vmatprep.subr.mxu0 0.0
    %543 = vmatpush1.msra.mxu0 %v91
    %544 = vmatprep.subr.mxu0 0.0
    %545 = vmatpush1.msra.mxu0 0.0
    %546 = vmatprep.subr.mxu0 0.0
    %547 = vmatpush1.msra.mxu0 0.0
    %548 = vmatprep.subr.mxu0 0.0
    %549 = vmatpush1.msra.mxu0 0.0
    %550 = vmatprep.subr.mxu0 0.0
    %551 = vmatpush1.msra.mxu0 0.0
    %552 = vmatprep.subr.mxu0 0.0
    %553 = vmatpush1.msra.mxu0 0.0
    %554 = vmatprep.subr.mxu0 0.0
    %555 = vmatpush1.msra.mxu0 0.0
    %556 = vmatprep.subr.mxu0 0.0
    %557 = vmatpush1.msra.mxu0 0.0
    %558 = vmatprep.subr.mxu0 0.0
    %559 = vmatpush1.msra.mxu0 0.0
    %560 = vmatprep.subr.mxu0 0.0
    %561 = vmatpush1.msra.mxu0 0.0
    %562 = vmatprep.subr.mxu0 0.0
    %563 = vmatpush1.msra.mxu0 0.0
    %564 = vmatprep.subr.mxu0 0.0
    %565 = vmatpush1.msra.mxu0 0.0
    %566 = vmatprep.subr.mxu0 0.0
    %567 = vmatpush1.msra.mxu0 0.0
    %568 = vmatprep.subr.mxu0 0.0
    %569 = vmatpush1.msra.mxu0 0.0
    %570 = vmatprep.subr.mxu0 0.0
    %571 = vmatpush1.msra.mxu0 0.0
    %572 = vmatprep.subr.mxu0 0.0
    %573 = vmatpush1.msra.mxu0 0.0
    %574 = vmatprep.subr.mxu0 0.0
    %575 = vmatpush1.msra.mxu0 0.0
    %576 = vmatprep.mubr.f32.mxu0 0.0
    %577 = vmatmul.mubr.f32.gmra.mrb[0].mxu0 %v445
    %v578 = vpop.f32.mrb[0].mxu0
    %v579 = vadd.f32 0.0, %v578
    %v580 = vpop.f32.mrb[0].mxu0
    %581 = vdwg.mxu0
    %s582 = scalar_lea.vmem [#allocation4], 24
    %v583 = vld [vmem:[%s582] sm:$0xff]
    %v584 = vadd.f32 %v583, %v579
    %v585 = vtanh.pop %v584
    %v587 = vcombine.high %v585, %v585
    %v589 = vunpack.c.l.s4 1966171168
    %v590 = vunpack.c.0.s8 %v589
    %v591 = vlaneseq
    %v592 = vshrl.u32 %v591, 7
    %v593 = vsub.s32 %v590, %v592
    %v594 = vrot.slane %v585, %v593
    %v596 = vunpack.c.l.s4 1966171168
    %v597 = vunpack.c.0.s8 %v596
    %v598 = vlaneseq
    %v599 = vshrl.u32 %v598, 7
    %v600 = vsub.s32 %v597, %v599
    %v601 = vrot.slane %v587, %v600
    %v602 = vcombine.high %v594, %v594
    %v603 = vcombine.high %v601, %v601
    %v605 = vunpack.c.l.s4 1966171168
    %v606 = vunpack.c.0.s8 %v605
    %v607 = vlaneseq
    %v608 = vshrl.u32 %v607, 7
    %v609 = vsub.s32 %v606, %v608
    %v610 = vrot.slane %v594, %v609
    %v612 = vunpack.c.l.s4 1966171168
    %v613 = vunpack.c.0.s8 %v612
    %v614 = vlaneseq
    %v615 = vshrl.u32 %v614, 7
    %v616 = vsub.s32 %v613, %v615
    %v617 = vrot.slane %v601, %v616
    %v619 = vunpack.c.l.s4 1966171168
    %v620 = vunpack.c.0.s8 %v619
    %v621 = vlaneseq
    %v622 = vshrl.u32 %v621, 7
    %v623 = vsub.s32 %v620, %v622
    %v624 = vrot.slane %v602, %v623
    %v626 = vunpack.c.l.s4 1966171168
    %v627 = vunpack.c.0.s8 %v626
    %v628 = vlaneseq
    %v629 = vshrl.u32 %v628, 7
    %v630 = vsub.s32 %v627, %v629
    %v631 = vrot.slane %v603, %v630
    %v632 = vcombine.high %v610, %v610
    %v633 = vcombine.high %v617, %v617
    %v634 = vcombine.high %v624, %v624
    %v635 = vcombine.high %v631, %v631
    %644 = vst [vmem:[#allocation3 + $0x3] sm:$0x1] %v610
    %645 = vst [vmem:[#allocation3 + $0xb] sm:$0x1] %v624
    %646 = vst [vmem:[#allocation3 + $0x13] sm:$0x1] %v632
    %647 = vst [vmem:[#allocation3 + $0x1b] sm:$0x1] %v634
    %648 = vst [vmem:[#allocation3 + $0x23] sm:$0x1] %v617
    %649 = vst [vmem:[#allocation3 + $0x2b] sm:$0x1] %v631
    %650 = vst [vmem:[#allocation3 + $0x33] sm:$0x1] %v633
    %651 = vst [vmem:[#allocation3 + $0x3b] sm:$0x1] %v635
    %652 = vmatprep.subr.mxu0 0.0
    %653 = vmatpush1.msra.mxu0 %v76
    %654 = vmatprep.subr.mxu0 0.0
    %655 = vmatpush1.msra.mxu0 %v77
    %656 = vmatprep.subr.mxu0 0.0
    %657 = vmatpush1.msra.mxu0 %v78
    %658 = vmatprep.subr.mxu0 0.0
    %659 = vmatpush1.msra.mxu0 %v79
    %660 = vmatprep.subr.mxu0 0.0
    %661 = vmatpush1.msra.mxu0 %v80
    %662 = vmatprep.subr.mxu0 0.0
    %663 = vmatpush1.msra.mxu0 %v81
    %664 = vmatprep.subr.mxu0 0.0
    %665 = vmatpush1.msra.mxu0 %v82
    %666 = vmatprep.subr.mxu0 0.0
    %667 = vmatpush1.msra.mxu0 %v83
    %668 = vmatprep.subr.mxu0 0.0
    %669 = vmatpush1.msra.mxu0 %v84
    %670 = vmatprep.subr.mxu0 0.0
    %671 = vmatpush1.msra.mxu0 %v85
    %672 = vmatprep.subr.mxu0 0.0
    %673 = vmatpush1.msra.mxu0 %v86
    %674 = vmatprep.subr.mxu0 0.0
    %675 = vmatpush1.msra.mxu0 %v87
    %676 = vmatprep.subr.mxu0 0.0
    %677 = vmatpush1.msra.mxu0 %v88
    %678 = vmatprep.subr.mxu0 0.0
    %679 = vmatpush1.msra.mxu0 %v89
    %680 = vmatprep.subr.mxu0 0.0
    %681 = vmatpush1.msra.mxu0 %v90
    %682 = vmatprep.subr.mxu0 0.0
    %683 = vmatpush1.msra.mxu0 %v91
    %684 = vmatprep.subr.mxu0 0.0
    %685 = vmatpush1.msra.mxu0 0.0
    %686 = vmatprep.subr.mxu0 0.0
    %687 = vmatpush1.msra.mxu0 0.0
    %688 = vmatprep.subr.mxu0 0.0
    %689 = vmatpush1.msra.mxu0 0.0
    %690 = vmatprep.subr.mxu0 0.0
    %691 = vmatpush1.msra.mxu0 0.0
    %692 = vmatprep.subr.mxu0 0.0
    %693 = vmatpush1.msra.mxu0 0.0
    %694 = vmatprep.subr.mxu0 0.0
    %695 = vmatpush1.msra.mxu0 0.0
    %696 = vmatprep.subr.mxu0 0.0
    %697 = vmatpush1.msra.mxu0 0.0
    %698 = vmatprep.subr.mxu0 0.0
    %699 = vmatpush1.msra.mxu0 0.0
    %700 = vmatprep.subr.mxu0 0.0
    %701 = vmatpush1.msra.mxu0 0.0
    %702 = vmatprep.subr.mxu0 0.0
    %703 = vmatpush1.msra.mxu0 0.0
    %704 = vmatprep.subr.mxu0 0.0
    %705 = vmatpush1.msra.mxu0 0.0
    %706 = vmatprep.subr.mxu0 0.0
    %707 = vmatpush1.msra.mxu0 0.0
    %708 = vmatprep.subr.mxu0 0.0
    %709 = vmatpush1.msra.mxu0 0.0
    %710 = vmatprep.subr.mxu0 0.0
    %711 = vmatpush1.msra.mxu0 0.0
    %712 = vmatprep.subr.mxu0 0.0
    %713 = vmatpush1.msra.mxu0 0.0
    %714 = vmatprep.subr.mxu0 0.0
    %715 = vmatpush1.msra.mxu0 0.0
    %716 = vmatprep.mubr.f32.mxu0 0.0
    %717 = vmatmul.mubr.f32.gmra.mrb[0].mxu0 %v585
    %v718 = vpop.f32.mrb[0].mxu0
    %v719 = vadd.f32 0.0, %v718
    %v720 = vpop.f32.mrb[0].mxu0
    %721 = vdwg.mxu0
    %s722 = scalar_lea.vmem [#allocation4], 32
    %v723 = vld [vmem:[%s722] sm:$0xff]
    %v724 = vadd.f32 %v723, %v719
    %v725 = vtanh.pop %v724
    %v727 = vcombine.high %v725, %v725
    %v729 = vunpack.c.l.s4 1966171168
    %v730 = vunpack.c.0.s8 %v729
    %v731 = vlaneseq
    %v732 = vshrl.u32 %v731, 7
    %v733 = vsub.s32 %v730, %v732
    %v734 = vrot.slane %v725, %v733
    %v736 = vunpack.c.l.s4 1966171168
    %v737 = vunpack.c.0.s8 %v736
    %v738 = vlaneseq
    %v739 = vshrl.u32 %v738, 7
    %v740 = vsub.s32 %v737, %v739
    %v741 = vrot.slane %v727, %v740
    %v742 = vcombine.high %v734, %v734
    %v743 = vcombine.high %v741, %v741
    %v745 = vunpack.c.l.s4 1966171168
    %v746 = vunpack.c.0.s8 %v745
    %v747 = vlaneseq
    %v748 = vshrl.u32 %v747, 7
    %v749 = vsub.s32 %v746, %v748
    %v750 = vrot.slane %v734, %v749
    %v752 = vunpack.c.l.s4 1966171168
    %v753 = vunpack.c.0.s8 %v752
    %v754 = vlaneseq
    %v755 = vshrl.u32 %v754, 7
    %v756 = vsub.s32 %v753, %v755
    %v757 = vrot.slane %v741, %v756
    %v759 = vunpack.c.l.s4 1966171168
    %v760 = vunpack.c.0.s8 %v759
    %v761 = vlaneseq
    %v762 = vshrl.u32 %v761, 7
    %v763 = vsub.s32 %v760, %v762
    %v764 = vrot.slane %v742, %v763
    %v766 = vunpack.c.l.s4 1966171168
    %v767 = vunpack.c.0.s8 %v766
    %v768 = vlaneseq
    %v769 = vshrl.u32 %v768, 7
    %v770 = vsub.s32 %v767, %v769
    %v771 = vrot.slane %v743, %v770
    %v772 = vcombine.high %v750, %v750
    %v773 = vcombine.high %v757, %v757
    %v774 = vcombine.high %v764, %v764
    %v775 = vcombine.high %v771, %v771
    %784 = vst [vmem:[#allocation3 + $0x4] sm:$0x1] %v750
    %785 = vst [vmem:[#allocation3 + $0xc] sm:$0x1] %v764
    %786 = vst [vmem:[#allocation3 + $0x14] sm:$0x1] %v772
    %787 = vst [vmem:[#allocation3 + $0x1c] sm:$0x1] %v774
    %788 = vst [vmem:[#allocation3 + $0x24] sm:$0x1] %v757
    %789 = vst [vmem:[#allocation3 + $0x2c] sm:$0x1] %v771
    %790 = vst [vmem:[#allocation3 + $0x34] sm:$0x1] %v773
    %791 = vst [vmem:[#allocation3 + $0x3c] sm:$0x1] %v775
    %792 = vmatprep.subr.mxu0 0.0
    %793 = vmatpush1.msra.mxu0 %v76
    %794 = vmatprep.subr.mxu0 0.0
    %795 = vmatpush1.msra.mxu0 %v77
    %796 = vmatprep.subr.mxu0 0.0
    %797 = vmatpush1.msra.mxu0 %v78
    %798 = vmatprep.subr.mxu0 0.0
    %799 = vmatpush1.msra.mxu0 %v79
    %800 = vmatprep.subr.mxu0 0.0
    %801 = vmatpush1.msra.mxu0 %v80
    %802 = vmatprep.subr.mxu0 0.0
    %803 = vmatpush1.msra.mxu0 %v81
    %804 = vmatprep.subr.mxu0 0.0
    %805 = vmatpush1.msra.mxu0 %v82
    %806 = vmatprep.subr.mxu0 0.0
    %807 = vmatpush1.msra.mxu0 %v83
    %808 = vmatprep.subr.mxu0 0.0
    %809 = vmatpush1.msra.mxu0 %v84
    %810 = vmatprep.subr.mxu0 0.0
    %811 = vmatpush1.msra.mxu0 %v85
    %812 = vmatprep.subr.mxu0 0.0
    %813 = vmatpush1.msra.mxu0 %v86
    %814 = vmatprep.subr.mxu0 0.0
    %815 = vmatpush1.msra.mxu0 %v87
    %816 = vmatprep.subr.mxu0 0.0
    %817 = vmatpush1.msra.mxu0 %v88
    %818 = vmatprep.subr.mxu0 0.0
    %819 = vmatpush1.msra.mxu0 %v89
    %820 = vmatprep.subr.mxu0 0.0
    %821 = vmatpush1.msra.mxu0 %v90
    %822 = vmatprep.subr.mxu0 0.0
    %823 = vmatpush1.msra.mxu0 %v91
    %824 = vmatprep.subr.mxu0 0.0
    %825 = vmatpush1.msra.mxu0 0.0
    %826 = vmatprep.subr.mxu0 0.0
    %827 = vmatpush1.msra.mxu0 0.0
    %828 = vmatprep.subr.mxu0 0.0
    %829 = vmatpush1.msra.mxu0 0.0
    %830 = vmatprep.subr.mxu0 0.0
    %831 = vmatpush1.msra.mxu0 0.0
    %832 = vmatprep.subr.mxu0 0.0
    %833 = vmatpush1.msra.mxu0 0.0
    %834 = vmatprep.subr.mxu0 0.0
    %835 = vmatpush1.msra.mxu0 0.0
    %836 = vmatprep.subr.mxu0 0.0
    %837 = vmatpush1.msra.mxu0 0.0
    %838 = vmatprep.subr.mxu0 0.0
    %839 = vmatpush1.msra.mxu0 0.0
    %840 = vmatprep.subr.mxu0 0.0
    %841 = vmatpush1.msra.mxu0 0.0
    %842 = vmatprep.subr.mxu0 0.0
    %843 = vmatpush1.msra.mxu0 0.0
    %844 = vmatprep.subr.mxu0 0.0
    %845 = vmatpush1.msra.mxu0 0.0
    %846 = vmatprep.subr.mxu0 0.0
    %847 = vmatpush1.msra.mxu0 0.0
    %848 = vmatprep.subr.mxu0 0.0
    %849 = vmatpush1.msra.mxu0 0.0
    %850 = vmatprep.subr.mxu0 0.0
    %851 = vmatpush1.msra.mxu0 0.0
    %852 = vmatprep.subr.mxu0 0.0
    %853 = vmatpush1.msra.mxu0 0.0
    %854 = vmatprep.subr.mxu0 0.0
    %855 = vmatpush1.msra.mxu0 0.0
    %856 = vmatprep.mubr.f32.mxu0 0.0
    %857 = vmatmul.mubr.f32.gmra.mrb[0].mxu0 %v725
    %v858 = vpop.f32.mrb[0].mxu0
    %v859 = vadd.f32 0.0, %v858
    %v860 = vpop.f32.mrb[0].mxu0
    %861 = vdwg.mxu0
    %s862 = scalar_lea.vmem [#allocation4], 40
    %v863 = vld [vmem:[%s862] sm:$0xff]
    %v864 = vadd.f32 %v863, %v859
    %v865 = vtanh.pop %v864
    %v867 = vcombine.high %v865, %v865
    %v869 = vunpack.c.l.s4 1966171168
    %v870 = vunpack.c.0.s8 %v869
    %v871 = vlaneseq
    %v872 = vshrl.u32 %v871, 7
    %v873 = vsub.s32 %v870, %v872
    %v874 = vrot.slane %v865, %v873
    %v876 = vunpack.c.l.s4 1966171168
    %v877 = vunpack.c.0.s8 %v876
    %v878 = vlaneseq
    %v879 = vshrl.u32 %v878, 7
    %v880 = vsub.s32 %v877, %v879
    %v881 = vrot.slane %v867, %v880
    %v882 = vcombine.high %v874, %v874
    %v883 = vcombine.high %v881, %v881
    %v885 = vunpack.c.l.s4 1966171168
    %v886 = vunpack.c.0.s8 %v885
    %v887 = vlaneseq
    %v888 = vshrl.u32 %v887, 7
    %v889 = vsub.s32 %v886, %v888
    %v890 = vrot.slane %v874, %v889
    %v892 = vunpack.c.l.s4 1966171168
    %v893 = vunpack.c.0.s8 %v892
    %v894 = vlaneseq
    %v895 = vshrl.u32 %v894, 7
    %v896 = vsub.s32 %v893, %v895
    %v897 = vrot.slane %v881, %v896
    %v899 = vunpack.c.l.s4 1966171168
    %v900 = vunpack.c.0.s8 %v899
    %v901 = vlaneseq
    %v902 = vshrl.u32 %v901, 7
    %v903 = vsub.s32 %v900, %v902
    %v904 = vrot.slane %v882, %v903
    %v906 = vunpack.c.l.s4 1966171168
    %v907 = vunpack.c.0.s8 %v906
    %v908 = vlaneseq
    %v909 = vshrl.u32 %v908, 7
    %v910 = vsub.s32 %v907, %v909
    %v911 = vrot.slane %v883, %v910
    %v912 = vcombine.high %v890, %v890
    %v913 = vcombine.high %v897, %v897
    %v914 = vcombine.high %v904, %v904
    %v915 = vcombine.high %v911, %v911
    %924 = vst [vmem:[#allocation3 + $0x5] sm:$0x1] %v890
    %925 = vst [vmem:[#allocation3 + $0xd] sm:$0x1] %v904
    %926 = vst [vmem:[#allocation3 + $0x15] sm:$0x1] %v912
    %927 = vst [vmem:[#allocation3 + $0x1d] sm:$0x1] %v914
    %928 = vst [vmem:[#allocation3 + $0x25] sm:$0x1] %v897
    %929 = vst [vmem:[#allocation3 + $0x2d] sm:$0x1] %v911
    %930 = vst [vmem:[#allocation3 + $0x35] sm:$0x1] %v913
    %931 = vst [vmem:[#allocation3 + $0x3d] sm:$0x1] %v915
    %932 = vmatprep.subr.mxu0 0.0
    %933 = vmatpush1.msra.mxu0 %v76
    %934 = vmatprep.subr.mxu0 0.0
    %935 = vmatpush1.msra.mxu0 %v77
    %936 = vmatprep.subr.mxu0 0.0
    %937 = vmatpush1.msra.mxu0 %v78
    %938 = vmatprep.subr.mxu0 0.0
    %939 = vmatpush1.msra.mxu0 %v79
    %940 = vmatprep.subr.mxu0 0.0
    %941 = vmatpush1.msra.mxu0 %v80
    %942 = vmatprep.subr.mxu0 0.0
    %943 = vmatpush1.msra.mxu0 %v81
    %944 = vmatprep.subr.mxu0 0.0
    %945 = vmatpush1.msra.mxu0 %v82
    %946 = vmatprep.subr.mxu0 0.0
    %947 = vmatpush1.msra.mxu0 %v83
    %948 = vmatprep.subr.mxu0 0.0
    %949 = vmatpush1.msra.mxu0 %v84
    %950 = vmatprep.subr.mxu0 0.0
    %951 = vmatpush1.msra.mxu0 %v85
    %952 = vmatprep.subr.mxu0 0.0
    %953 = vmatpush1.msra.mxu0 %v86
    %954 = vmatprep.subr.mxu0 0.0
    %955 = vmatpush1.msra.mxu0 %v87
    %956 = vmatprep.subr.mxu0 0.0
    %957 = vmatpush1.msra.mxu0 %v88
    %958 = vmatprep.subr.mxu0 0.0
    %959 = vmatpush1.msra.mxu0 %v89
    %960 = vmatprep.subr.mxu0 0.0
    %961 = vmatpush1.msra.mxu0 %v90
    %962 = vmatprep.subr.mxu0 0.0
    %963 = vmatpush1.msra.mxu0 %v91
    %964 = vmatprep.subr.mxu0 0.0
    %965 = vmatpush1.msra.mxu0 0.0
    %966 = vmatprep.subr.mxu0 0.0
    %967 = vmatpush1.msra.mxu0 0.0
    %968 = vmatprep.subr.mxu0 0.0
    %969 = vmatpush1.msra.mxu0 0.0
    %970 = vmatprep.subr.mxu0 0.0
    %971 = vmatpush1.msra.mxu0 0.0
    %972 = vmatprep.subr.mxu0 0.0
    %973 = vmatpush1.msra.mxu0 0.0
    %974 = vmatprep.subr.mxu0 0.0
    %975 = vmatpush1.msra.mxu0 0.0
    %976 = vmatprep.subr.mxu0 0.0
    %977 = vmatpush1.msra.mxu0 0.0
    %978 = vmatprep.subr.mxu0 0.0
    %979 = vmatpush1.msra.mxu0 0.0
    %980 = vmatprep.subr.mxu0 0.0
    %981 = vmatpush1.msra.mxu0 0.0
    %982 = vmatprep.subr.mxu0 0.0
    %983 = vmatpush1.msra.mxu0 0.0
    %984 = vmatprep.subr.mxu0 0.0
    %985 = vmatpush1.msra.mxu0 0.0
    %986 = vmatprep.subr.mxu0 0.0
    %987 = vmatpush1.msra.mxu0 0.0
    %988 = vmatprep.subr.mxu0 0.0
    %989 = vmatpush1.msra.mxu0 0.0
    %990 = vmatprep.subr.mxu0 0.0
    %991 = vmatpush1.msra.mxu0 0.0
    %992 = vmatprep.subr.mxu0 0.0
    %993 = vmatpush1.msra.mxu0 0.0
    %994 = vmatprep.subr.mxu0 0.0
    %995 = vmatpush1.msra.mxu0 0.0
    %996 = vmatprep.mubr.f32.mxu0 0.0
    %997 = vmatmul.mubr.f32.gmra.mrb[0].mxu0 %v865
    %v998 = vpop.f32.mrb[0].mxu0
    %v999 = vadd.f32 0.0, %v998
    %v1000 = vpop.f32.mrb[0].mxu0
    %1001 = vdwg.mxu0
    %s1002 = scalar_lea.vmem [#allocation4], 48
    %v1003 = vld [vmem:[%s1002] sm:$0xff]
    %v1004 = vadd.f32 %v1003, %v999
    %v1005 = vtanh.pop %v1004
    %v1007 = vcombine.high %v1005, %v1005
    %v1009 = vunpack.c.l.s4 1966171168
    %v1010 = vunpack.c.0.s8 %v1009
    %v1011 = vlaneseq
    %v1012 = vshrl.u32 %v1011, 7
    %v1013 = vsub.s32 %v1010, %v1012
    %v1014 = vrot.slane %v1005, %v1013
    %v1016 = vunpack.c.l.s4 1966171168
    %v1017 = vunpack.c.0.s8 %v1016
    %v1018 = vlaneseq
    %v1019 = vshrl.u32 %v1018, 7
    %v1020 = vsub.s32 %v1017, %v1019
    %v1021 = vrot.slane %v1007, %v1020
    %v1022 = vcombine.high %v1014, %v1014
    %v1023 = vcombine.high %v1021, %v1021
    %v1025 = vunpack.c.l.s4 1966171168
    %v1026 = vunpack.c.0.s8 %v1025
    %v1027 = vlaneseq
    %v1028 = vshrl.u32 %v1027, 7
    %v1029 = vsub.s32 %v1026, %v1028
    %v1030 = vrot.slane %v1014, %v1029
    %v1032 = vunpack.c.l.s4 1966171168
    %v1033 = vunpack.c.0.s8 %v1032
    %v1034 = vlaneseq
    %v1035 = vshrl.u32 %v1034, 7
    %v1036 = vsub.s32 %v1033, %v1035
    %v1037 = vrot.slane %v1021, %v1036
    %v1039 = vunpack.c.l.s4 1966171168
    %v1040 = vunpack.c.0.s8 %v1039
    %v1041 = vlaneseq
    %v1042 = vshrl.u32 %v1041, 7
    %v1043 = vsub.s32 %v1040, %v1042
    %v1044 = vrot.slane %v1022, %v1043
    %v1046 = vunpack.c.l.s4 1966171168
    %v1047 = vunpack.c.0.s8 %v1046
    %v1048 = vlaneseq
    %v1049 = vshrl.u32 %v1048, 7
    %v1050 = vsub.s32 %v1047, %v1049
    %v1051 = vrot.slane %v1023, %v1050
    %v1052 = vcombine.high %v1030, %v1030
    %v1053 = vcombine.high %v1037, %v1037
    %v1054 = vcombine.high %v1044, %v1044
    %v1055 = vcombine.high %v1051, %v1051
    %1064 = vst [vmem:[#allocation3 + $0x6] sm:$0x1] %v1030
    %1065 = vst [vmem:[#allocation3 + $0xe] sm:$0x1] %v1044
    %1066 = vst [vmem:[#allocation3 + $0x16] sm:$0x1] %v1052
    %1067 = vst [vmem:[#allocation3 + $0x1e] sm:$0x1] %v1054
    %1068 = vst [vmem:[#allocation3 + $0x26] sm:$0x1] %v1037
    %1069 = vst [vmem:[#allocation3 + $0x2e] sm:$0x1] %v1051
    %1070 = vst [vmem:[#allocation3 + $0x36] sm:$0x1] %v1053
    %1071 = vst [vmem:[#allocation3 + $0x3e] sm:$0x1] %v1055
    %1072 = vmatprep.subr.mxu0 0.0
    %1073 = vmatpush1.msra.mxu0 %v76
    %1074 = vmatprep.subr.mxu0 0.0
    %1075 = vmatpush1.msra.mxu0 %v77
    %1076 = vmatprep.subr.mxu0 0.0
    %1077 = vmatpush1.msra.mxu0 %v78
    %1078 = vmatprep.subr.mxu0 0.0
    %1079 = vmatpush1.msra.mxu0 %v79
    %1080 = vmatprep.subr.mxu0 0.0
    %1081 = vmatpush1.msra.mxu0 %v80
    %1082 = vmatprep.subr.mxu0 0.0
    %1083 = vmatpush1.msra.mxu0 %v81
    %1084 = vmatprep.subr.mxu0 0.0
    %1085 = vmatpush1.msra.mxu0 %v82
    %1086 = vmatprep.subr.mxu0 0.0
    %1087 = vmatpush1.msra.mxu0 %v83
    %1088 = vmatprep.subr.mxu0 0.0
    %1089 = vmatpush1.msra.mxu0 %v84
    %1090 = vmatprep.subr.mxu0 0.0
    %1091 = vmatpush1.msra.mxu0 %v85
    %1092 = vmatprep.subr.mxu0 0.0
    %1093 = vmatpush1.msra.mxu0 %v86
    %1094 = vmatprep.subr.mxu0 0.0
    %1095 = vmatpush1.msra.mxu0 %v87
    %1096 = vmatprep.subr.mxu0 0.0
    %1097 = vmatpush1.msra.mxu0 %v88
    %1098 = vmatprep.subr.mxu0 0.0
    %1099 = vmatpush1.msra.mxu0 %v89
    %1100 = vmatprep.subr.mxu0 0.0
    %1101 = vmatpush1.msra.mxu0 %v90
    %1102 = vmatprep.subr.mxu0 0.0
    %1103 = vmatpush1.msra.mxu0 %v91
    %1104 = vmatprep.subr.mxu0 0.0
    %1105 = vmatpush1.msra.mxu0 0.0
    %1106 = vmatprep.subr.mxu0 0.0
    %1107 = vmatpush1.msra.mxu0 0.0
    %1108 = vmatprep.subr.mxu0 0.0
    %1109 = vmatpush1.msra.mxu0 0.0
    %1110 = vmatprep.subr.mxu0 0.0
    %1111 = vmatpush1.msra.mxu0 0.0
    %1112 = vmatprep.subr.mxu0 0.0
    %1113 = vmatpush1.msra.mxu0 0.0
    %1114 = vmatprep.subr.mxu0 0.0
    %1115 = vmatpush1.msra.mxu0 0.0
    %1116 = vmatprep.subr.mxu0 0.0
    %1117 = vmatpush1.msra.mxu0 0.0
    %1118 = vmatprep.subr.mxu0 0.0
    %1119 = vmatpush1.msra.mxu0 0.0
    %1120 = vmatprep.subr.mxu0 0.0
    %1121 = vmatpush1.msra.mxu0 0.0
    %1122 = vmatprep.subr.mxu0 0.0
    %1123 = vmatpush1.msra.mxu0 0.0
    %1124 = vmatprep.subr.mxu0 0.0
    %1125 = vmatpush1.msra.mxu0 0.0
    %1126 = vmatprep.subr.mxu0 0.0
    %1127 = vmatpush1.msra.mxu0 0.0
    %1128 = vmatprep.subr.mxu0 0.0
    %1129 = vmatpush1.msra.mxu0 0.0
    %1130 = vmatprep.subr.mxu0 0.0
    %1131 = vmatpush1.msra.mxu0 0.0
    %1132 = vmatprep.subr.mxu0 0.0
    %1133 = vmatpush1.msra.mxu0 0.0
    %1134 = vmatprep.subr.mxu0 0.0
    %1135 = vmatpush1.msra.mxu0 0.0
    %1136 = vmatprep.mubr.f32.mxu0 0.0
    %1137 = vmatmul.mubr.f32.gmra.mrb[0].mxu0 %v1005
    %v1138 = vpop.f32.mrb[0].mxu0
    %v1139 = vadd.f32 0.0, %v1138
    %v1140 = vpop.f32.mrb[0].mxu0
    %1141 = vdwg.mxu0
    %s1142 = scalar_lea.vmem [#allocation4], 56
    %v1143 = vld [vmem:[%s1142] sm:$0xff]
    %v1144 = vadd.f32 %v1143, %v1139
    %v1145 = vtanh.pop %v1144
    %v1147 = vcombine.high %v1145, %v1145
    %v1149 = vunpack.c.l.s4 1966171168
    %v1150 = vunpack.c.0.s8 %v1149
    %v1151 = vlaneseq
    %v1152 = vshrl.u32 %v1151, 7
    %v1153 = vsub.s32 %v1150, %v1152
    %v1154 = vrot.slane %v1145, %v1153
    %v1156 = vunpack.c.l.s4 1966171168
    %v1157 = vunpack.c.0.s8 %v1156
    %v1158 = vlaneseq
    %v1159 = vshrl.u32 %v1158, 7
    %v1160 = vsub.s32 %v1157, %v1159
    %v1161 = vrot.slane %v1147, %v1160
    %v1162 = vcombine.high %v1154, %v1154
    %v1163 = vcombine.high %v1161, %v1161
    %v1165 = vunpack.c.l.s4 1966171168
    %v1166 = vunpack.c.0.s8 %v1165
    %v1167 = vlaneseq
    %v1168 = vshrl.u32 %v1167, 7
    %v1169 = vsub.s32 %v1166, %v1168
    %v1170 = vrot.slane %v1154, %v1169
    %v1172 = vunpack.c.l.s4 1966171168
    %v1173 = vunpack.c.0.s8 %v1172
    %v1174 = vlaneseq
    %v1175 = vshrl.u32 %v1174, 7
    %v1176 = vsub.s32 %v1173, %v1175
    %v1177 = vrot.slane %v1161, %v1176
    %v1179 = vunpack.c.l.s4 1966171168
    %v1180 = vunpack.c.0.s8 %v1179
    %v1181 = vlaneseq
    %v1182 = vshrl.u32 %v1181, 7
    %v1183 = vsub.s32 %v1180, %v1182
    %v1184 = vrot.slane %v1162, %v1183
    %v1186 = vunpack.c.l.s4 1966171168
    %v1187 = vunpack.c.0.s8 %v1186
    %v1188 = vlaneseq
    %v1189 = vshrl.u32 %v1188, 7
    %v1190 = vsub.s32 %v1187, %v1189
    %v1191 = vrot.slane %v1163, %v1190
    %v1192 = vcombine.high %v1170, %v1170
    %v1193 = vcombine.high %v1177, %v1177
    %v1194 = vcombine.high %v1184, %v1184
    %v1195 = vcombine.high %v1191, %v1191
    %1204 = vst [vmem:[#allocation3 + $0x7] sm:$0x1] %v1170
    %1205 = vst [vmem:[#allocation3 + $0xf] sm:$0x1] %v1184
    %1206 = vst [vmem:[#allocation3 + $0x17] sm:$0x1] %v1192
    %1207 = vst [vmem:[#allocation3 + $0x1f] sm:$0x1] %v1194
    %1208 = vst [vmem:[#allocation3 + $0x27] sm:$0x1] %v1177
    %1209 = vst [vmem:[#allocation3 + $0x2f] sm:$0x1] %v1191
    %1210 = vst [vmem:[#allocation3 + $0x37] sm:$0x1] %v1193
    %1211 = vst [vmem:[#allocation3 + $0x3f] sm:$0x1] %v1195
    %1212 = vst [vmem:[#allocation2] sm:$0xff] %v1145
    %v1213 = vld [vmem:[#allocation9] sm:$0xff]
    %v1214 = vld [vmem:[#allocation9 + $0x8] sm:$0xff]
    %v1215 = vld [vmem:[#allocation9 + $0x10] sm:$0xff]
    %v1216 = vld [vmem:[#allocation9 + $0x18] sm:$0xff]
    %v1217 = vld [vmem:[#allocation9 + $0x20] sm:$0xff]
    %v1218 = vld [vmem:[#allocation9 + $0x28] sm:$0xff]
    %v1219 = vld [vmem:[#allocation9 + $0x30] sm:$0xff]
    %v1220 = vld [vmem:[#allocation9 + $0x38] sm:$0xff]
    %v1221 = vld [vmem:[#allocation9 + $0x40] sm:$0xff]
    %v1222 = vld [vmem:[#allocation9 + $0x48] sm:$0xff]
    %v1223 = vld [vmem:[#allocation9 + $0x50] sm:$0xff]
    %v1224 = vld [vmem:[#allocation9 + $0x58] sm:$0xff]
    %v1225 = vld [vmem:[#allocation9 + $0x60] sm:$0xff]
    %v1226 = vld [vmem:[#allocation9 + $0x68] sm:$0xff]
    %v1227 = vld [vmem:[#allocation9 + $0x70] sm:$0xff]
    %v1228 = vld [vmem:[#allocation9 + $0x78] sm:$0xff]
    %v1229 = vld [vmem:[#allocation3] sm:$0xff]
    %v1230 = vld [vmem:[#allocation3 + $0x8] sm:$0xff]
    %v1231 = vld [vmem:[#allocation3 + $0x10] sm:$0xff]
    %v1232 = vld [vmem:[#allocation3 + $0x18] sm:$0xff]
    %v1233 = vld [vmem:[#allocation3 + $0x20] sm:$0xff]
    %v1234 = vld [vmem:[#allocation3 + $0x28] sm:$0xff]
    %v1235 = vld [vmem:[#allocation3 + $0x30] sm:$0xff]
    %v1236 = vld [vmem:[#allocation3 + $0x38] sm:$0xff]
    %1237 = vmatprep.subr.mxu0 0.0
    %1238 = vmatpush1.msra.mxu0 %v1213
    %1239 = vmatprep.subr.mxu0 0.0
    %1240 = vmatpush1.msra.mxu0 %v1214
    %1241 = vmatprep.subr.mxu0 0.0
    %1242 = vmatpush1.msra.mxu0 %v1215
    %1243 = vmatprep.subr.mxu0 0.0
    %1244 = vmatpush1.msra.mxu0 %v1216
    %1245 = vmatprep.subr.mxu0 0.0
    %1246 = vmatpush1.msra.mxu0 %v1217
    %1247 = vmatprep.subr.mxu0 0.0
    %1248 = vmatpush1.msra.mxu0 %v1218
    %1249 = vmatprep.subr.mxu0 0.0
    %1250 = vmatpush1.msra.mxu0 %v1219
    %1251 = vmatprep.subr.mxu0 0.0
    %1252 = vmatpush1.msra.mxu0 %v1220
    %1253 = vmatprep.subr.mxu0 0.0
    %1254 = vmatpush1.msra.mxu0 %v1221
    %1255 = vmatprep.subr.mxu0 0.0
    %1256 = vmatpush1.msra.mxu0 %v1222
    %1257 = vmatprep.subr.mxu0 0.0
    %1258 = vmatpush1.msra.mxu0 %v1223
    %1259 = vmatprep.subr.mxu0 0.0
    %1260 = vmatpush1.msra.mxu0 %v1224
    %1261 = vmatprep.subr.mxu0 0.0
    %1262 = vmatpush1.msra.mxu0 %v1225
    %1263 = vmatprep.subr.mxu0 0.0
    %1264 = vmatpush1.msra.mxu0 %v1226
    %1265 = vmatprep.subr.mxu0 0.0
    %1266 = vmatpush1.msra.mxu0 %v1227
    %1267 = vmatprep.subr.mxu0 0.0
    %1268 = vmatpush1.msra.mxu0 %v1228
    %1269 = vmatprep.subr.mxu0 0.0
    %1270 = vmatpush1.msra.mxu0 0.0
    %1271 = vmatprep.subr.mxu0 0.0
    %1272 = vmatpush1.msra.mxu0 0.0
    %1273 = vmatprep.subr.mxu0 0.0
    %1274 = vmatpush1.msra.mxu0 0.0
    %1275 = vmatprep.subr.mxu0 0.0
    %1276 = vmatpush1.msra.mxu0 0.0
    %1277 = vmatprep.subr.mxu0 0.0
    %1278 = vmatpush1.msra.mxu0 0.0
    %1279 = vmatprep.subr.mxu0 0.0
    %1280 = vmatpush1.msra.mxu0 0.0
    %1281 = vmatprep.subr.mxu0 0.0
    %1282 = vmatpush1.msra.mxu0 0.0
    %1283 = vmatprep.subr.mxu0 0.0
    %1284 = vmatpush1.msra.mxu0 0.0
    %1285 = vmatprep.subr.mxu0 0.0
    %1286 = vmatpush1.msra.mxu0 0.0
    %1287 = vmatprep.subr.mxu0 0.0
    %1288 = vmatpush1.msra.mxu0 0.0
    %1289 = vmatprep.subr.mxu0 0.0
    %1290 = vmatpush1.msra.mxu0 0.0
    %1291 = vmatprep.subr.mxu0 0.0
    %1292 = vmatpush1.msra.mxu0 0.0
    %1293 = vmatprep.subr.mxu0 0.0
    %1294 = vmatpush1.msra.mxu0 0.0
    %1295 = vmatprep.subr.mxu0 0.0
    %1296 = vmatpush1.msra.mxu0 0.0
    %1297 = vmatprep.subr.mxu0 0.0
    %1298 = vmatpush1.msra.mxu0 0.0
    %1299 = vmatprep.subr.mxu0 0.0
    %1300 = vmatpush1.msra.mxu0 0.0
    %1301 = vmatprep.mubr.f32.mxu0 0.0
    %1302 = vmatmul.mubr.f32.gmra.mrb[0].mxu0 %v1229
    %v1303 = vpop.f32.mrb[0].mxu0
    %v1304 = vadd.f32 0.0, %v1303
    %v1305 = vpop.f32.mrb[0].mxu0
    %1306 = vmatprep.mubr.f32.mxu0 0.0
    %1307 = vmatmul.mubr.f32.gmra.mrb[0].mxu0 %v1230
    %v1308 = vpop.f32.mrb[0].mxu0
    %v1309 = vadd.f32 0.0, %v1308
    %v1310 = vpop.f32.mrb[0].mxu0
    %1311 = vmatprep.mubr.f32.mxu0 0.0
    %1312 = vmatmul.mubr.f32.gmra.mrb[0].mxu0 %v1231
    %v1313 = vpop.f32.mrb[0].mxu0
    %v1314 = vadd.f32 0.0, %v1313
    %v1315 = vpop.f32.mrb[0].mxu0
    %1316 = vmatprep.mubr.f32.mxu0 0.0
    %1317 = vmatmul.mubr.f32.gmra.mrb[0].mxu0 %v1232
    %v1318 = vpop.f32.mrb[0].mxu0
    %v1319 = vadd.f32 0.0, %v1318
    %v1320 = vpop.f32.mrb[0].mxu0
    %1321 = vmatprep.mubr.f32.mxu0 0.0
    %1322 = vmatmul.mubr.f32.gmra.mrb[0].mxu0 %v1233
    %v1323 = vpop.f32.mrb[0].mxu0
    %v1324 = vadd.f32 0.0, %v1323
    %v1325 = vpop.f32.mrb[0].mxu0
    %1326 = vmatprep.mubr.f32.mxu0 0.0
    %1327 = vmatmul.mubr.f32.gmra.mrb[0].mxu0 %v1234
    %v1328 = vpop.f32.mrb[0].mxu0
    %v1329 = vadd.f32 0.0, %v1328
    %v1330 = vpop.f32.mrb[0].mxu0
    %1331 = vmatprep.mubr.f32.mxu0 0.0
    %1332 = vmatmul.mubr.f32.gmra.mrb[0].mxu0 %v1235
    %v1333 = vpop.f32.mrb[0].mxu0
    %v1334 = vadd.f32 0.0, %v1333
    %v1335 = vpop.f32.mrb[0].mxu0
    %1336 = vmatprep.mubr.f32.mxu0 0.0
    %1337 = vmatmul.mubr.f32.gmra.mrb[0].mxu0 %v1236
    %v1338 = vpop.f32.mrb[0].mxu0
    %v1339 = vadd.f32 0.0, %v1338
    %v1340 = vpop.f32.mrb[0].mxu0
    %1341 = vdwg.mxu0
    %v1342 = vld [vmem:[#allocation10] sm:$0x1]
    %v1344 = vlaneseq
    %v1345 = vshrl.u32 %v1344, 7
    %v1346 = vsub.s32 0, %v1345
    %v1347 = vrot.slane %v1342, %v1346
    %v1349 = vadd.f32 %v1304, %v1347
    %v1350 = vadd.f32 %v1309, %v1347
    %v1351 = vadd.f32 %v1314, %v1347
    %v1352 = vadd.f32 %v1319, %v1347
    %v1353 = vadd.f32 %v1324, %v1347
    %v1354 = vadd.f32 %v1329, %v1347
    %v1355 = vadd.f32 %v1334, %v1347
    %v1356 = vadd.f32 %v1339, %v1347
    %1357 = vst [vmem:[#allocation12] sm:$0xff] %v1349
    %1358 = vst [vmem:[#allocation12 + $0x8] sm:$0xff] %v1350
    %1359 = vst [vmem:[#allocation12 + $0x10] sm:$0xff] %v1351
    %1360 = vst [vmem:[#allocation12 + $0x18] sm:$0xff] %v1352
    %1361 = vst [vmem:[#allocation12 + $0x20] sm:$0xff] %v1353
    %1362 = vst [vmem:[#allocation12 + $0x28] sm:$0xff] %v1354
    %1363 = vst [vmem:[#allocation12 + $0x30] sm:$0xff] %v1355
    %1364 = vst [vmem:[#allocation12 + $0x38] sm:$0xff] %v1356
    // Predicated region
    $region38: #{rnn_forward.3} parent=1 // pred_check
      _
    $region39: #{rnn_forward.3} parent=1 // pred_check_branch
      %1366 = sbr.rel (0) target = $region41
    $region40: #{rnn_forward.3} parent=1 // pred_region
      %s1368 = ssub.s32 1024, 1024
      %1369 = vsyncadd [#allocation6], %s1368
      %s1370 = sshll.u32 [#allocation12], 4
      %s1371 = int_to_ptr.vmem [resolvable:$true] %s1370
      %1376 = dma.vmem_to_hbm [thread:$0]  %s1371, 1024, %s4, [#allocation6], 128, 128, 8
    $region41: #{rnn_forward.3} parent=1 // pred_fallthru
      _
    // Predicated region
    $region42: #{rnn_forward.3} parent=1 // pred_check
      _
    $region43: #{rnn_forward.3} parent=1 // pred_check_branch
      %1378 = sbr.rel (0) target = $region45
    $region44: #{rnn_forward.3} parent=1 // pred_region
      %1379 = dma.done [#allocation6], 1024
    $region45: #{rnn_forward.3} parent=1 // pred_fallthru
      _
    %1380 = vsyncpa [#allocation5], 1
    %1381 = vsyncpa [#allocation8], 1
    %1382 = vsyncpa [#allocation11], 1
    %1383 = vsyncpa [#allocation6], 1

</llo_original>
